<compile_context>
chip_gen: v7x
topology: tpu7x:2x2x1
jax: 0.10.0
libtpu: 0.0.40
codegen_flags: <defaults>
</compile_context>

<pallas_src>
import jax
import jax.numpy as jnp
from jax.experimental import pallas as pl
from jax.experimental.pallas import tpu as pltpu

MARGIN = 1.0          # TransRNet default margin
PD_EPS = 1e-6         # torch.nn.PairwiseDistance default eps (added to diff)
RENORM_EPS = 1e-7     # torch embedding max_norm renorm eps
ENT_MAX_NORM = 1.0    # nn.Embedding(entityNum, De, max_norm=enorm=1)


# ----------------------------- Pallas kernel ---------------------------------
def transr_loss_kernel(e_ref, r_ref, m_ref, out_ref):
  """One batch tile of the TransR margin loss.

  e_ref  : (TB, K, De)  raw gathered entity rows; slot 0 = positive head,
                        slot 1 = positive tail, slot 2+j = corrupted entity of
                        negative sample j.
  r_ref  : (TB, Dr)     relation embeddings (rnorm=None -> no renorm).
  m_ref  : (TB, De, Dr) per-relation projection matrices.
  out_ref: (TB, 1)      per-row hinge term; batch mean is finished in XLA.
  """
  e = e_ref[...]
  m = m_ref[...]
  r = r_ref[...][:, None, :]                               # (TB, 1, Dr)

  # Fused nn.Embedding(max_norm=1) renorm of the gathered entity rows.
  nrm = jnp.sqrt(jnp.sum(e * e, axis=-1, keepdims=True))
  e = e * jnp.where(nrm > ENT_MAX_NORM,
                    ENT_MAX_NORM / (nrm + RENORM_EPS), 1.0)

  # TransR projection of head, tail and every corrupted entity with a single
  # batched MXU matmul per tile (full f32 precision to match torch GEMM).
  proj = jnp.einsum('bkd,bdr->bkr', e, m,
                    precision=jax.lax.Precision.HIGHEST,
                    preferred_element_type=jnp.float32)    # (TB, K, Dr)
  hh = proj[:, 0:1, :]                                     # (TB, 1, Dr)
  tt = proj[:, 1:2, :]                                     # (TB, 1, Dr)
  cp = proj[:, 2:, :]                                      # (TB, S, Dr)

  # positive distance: ||(h@M + r) - t@M + eps||_2  (PairwiseDistance)
  pdiff = hh + r - tt + PD_EPS
  posdis = jnp.sqrt(jnp.sum(pdiff * pdiff, axis=-1))       # (TB, 1)

  # negatives: the deterministic sampler corrupts the head on even j and the
  # tail on odd j, so the uncorrupted side reuses the positive projection.
  S = cp.shape[1]
  j = jax.lax.broadcasted_iota(jnp.int32, (1, S, 1), 1)
  head_corrupted = (j & 1) == 0
  ndiff = jnp.where(head_corrupted, cp + r - tt, hh + r - cp) + PD_EPS
  negdis = jnp.sqrt(jnp.sum(ndiff * ndiff, axis=-1))       # (TB, S)
  negmean = jnp.mean(negdis, axis=-1, keepdims=True)       # (TB, 1)

  out_ref[...] = jnp.maximum(posdis - negmean + MARGIN, 0.0)


def transr_loss_call(ent_rows, rel_rows, rel_mats, *, tb=128):
  """Batch-tiled pallas_call; returns the scalar mean hinge loss."""
  B, K, De = ent_rows.shape
  Dr = rel_rows.shape[-1]

  # Keep the sublane axis of every block a multiple of 8.  (On v7x with its
  # 64 MiB VMEM, keep tb small enough that 2x double-buffered tiles fit.)
  tb = min(tb, B)
  tb = max(8, (tb // 8) * 8)
  b_pad = pl.cdiv(B, tb) * tb
  if b_pad != B:
    pad = b_pad - B
    ent_rows = jnp.pad(ent_rows, ((0, pad), (0, 0), (0, 0)))
    rel_rows = jnp.pad(rel_rows, ((0, pad), (0, 0)))
    rel_mats = jnp.pad(rel_mats, ((0, pad), (0, 0), (0, 0)))

  per_row = pl.pallas_call(
      transr_loss_kernel,
      grid=(b_pad // tb,),
      in_specs=[
          pl.BlockSpec((tb, K, De), lambda i: (i, 0, 0)),
          pl.BlockSpec((tb, Dr), lambda i: (i, 0)),
          pl.BlockSpec((tb, De, Dr), lambda i: (i, 0, 0)),
      ],
      out_specs=pl.BlockSpec((tb, 1), lambda i: (i, 0)),
      out_shape=jax.ShapeDtypeStruct((b_pad, 1), jnp.float32),
      compiler_params=pltpu.CompilerParams(
          dimension_semantics=("parallel",)),   # independent per-tile outputs
  )(ent_rows, rel_rows, rel_mats)

  # Drop padded rows, finish the batch mean in XLA.
  return jnp.mean(per_row[:B, 0])


# ------------------------------- JAX glue -------------------------------------
def xavier_uniform(key, n, d):
  # torch.nn.init.xavier_uniform_ on a (n, d) embedding weight
  a = (6.0 / (n + d)) ** 0.5
  return jax.random.uniform(key, (n, d), jnp.float32, -a, a)


def embed_renorm(weight, idx, max_norm):
  # nn.Embedding(max_norm=...) lookup semantics (forward values)
  rows = jnp.take(weight, idx, axis=0)
  if max_norm is None:
    return rows
  norm = jnp.sqrt(jnp.sum(rows * rows, axis=-1, keepdims=True))
  scale = jnp.where(norm > max_norm, max_norm / (norm + RENORM_EPS), 1.0)
  return rows * scale


def sample_negatives(triplets, sample_num, entity_num):
  # Deterministic replacement of TripletSampler2 (see TODO at top of file).
  neg = jnp.tile(triplets[:, None, :], (1, sample_num, 1))
  for j in range(sample_num):
    col = 0 if (j % 2 == 0) else 2
    new_e = (triplets[:, col] + j + 1) % entity_num
    neg = neg.at[:, j, col].set(new_e)
  return neg


def transrnet_forward(params, triplets, sample_num, entity_num, *, tb=128):
  B = triplets.shape[0]
  De = params["entityEmb"].shape[1]
  Dr = params["relationEmb"].shape[1]
  neg = sample_negatives(triplets, sample_num, entity_num)

  h, r, t = triplets[:, 0], triplets[:, 1], triplets[:, 2]
  # Relations are never corrupted -> negative relation / matrix gathers are
  # redundant copies of the positives and are not materialized.  Only the
  # corrupted entity column of each negative is gathered.
  corrupt = jnp.stack(
      [neg[:, j, 0 if (j % 2 == 0) else 2] for j in range(sample_num)], axis=1)
  ent_idx = jnp.concatenate([h[:, None], t[:, None], corrupt], axis=1)  # (B,K)

  # Raw gathers only; the max_norm renorm runs inside the kernel.
  ent_rows = jnp.take(params["entityEmb"], ent_idx, axis=0)          # (B,K,De)
  rel_rows = jnp.take(params["relationEmb"], r, axis=0)              # (B,Dr)
  rel_mats = jnp.take(params["relationEmbM"], r, axis=0).reshape(B, De, Dr)
  return transr_loss_call(ent_rows, rel_rows, rel_mats, tb=tb)


def reference_forward(params, triplets, sample_num, entity_num):
  # Pure-JAX reference of the same forward (full negative computation, no
  # projection reuse, no Pallas), for validation.
  De = params["entityEmb"].shape[1]
  Dr = params["relationEmb"].shape[1]
  neg = sample_negatives(triplets, sample_num, entity_num)

  def triplet_embed(h, r, t):
    hv = embed_renorm(params["entityEmb"], h, ENT_MAX_NORM)
    tv = embed_renorm(params["entityEmb"], t, ENT_MAX_NORM)
    rv = jnp.take(params["relationEmb"], r, axis=0)       # rnorm=None
    m = jnp.take(params["relationEmbM"], r, axis=0)
    m = m.reshape(m.shape[:-1] + (De, Dr))
    hp = jnp.einsum('...d,...dr->...r', hv, m,
                    precision=jax.lax.Precision.HIGHEST)
    tp = jnp.einsum('...d,...dr->...r', tv, m,
                    precision=jax.lax.Precision.HIGHEST)
    return hp, rv, tp

  p1, p2, p3 = triplet_embed(triplets[:, 0], triplets[:, 1], triplets[:, 2])
  n1, n2, n3 = triplet_embed(neg[..., 0], neg[..., 1], neg[..., 2])
  posdis = jnp.linalg.norm(p1 + p2 - p3 + PD_EPS, axis=-1)
  negdis = jnp.linalg.norm(n1 + n2 - n3 + PD_EPS, axis=-1)
  negdis = jnp.mean(negdis, axis=1)
  return jnp.mean(jax.nn.relu(posdis - negdis + MARGIN))


# --------------------------------- main ----------------------------------------
if __name__ == "__main__":
  entityNum, relationNum = 20, 5
  entityEmbDim, relationEmbDim = 32, 16
  B, sampleNum = 16, 3

  key = jax.random.PRNGKey(0)
  k1, k2, k3, k4, k5, k6 = jax.random.split(key, 6)
  params = {
      "entityEmb":    xavier_uniform(k1, entityNum, entityEmbDim),
      "relationEmb":  xavier_uniform(k2, relationNum, relationEmbDim),
      "relationEmbM": xavier_uniform(k3, relationNum,
                                     entityEmbDim * relationEmbDim),
  }

  h = jax.random.randint(k4, (B,), 0, entityNum)
  r = jax.random.randint(k5, (B,), 0, relationNum)
  t = jax.random.randint(k6, (B,), 0, entityNum)
  triplets = jnp.stack([h, r, t], axis=1).astype(jnp.int32)

  # tb=8 -> grid=(2,) so the batch tiling / parallel axis is actually exercised.
  loss = transrnet_forward(params, triplets, sampleNum, entityNum, tb=8)
  loss = jax.block_until_ready(loss)

  ref = jax.block_until_ready(
      reference_forward(params, triplets, sampleNum, entityNum))
  assert abs(float(loss) - float(ref)) < 1e-3, (float(loss), float(ref))

  print("KERNEL_OK")
</pallas_src>

<mosaic_0001>
module attributes {stable_mosaic.version = 11 : i64} {
  func.func @transr_loss_kernel(%arg0: i32, %arg1: memref<8x5x32xf32, #tpu.memory_space<vmem>>, %arg2: memref<8x16xf32, #tpu.memory_space<vmem>>, %arg3: memref<8x32x16xf32, #tpu.memory_space<vmem>>, %arg4: memref<8x1xf32, #tpu.memory_space<vmem>>) attributes {dimension_semantics = [#tpu.dimension_semantics<parallel>], iteration_bounds = array<i64: 2>, scalar_prefetch = 0 : i64, scratch_operands = 0 : i64, tpu.core_type = #tpu.core_type<tc>, window_params = [{transform_indices = @transform_0, window_bounds = array<i64: 8, 5, 32>}, {transform_indices = @transform_1, window_bounds = array<i64: 8, 16>}, {transform_indices = @transform_2, window_bounds = array<i64: 8, 32, 16>}, {transform_indices = @transform_3, window_bounds = array<i64: 8, 1>}]} {
    %c0 = arith.constant 0 : index
    %c0_0 = arith.constant 0 : index
    %c0_1 = arith.constant 0 : index
    %0 = vector.load %arg1[%c0, %c0_0, %c0_1] : memref<8x5x32xf32, #tpu.memory_space<vmem>>, vector<8x5x32xf32>
    %c0_2 = arith.constant 0 : index
    %c0_3 = arith.constant 0 : index
    %c0_4 = arith.constant 0 : index
    %1 = vector.load %arg3[%c0_2, %c0_3, %c0_4] : memref<8x32x16xf32, #tpu.memory_space<vmem>>, vector<8x32x16xf32>
    %c0_5 = arith.constant 0 : index
    %c0_6 = arith.constant 0 : index
    %2 = vector.load %arg2[%c0_5, %c0_6] : memref<8x16xf32, #tpu.memory_space<vmem>>, vector<8x16xf32>
    %3 = vector.shape_cast %2 : vector<8x16xf32> to vector<8x1x16xf32>
    %4 = arith.mulf %0, %0 : vector<8x5x32xf32>
    %cst = arith.constant dense<0.000000e+00> : vector<8x5xf32>
    %5 = vector.multi_reduction <add>, %4, %cst [2] : vector<8x5x32xf32> to vector<8x5xf32>
    %6 = vector.shape_cast %5 : vector<8x5xf32> to vector<8x5x1xf32>
    %7 = math.sqrt %6 : vector<8x5x1xf32>
    %cst_7 = arith.constant 1.000000e+00 : f32
    %8 = vector.broadcast %cst_7 : f32 to vector<8x5x1xf32>
    %9 = arith.cmpf ogt, %7, %8 : vector<8x5x1xf32>
    %cst_8 = arith.constant 1.000000e-07 : f32
    %10 = vector.broadcast %cst_8 : f32 to vector<8x5x1xf32>
    %11 = arith.addf %7, %10 : vector<8x5x1xf32>
    %cst_9 = arith.constant 1.000000e+00 : f32
    %12 = vector.broadcast %cst_9 : f32 to vector<8x5x1xf32>
    %13 = arith.divf %12, %11 : vector<8x5x1xf32>
    %cst_10 = arith.constant 1.000000e+00 : f32
    %14 = vector.broadcast %cst_10 : f32 to vector<8x5x1xf32>
    %15 = arith.select %9, %13, %14 : vector<8x5x1xi1>, vector<8x5x1xf32>
    %16 = vector.broadcast %15 : vector<8x5x1xf32> to vector<8x5x32xf32>
    %17 = arith.mulf %0, %16 : vector<8x5x32xf32>
    "tpu.trace_start"() <{level = 10 : i32, message = "bkd,bdr->bkr"}> : () -> ()
    %cst_11 = arith.constant dense<0.000000e+00> : vector<8x5x16xf32>
    %18 = tpu.matmul %17, %1, %cst_11 {dimension_numbers = #tpu.dot_dimension_numbers<[2], [1], [1], [2], [0, 0, 0, 1, 1, 2], [0], [0]>, precision = #tpu.contract_precision<fp32>} : vector<8x5x32xf32>, vector<8x32x16xf32>, vector<8x5x16xf32> -> vector<8x5x16xf32>
    "tpu.trace_stop"() : () -> ()
    %19 = vector.extract_strided_slice %18 {offsets = [0, 0, 0], sizes = [8, 1, 16], strides = [1, 1, 1]} : vector<8x5x16xf32> to vector<8x1x16xf32>
    %20 = vector.extract_strided_slice %18 {offsets = [0, 1, 0], sizes = [8, 1, 16], strides = [1, 1, 1]} : vector<8x5x16xf32> to vector<8x1x16xf32>
    %21 = vector.extract_strided_slice %18 {offsets = [0, 2, 0], sizes = [8, 3, 16], strides = [1, 1, 1]} : vector<8x5x16xf32> to vector<8x3x16xf32>
    %22 = arith.addf %19, %3 : vector<8x1x16xf32>
    %23 = arith.subf %22, %20 : vector<8x1x16xf32>
    %cst_12 = arith.constant 9.99999997E-7 : f32
    %24 = vector.broadcast %cst_12 : f32 to vector<8x1x16xf32>
    %25 = arith.addf %23, %24 : vector<8x1x16xf32>
    %26 = arith.mulf %25, %25 : vector<8x1x16xf32>
    %cst_13 = arith.constant dense<0.000000e+00> : vector<8x1xf32>
    %27 = vector.multi_reduction <add>, %26, %cst_13 [2] : vector<8x1x16xf32> to vector<8x1xf32>
    %28 = math.sqrt %27 : vector<8x1xf32>
    %29 = tpu.iota {dimensions = array<i32: 1>} : vector<1x3x1xi32>
    %c1_i32 = arith.constant 1 : i32
    %30 = vector.broadcast %c1_i32 : i32 to vector<1x3x1xi32>
    %31 = arith.andi %29, %30 : vector<1x3x1xi32>
    %c0_i32 = arith.constant 0 : i32
    %32 = vector.broadcast %c0_i32 : i32 to vector<1x3x1xi32>
    %33 = arith.cmpi eq, %31, %32 : vector<1x3x1xi32>
    %34 = vector.broadcast %3 : vector<8x1x16xf32> to vector<8x3x16xf32>
    %35 = arith.addf %21, %34 : vector<8x3x16xf32>
    %36 = vector.broadcast %20 : vector<8x1x16xf32> to vector<8x3x16xf32>
    %37 = arith.subf %35, %36 : vector<8x3x16xf32>
    %38 = arith.addf %19, %3 : vector<8x1x16xf32>
    %39 = vector.broadcast %38 : vector<8x1x16xf32> to vector<8x3x16xf32>
    %40 = arith.subf %39, %21 : vector<8x3x16xf32>
    %41 = vector.shape_cast %33 : vector<1x3x1xi1> to vector<1x3x1xi1>
    %42 = vector.broadcast %41 : vector<1x3x1xi1> to vector<8x3x16xi1>
    %43 = arith.select %42, %37, %40 : vector<8x3x16xi1>, vector<8x3x16xf32>
    %cst_14 = arith.constant 9.99999997E-7 : f32
    %44 = vector.broadcast %cst_14 : f32 to vector<8x3x16xf32>
    %45 = arith.addf %43, %44 : vector<8x3x16xf32>
    %46 = arith.mulf %45, %45 : vector<8x3x16xf32>
    %cst_15 = arith.constant dense<0.000000e+00> : vector<8x3xf32>
    %47 = vector.multi_reduction <add>, %46, %cst_15 [2] : vector<8x3x16xf32> to vector<8x3xf32>
    %48 = math.sqrt %47 : vector<8x3xf32>
    %cst_16 = arith.constant dense<0.000000e+00> : vector<8xf32>
    %49 = vector.multi_reduction <add>, %48, %cst_16 [1] : vector<8x3xf32> to vector<8xf32>
    %50 = vector.shape_cast %49 : vector<8xf32> to vector<8x1xf32>
    %cst_17 = arith.constant 3.000000e+00 : f32
    %51 = vector.broadcast %cst_17 : f32 to vector<8x1xf32>
    %52 = arith.divf %50, %51 : vector<8x1xf32>
    %53 = arith.subf %28, %52 : vector<8x1xf32>
    %cst_18 = arith.constant 1.000000e+00 : f32
    %54 = vector.broadcast %cst_18 : f32 to vector<8x1xf32>
    %55 = arith.addf %53, %54 : vector<8x1xf32>
    %cst_19 = arith.constant 0.000000e+00 : f32
    %56 = vector.broadcast %cst_19 : f32 to vector<8x1xf32>
    %57 = arith.maximumf %55, %56 : vector<8x1xf32>
    %c0_20 = arith.constant 0 : index
    %c0_21 = arith.constant 0 : index
    %58 = vector.load %arg4[%c0_20, %c0_21] : memref<8x1xf32, #tpu.memory_space<vmem>>, vector<8x1xf32>
    tpu.vector_store %arg4[%c0_20, %c0_21], %57 {strides = array<i32>} : memref<8x1xf32, #tpu.memory_space<vmem>>, vector<8x1xf32>,
    return
  }
  func.func @transform_0(%arg0: i32) -> (i32, i32, i32) {
    %c0_i32 = arith.constant 0 : i32
    %c0_i32_0 = arith.constant 0 : i32
    %c0_i32_1 = arith.constant 0 : i32
    return %arg0, %c0_i32, %c0_i32_0 : i32, i32, i32
  }
  func.func @transform_1(%arg0: i32) -> (i32, i32) {
    %c0_i32 = arith.constant 0 : i32
    %c0_i32_0 = arith.constant 0 : i32
    return %arg0, %c0_i32 : i32, i32
  }
  func.func @transform_2(%arg0: i32) -> (i32, i32, i32) {
    %c0_i32 = arith.constant 0 : i32
    %c0_i32_0 = arith.constant 0 : i32
    %c0_i32_1 = arith.constant 0 : i32
    return %arg0, %c0_i32, %c0_i32_0 : i32, i32, i32
  }
  func.func @transform_3(%arg0: i32) -> (i32, i32) {
    %c0_i32 = arith.constant 0 : i32
    %c0_i32_0 = arith.constant 0 : i32
    return %arg0, %c0_i32 : i32, i32
  }
}

</mosaic_0001>

<llo_original>
// kernel: tpu_custom_call.1
$region0: #{tpu_custom_call.1}
  #allocation0 [shape = 'u32[]', space=smem, size = 0x4, offset = 0x4, fixed_abs, tag = 'smem constant byte address 0x4 - core index']
  #allocation1 [shape = 'u32[144,128]{1,0:T(1,128)}', space=vmem, size = 0x12000, scoped, tag = 'internal scratch']
  %s0 = inlined_call_operand.vmem [shape: f32[16,5,32], index: 0, kind: input, shape index: {}]
  %s1 = inlined_call_operand.vmem [shape: f32[16,16], index: 1, kind: input, shape index: {}]
  %s2 = inlined_call_operand.vmem [shape: f32[16,32,16], index: 2, kind: input, shape index: {}]
  %s3 = inlined_call_operand.vmem [shape: f32[16,1], index: 3, kind: output, shape index: {}]
  %s4 = sld [smem:[#allocation0]]
  $region45: #{tpu_custom_call.1} parent=0
    _
  %s6 = ssub.s32 1, %s4
  %s7 = scalar_select 0, %s6, %s4
  loop: start=0, step=1, limit=4
  $region2: #{tpu_custom_call.1} parent=0 // loop_pre_header
    _
  $region3: #{tpu_custom_call.1} parent=0 // loop_header
    %s9 = sphi 0, %s13
    %p10 = scmp.ge.s32.totalorder %s9, 4
    %s19 = sphi 0, %s21
    %s22 = sphi 0, %s19
    %s23 = sphi 0, %s22
    %s39 = sphi 0, %s23
    %s45 = sphi 0, %s47
    %s48 = sphi 0, %s45
    %s49 = sphi 0, %s48
    %s65 = sphi 0, %s49
    %s71 = sphi 0, %s73
    %s74 = sphi 0, %s71
    %s75 = sphi 0, %s74
    %s91 = sphi 0, %s75
    %s97 = sphi 0, %s99
    %s100 = sphi 0, %s97
    %s101 = sphi 0, %s100
    %s117 = sphi 0, %s101
  $region4: #{tpu_custom_call.1} parent=0 // loop_header_branch
    %12 = sbr.rel (%p10) target = $region8
  $region5: #{tpu_custom_call.1} parent=0 // loop_body
    %s14 = ssub.s32 %s9, 1
    %s15 = ssub.s32 %s9, 2
    %s16 = sadd.s32 %s9, 1
    %s17 = ssub.s32 %s9, %s16
    %p18 = scmp.eq.s32.totalorder %s17, 0
    %s20 = sadd.s32 %s19, 1
    %s21 = scalar_select %p18, %s19, %s20
    %p24 = pneg %p18
    %p25 = scmp.eq.s32.totalorder %s9, 1
    %p26 = por %p24, %p25
    %p27 = scmp.ne.s32.totalorder %s19, %s22
    %p28 = scmp.eq.s32.totalorder %s9, 0
    %p29 = por %p27, %p28
    %p30 = scmp.ne.s32.totalorder %s19, %s22
    %p31 = scmp.eq.s32.totalorder %s14, 1
    %p32 = por %p30, %p31
    %p33 = scmp.ne.s32.totalorder %s22, %s23
    %p34 = scmp.eq.s32.totalorder %s14, 0
    %p35 = por %p33, %p34
    %p36 = scmp.ne.s32.totalorder %s22, %s23
    %p37 = scmp.eq.s32.totalorder %s15, 1
    %p38 = por %p36, %p37
    %p40 = scmp.ne.s32.totalorder %s23, %s39
    %p41 = scmp.eq.s32.totalorder %s15, 0
    %p42 = por %p40, %p41
    %s43 = ssub.s32 %s9, %s16
    %p44 = scmp.eq.s32.totalorder %s43, 0
    %s46 = sadd.s32 %s45, 1
    %s47 = scalar_select %p44, %s45, %s46
    %p50 = pneg %p44
    %p51 = scmp.eq.s32.totalorder %s9, 1
    %p52 = por %p50, %p51
    %p53 = scmp.ne.s32.totalorder %s45, %s48
    %p54 = scmp.eq.s32.totalorder %s9, 0
    %p55 = por %p53, %p54
    %p56 = scmp.ne.s32.totalorder %s45, %s48
    %p57 = scmp.eq.s32.totalorder %s14, 1
    %p58 = por %p56, %p57
    %p59 = scmp.ne.s32.totalorder %s48, %s49
    %p60 = scmp.eq.s32.totalorder %s14, 0
    %p61 = por %p59, %p60
    %p62 = scmp.ne.s32.totalorder %s48, %s49
    %p63 = scmp.eq.s32.totalorder %s15, 1
    %p64 = por %p62, %p63
    %p66 = scmp.ne.s32.totalorder %s49, %s65
    %p67 = scmp.eq.s32.totalorder %s15, 0
    %p68 = por %p66, %p67
    %s69 = ssub.s32 %s9, %s16
    %p70 = scmp.eq.s32.totalorder %s69, 0
    %s72 = sadd.s32 %s71, 1
    %s73 = scalar_select %p70, %s71, %s72
    %p76 = pneg %p70
    %p77 = scmp.eq.s32.totalorder %s9, 1
    %p78 = por %p76, %p77
    %p79 = scmp.ne.s32.totalorder %s71, %s74
    %p80 = scmp.eq.s32.totalorder %s9, 0
    %p81 = por %p79, %p80
    %p82 = scmp.ne.s32.totalorder %s71, %s74
    %p83 = scmp.eq.s32.totalorder %s14, 1
    %p84 = por %p82, %p83
    %p85 = scmp.ne.s32.totalorder %s74, %s75
    %p86 = scmp.eq.s32.totalorder %s14, 0
    %p87 = por %p85, %p86
    %p88 = scmp.ne.s32.totalorder %s74, %s75
    %p89 = scmp.eq.s32.totalorder %s15, 1
    %p90 = por %p88, %p89
    %p92 = scmp.ne.s32.totalorder %s75, %s91
    %p93 = scmp.eq.s32.totalorder %s15, 0
    %p94 = por %p92, %p93
    %s95 = ssub.s32 %s9, %s16
    %p96 = scmp.eq.s32.totalorder %s95, 0
    %s98 = sadd.s32 %s97, 1
    %s99 = scalar_select %p96, %s97, %s98
    %p102 = pneg %p96
    %p103 = scmp.eq.s32.totalorder %s9, 1
    %p104 = por %p102, %p103
    %p105 = scmp.ne.s32.totalorder %s97, %s100
    %p106 = scmp.eq.s32.totalorder %s9, 0
    %p107 = por %p105, %p106
    %p108 = scmp.ne.s32.totalorder %s97, %s100
    %p109 = scmp.eq.s32.totalorder %s14, 1
    %p110 = por %p108, %p109
    %p111 = scmp.ne.s32.totalorder %s100, %s101
    %p112 = scmp.eq.s32.totalorder %s14, 0
    %p113 = por %p111, %p112
    %p114 = scmp.ne.s32.totalorder %s100, %s101
    %p115 = scmp.eq.s32.totalorder %s15, 1
    %p116 = por %p114, %p115
    %p118 = scmp.ne.s32.totalorder %s101, %s117
    %p119 = scmp.eq.s32.totalorder %s15, 0
    %p120 = por %p118, %p119
    %p121 = scmp.le.s32.totalorder 1, %s9
    %p122 = scmp.lt.s32.totalorder %s9, 3
    %p123 = pnand %p121, %p122
    %p124 = pneg %p123
    // Predicated region
    $region9: #{tpu_custom_call.1} parent=5 // pred_check
      _
    $region10: #{tpu_custom_call.1} parent=5 // pred_check_branch
      %126 = sbr.rel (%p123) target = $region12
    $region11: #{tpu_custom_call.1} parent=5 // pred_region
      %s127 = ssub.s32 %s9, 1
    $region12: #{tpu_custom_call.1} parent=5 // pred_fallthru
      _
    %p128 = scmp.lt.s32.totalorder %s9, 2
    // Predicated region
    $region13: #{tpu_custom_call.1} parent=5 // pred_check
      %p129 = pneg %p128
    $region14: #{tpu_custom_call.1} parent=5 // pred_check_branch
      %131 = sbr.rel (%p129) target = $region16
    $region15: #{tpu_custom_call.1} parent=5 // pred_region
      // Predicated region
      $region17: #{tpu_custom_call.1} parent=15 // pred_check
        %p132 = pneg %p29
      $region18: #{tpu_custom_call.1} parent=15 // pred_check_branch
        %134 = sbr.rel (%p132) target = $region20
      $region19: #{tpu_custom_call.1} parent=15 // pred_region
        %s135 = smul.u32 8, %s9
        %p136 = scmp.lt.s32.totalorder %s135, 15
        %s137 = scalar_select %p136, %s135, 15
        %s138 = smul.addr %s137, 8
        %s139 = scalar_lea.vmem %s0, %s138
        %s140 = smul.u32 8, %s9
      $region20: #{tpu_custom_call.1} parent=15 // pred_fallthru
        _
      // Predicated region
      $region21: #{tpu_custom_call.1} parent=15 // pred_check
        %p141 = pneg %p55
      $region22: #{tpu_custom_call.1} parent=15 // pred_check_branch
        %143 = sbr.rel (%p141) target = $region24
      $region23: #{tpu_custom_call.1} parent=15 // pred_region
        %p144 = scmp.lt.s32.totalorder %s9, 1
        %s145 = scalar_select %p144, %s9, 1
        %s146 = smul.addr %s145, 8
        %s147 = scalar_lea.vmem %s1, %s146
      $region24: #{tpu_custom_call.1} parent=15 // pred_fallthru
        _
      // Predicated region
      $region25: #{tpu_custom_call.1} parent=15 // pred_check
        %p148 = pneg %p81
      $region26: #{tpu_custom_call.1} parent=15 // pred_check_branch
        %150 = sbr.rel (%p148) target = $region28
      $region27: #{tpu_custom_call.1} parent=15 // pred_region
        %s151 = smul.u32 8, %s9
        %p152 = scmp.lt.s32.totalorder %s151, 15
        %s153 = scalar_select %p152, %s151, 15
        %s154 = smul.addr %s153, 4
        %s155 = smul.addr %s154, 8
        %s156 = scalar_lea.vmem %s2, %s155
        %s157 = smul.u32 8, %s9
      $region28: #{tpu_custom_call.1} parent=15 // pred_fallthru
        _
    $region16: #{tpu_custom_call.1} parent=5 // pred_fallthru
      _
    %p158 = scmp.le.s32.totalorder 1, %s9
    %p159 = scmp.lt.s32.totalorder %s9, 3
    %p160 = pnand %p158, %p159
    %p161 = pneg %p160
    // Predicated region
    $region29: #{tpu_custom_call.1} parent=5 // pred_check
      _
    $region30: #{tpu_custom_call.1} parent=5 // pred_check_branch
      %163 = sbr.rel (%p160) target = $region32
    $region31: #{tpu_custom_call.1} parent=5 // pred_region
      %s164 = ssub.s32 %s9, 1
      %s165 = smul.u32 8, %s14
      %p166 = scmp.lt.s32.totalorder %s165, 15
      %s167 = scalar_select %p166, %s165, 15
      %s168 = smul.addr %s167, 8
      %s169 = scalar_lea.vmem %s0, %s168
      %p170 = pneg %p35
      %p171 = pneg %p32
      %p172 = scmp.lt.s32.totalorder %s14, 1
      %s173 = scalar_select %p172, %s14, 1
      %s174 = smul.addr %s173, 8
      %s175 = scalar_lea.vmem %s1, %s174
      %p176 = pneg %p61
      %p177 = pneg %p58
      %s178 = smul.u32 8, %s14
      %p179 = scmp.lt.s32.totalorder %s178, 15
      %s180 = scalar_select %p179, %s178, 15
      %s181 = smul.addr %s180, 4
      %s182 = smul.addr %s181, 8
      %s183 = scalar_lea.vmem %s2, %s182
      %p184 = pneg %p87
      %p185 = pneg %p84
      %p186 = pneg %p113
      %p187 = pneg %p110
      %p188 = scmp.lt.s32.totalorder %s14, 1
      %s189 = scalar_select %p188, %s14, 1
      %s190 = smul.addr %s189, 8
      %s191 = scalar_lea.vmem %s3, %s190
      %s192 = smul.u32 8, %s14
      %p193 = scmp.lt.s32.totalorder %s192, 15
      %s194 = scalar_select %p193, %s192, 15
      %s195 = smul.addr %s194, 8
      %s196 = scalar_lea.vmem %s0, %s195
      %s197 = smul.u32 8, %s14
      %p198 = scmp.lt.s32.totalorder %s14, 1
      %s199 = scalar_select %p198, %s14, 1
      %s200 = smul.addr %s199, 8
      %s201 = scalar_lea.vmem %s1, %s200
      %s202 = smul.u32 8, %s14
      %p203 = scmp.lt.s32.totalorder %s202, 15
      %s204 = scalar_select %p203, %s202, 15
      %s205 = smul.addr %s204, 4
      %s206 = smul.addr %s205, 8
      %s207 = scalar_lea.vmem %s2, %s206
      %s208 = smul.u32 8, %s14
      %p209 = scmp.lt.s32.totalorder %s14, 1
      %s210 = scalar_select %p209, %s14, 1
      %s211 = smul.addr %s210, 8
      %s212 = scalar_lea.vmem %s3, %s211
      %v213 = vld [vmem:[%s196] sm:$0x1f]
      %v214 = vld [vmem:[%s196 + $0x8] sm:$0x1f]
      %v215 = vld [vmem:[%s196 + $0x10] sm:$0x1f]
      %v216 = vld [vmem:[%s196 + $0x18] sm:$0x1f]
      %v217 = vld [vmem:[%s196 + $0x20] sm:$0x1f]
      %v218 = vld [vmem:[%s196 + $0x28] sm:$0x1f]
      %v219 = vld [vmem:[%s196 + $0x30] sm:$0x1f]
      %v220 = vld [vmem:[%s196 + $0x38] sm:$0x1f]
      %v221 = vld [vmem:[%s207] sm:$0xff]
      %v222 = vld [vmem:[%s207 + $0x8] sm:$0xff]
      %v223 = vld [vmem:[%s207 + $0x10] sm:$0xff]
      %v224 = vld [vmem:[%s207 + $0x18] sm:$0xff]
      %v225 = vld [vmem:[%s207 + $0x20] sm:$0xff]
      %v226 = vld [vmem:[%s207 + $0x28] sm:$0xff]
      %v227 = vld [vmem:[%s207 + $0x30] sm:$0xff]
      %v228 = vld [vmem:[%s207 + $0x38] sm:$0xff]
      %v229 = vld [vmem:[%s207 + $0x40] sm:$0xff]
      %v230 = vld [vmem:[%s207 + $0x48] sm:$0xff]
      %v231 = vld [vmem:[%s207 + $0x50] sm:$0xff]
      %v232 = vld [vmem:[%s207 + $0x58] sm:$0xff]
      %v233 = vld [vmem:[%s207 + $0x60] sm:$0xff]
      %v234 = vld [vmem:[%s207 + $0x68] sm:$0xff]
      %v235 = vld [vmem:[%s207 + $0x70] sm:$0xff]
      %v236 = vld [vmem:[%s207 + $0x78] sm:$0xff]
      %v237 = vld [vmem:[%s207 + $0x80] sm:$0xff]
      %v238 = vld [vmem:[%s207 + $0x88] sm:$0xff]
      %v239 = vld [vmem:[%s207 + $0x90] sm:$0xff]
      %v240 = vld [vmem:[%s207 + $0x98] sm:$0xff]
      %v241 = vld [vmem:[%s207 + $0xa0] sm:$0xff]
      %v242 = vld [vmem:[%s207 + $0xa8] sm:$0xff]
      %v243 = vld [vmem:[%s207 + $0xb0] sm:$0xff]
      %v244 = vld [vmem:[%s207 + $0xb8] sm:$0xff]
      %v245 = vld [vmem:[%s207 + $0xc0] sm:$0xff]
      %v246 = vld [vmem:[%s207 + $0xc8] sm:$0xff]
      %v247 = vld [vmem:[%s207 + $0xd0] sm:$0xff]
      %v248 = vld [vmem:[%s207 + $0xd8] sm:$0xff]
      %v249 = vld [vmem:[%s207 + $0xe0] sm:$0xff]
      %v250 = vld [vmem:[%s207 + $0xe8] sm:$0xff]
      %v251 = vld [vmem:[%s207 + $0xf0] sm:$0xff]
      %v252 = vld [vmem:[%s207 + $0xf8] sm:$0xff]
      %v253 = vld [vmem:[%s201] sm:$0xff]
      %v255 = vcombine.high %v253, %v253
      %v257 = vunpack.c.l.s4 1966171168
      %v258 = vunpack.c.0.s8 %v257
      %v259 = vlaneseq
      %v260 = vshrl.u32 %v259, 7
      %v261 = vsub.s32 %v258, %v260
      %v262 = vrot.slane %v253, %v261
      %v264 = vunpack.c.l.s4 1966171168
      %v265 = vunpack.c.0.s8 %v264
      %v266 = vlaneseq
      %v267 = vshrl.u32 %v266, 7
      %v268 = vsub.s32 %v265, %v267
      %v269 = vrot.slane %v255, %v268
      %v270 = vcombine.high %v262, %v262
      %v271 = vcombine.high %v269, %v269
      %v273 = vunpack.c.l.s4 1966171168
      %v274 = vunpack.c.0.s8 %v273
      %v275 = vlaneseq
      %v276 = vshrl.u32 %v275, 7
      %v277 = vsub.s32 %v274, %v276
      %v278 = vrot.slane %v262, %v277
      %v280 = vunpack.c.l.s4 1966171168
      %v281 = vunpack.c.0.s8 %v280
      %v282 = vlaneseq
      %v283 = vshrl.u32 %v282, 7
      %v284 = vsub.s32 %v281, %v283
      %v285 = vrot.slane %v269, %v284
      %v287 = vunpack.c.l.s4 1966171168
      %v288 = vunpack.c.0.s8 %v287
      %v289 = vlaneseq
      %v290 = vshrl.u32 %v289, 7
      %v291 = vsub.s32 %v288, %v290
      %v292 = vrot.slane %v270, %v291
      %v294 = vunpack.c.l.s4 1966171168
      %v295 = vunpack.c.0.s8 %v294
      %v296 = vlaneseq
      %v297 = vshrl.u32 %v296, 7
      %v298 = vsub.s32 %v295, %v297
      %v299 = vrot.slane %v271, %v298
      %v300 = vcombine.high %v278, %v278
      %v301 = vcombine.high %v285, %v285
      %v302 = vcombine.high %v292, %v292
      %v303 = vcombine.high %v299, %v299
      %v312 = vmul.f32 %v213, %v213
      %v313 = vmul.f32 %v214, %v214
      %v314 = vmul.f32 %v215, %v215
      %v315 = vmul.f32 %v216, %v216
      %v316 = vmul.f32 %v217, %v217
      %v317 = vmul.f32 %v218, %v218
      %v318 = vmul.f32 %v219, %v219
      %v319 = vmul.f32 %v220, %v220
      %vm320 = vcmask 258048
      %v321 = vsel %vm320, %v312, 0.0
      %322 = vadd.xlane.f32.xlu0 %v321
      %v323 = vpop.xlane.xlu0 %322
      %v324 = vsel %vm320, %v313, 0.0
      %325 = vadd.xlane.f32.xlu0 %v324
      %v326 = vpop.xlane.xlu0 %325
      %v327 = vsel %vm320, %v314, 0.0
      %328 = vadd.xlane.f32.xlu0 %v327
      %v329 = vpop.xlane.xlu0 %328
      %v330 = vsel %vm320, %v315, 0.0
      %331 = vadd.xlane.f32.xlu0 %v330
      %v332 = vpop.xlane.xlu0 %331
      %v333 = vsel %vm320, %v316, 0.0
      %334 = vadd.xlane.f32.xlu0 %v333
      %v335 = vpop.xlane.xlu0 %334
      %v336 = vsel %vm320, %v317, 0.0
      %337 = vadd.xlane.f32.xlu0 %v336
      %v338 = vpop.xlane.xlu0 %337
      %v339 = vsel %vm320, %v318, 0.0
      %340 = vadd.xlane.f32.xlu0 %v339
      %v341 = vpop.xlane.xlu0 %340
      %v342 = vsel %vm320, %v319, 0.0
      %343 = vadd.xlane.f32.xlu0 %v342
      %v344 = vpop.xlane.xlu0 %343
      %v345 = vrsqrt.pop %v323
      %v346 = vmul.f32 %v323, %v345
      %vm347 = vcmp.eq.f32.partialorder %v323, inf
      %v348 = vsel %vm347, %v323, %v346
      %vm349 = vcmp.eq.f32.partialorder %v323, 0.0
      %v350 = vand.u32 %v323, 2147483648
      %v351 = vsel %vm349, %v350, %v348
      %v352 = vrsqrt.pop %v326
      %v353 = vmul.f32 %v326, %v352
      %vm354 = vcmp.eq.f32.partialorder %v326, inf
      %v355 = vsel %vm354, %v326, %v353
      %vm356 = vcmp.eq.f32.partialorder %v326, 0.0
      %v357 = vand.u32 %v326, 2147483648
      %v358 = vsel %vm356, %v357, %v355
      %v359 = vrsqrt.pop %v329
      %v360 = vmul.f32 %v329, %v359
      %vm361 = vcmp.eq.f32.partialorder %v329, inf
      %v362 = vsel %vm361, %v329, %v360
      %vm363 = vcmp.eq.f32.partialorder %v329, 0.0
      %v364 = vand.u32 %v329, 2147483648
      %v365 = vsel %vm363, %v364, %v362
      %v366 = vrsqrt.pop %v332
      %v367 = vmul.f32 %v332, %v366
      %vm368 = vcmp.eq.f32.partialorder %v332, inf
      %v369 = vsel %vm368, %v332, %v367
      %vm370 = vcmp.eq.f32.partialorder %v332, 0.0
      %v371 = vand.u32 %v332, 2147483648
      %v372 = vsel %vm370, %v371, %v369
      %v373 = vrsqrt.pop %v335
      %v374 = vmul.f32 %v335, %v373
      %vm375 = vcmp.eq.f32.partialorder %v335, inf
      %v376 = vsel %vm375, %v335, %v374
      %vm377 = vcmp.eq.f32.partialorder %v335, 0.0
      %v378 = vand.u32 %v335, 2147483648
      %v379 = vsel %vm377, %v378, %v376
      %v380 = vrsqrt.pop %v338
      %v381 = vmul.f32 %v338, %v380
      %vm382 = vcmp.eq.f32.partialorder %v338, inf
      %v383 = vsel %vm382, %v338, %v381
      %vm384 = vcmp.eq.f32.partialorder %v338, 0.0
      %v385 = vand.u32 %v338, 2147483648
      %v386 = vsel %vm384, %v385, %v383
      %v387 = vrsqrt.pop %v341
      %v388 = vmul.f32 %v341, %v387
      %vm389 = vcmp.eq.f32.partialorder %v341, inf
      %v390 = vsel %vm389, %v341, %v388
      %vm391 = vcmp.eq.f32.partialorder %v341, 0.0
      %v392 = vand.u32 %v341, 2147483648
      %v393 = vsel %vm391, %v392, %v390
      %v394 = vrsqrt.pop %v344
      %v395 = vmul.f32 %v344, %v394
      %vm396 = vcmp.eq.f32.partialorder %v344, inf
      %v397 = vsel %vm396, %v344, %v395
      %vm398 = vcmp.eq.f32.partialorder %v344, 0.0
      %v399 = vand.u32 %v344, 2147483648
      %v400 = vsel %vm398, %v399, %v397
      %vm401 = vcmp.gt.f32.partialorder %v351, 1.0
      %vm402 = vcmp.gt.f32.partialorder %v358, 1.0
      %vm403 = vcmp.gt.f32.partialorder %v365, 1.0
      %vm404 = vcmp.gt.f32.partialorder %v372, 1.0
      %vm405 = vcmp.gt.f32.partialorder %v379, 1.0
      %vm406 = vcmp.gt.f32.partialorder %v386, 1.0
      %vm407 = vcmp.gt.f32.partialorder %v393, 1.0
      %vm408 = vcmp.gt.f32.partialorder %v400, 1.0
      %v409 = vadd.f32 %v351, 1e-07
      %v410 = vadd.f32 %v358, 1e-07
      %v411 = vadd.f32 %v365, 1e-07
      %v412 = vadd.f32 %v372, 1e-07
      %v413 = vadd.f32 %v379, 1e-07
      %v414 = vadd.f32 %v386, 1e-07
      %v415 = vadd.f32 %v393, 1e-07
      %v416 = vadd.f32 %v400, 1e-07
      %v417 = vrcp.pop %v409
      %v418 = vmul.f32 1.0, %v417
      %v419 = vrcp.pop %v410
      %v420 = vmul.f32 1.0, %v419
      %v421 = vrcp.pop %v411
      %v422 = vmul.f32 1.0, %v421
      %v423 = vrcp.pop %v412
      %v424 = vmul.f32 1.0, %v423
      %v425 = vrcp.pop %v413
      %v426 = vmul.f32 1.0, %v425
      %v427 = vrcp.pop %v414
      %v428 = vmul.f32 1.0, %v427
      %v429 = vrcp.pop %v415
      %v430 = vmul.f32 1.0, %v429
      %v431 = vrcp.pop %v416
      %v432 = vmul.f32 1.0, %v431
      %v433 = vsel %vm401, %v418, 1.0
      %v434 = vsel %vm402, %v420, 1.0
      %v435 = vsel %vm403, %v422, 1.0
      %v436 = vsel %vm404, %v424, 1.0
      %v437 = vsel %vm405, %v426, 1.0
      %v438 = vsel %vm406, %v428, 1.0
      %v439 = vsel %vm407, %v430, 1.0
      %v440 = vsel %vm408, %v432, 1.0
      %v441 = vmul.f32 %v213, %v433
      %v442 = vmul.f32 %v214, %v434
      %v443 = vmul.f32 %v215, %v435
      %v444 = vmul.f32 %v216, %v436
      %v445 = vmul.f32 %v217, %v437
      %v446 = vmul.f32 %v218, %v438
      %v447 = vmul.f32 %v219, %v439
      %v448 = vmul.f32 %v220, %v440
      %vm449 = vcmask 261120
      %v451 = vsel %vm449, %v441, 0
      %453 = vmatprep.subr.mxu0 0.0
      %v454 = vand.u32 %v221, 4294901760
      %455 = vmatpush1.msra.mxu0 %v454
      %456 = vmatprep.subr.mxu0 0.0
      %v457 = vand.u32 %v222, 4294901760
      %458 = vmatpush1.msra.mxu0 %v457
      %459 = vmatprep.subr.mxu0 0.0
      %v460 = vand.u32 %v223, 4294901760
      %461 = vmatpush1.msra.mxu0 %v460
      %462 = vmatprep.subr.mxu0 0.0
      %v463 = vand.u32 %v224, 4294901760
      %464 = vmatpush1.msra.mxu0 %v463
      %465 = vmatprep.subr.mxu0 0.0
      %466 = vmatpush1.msra.mxu0 0.0
      %467 = vmatprep.subr.mxu0 0.0
      %468 = vmatpush1.msra.mxu0 0.0
      %469 = vmatprep.subr.mxu0 0.0
      %470 = vmatpush1.msra.mxu0 0.0
      %471 = vmatprep.subr.mxu0 0.0
      %472 = vmatpush1.msra.mxu0 0.0
      %473 = vmatprep.subr.mxu0 0.0
      %474 = vmatpush1.msra.mxu0 0.0
      %475 = vmatprep.subr.mxu0 0.0
      %476 = vmatpush1.msra.mxu0 0.0
      %477 = vmatprep.subr.mxu0 0.0
      %478 = vmatpush1.msra.mxu0 0.0
      %479 = vmatprep.subr.mxu0 0.0
      %480 = vmatpush1.msra.mxu0 0.0
      %481 = vmatprep.subr.mxu0 0.0
      %482 = vmatpush1.msra.mxu0 0.0
      %483 = vmatprep.subr.mxu0 0.0
      %484 = vmatpush1.msra.mxu0 0.0
      %485 = vmatprep.subr.mxu0 0.0
      %486 = vmatpush1.msra.mxu0 0.0
      %487 = vmatprep.subr.mxu0 0.0
      %488 = vmatpush1.msra.mxu0 0.0
      %489 = vmatprep.subr.mxu0 0.0
      %490 = vmatpush1.msra.mxu0 0.0
      %491 = vmatprep.subr.mxu0 0.0
      %492 = vmatpush1.msra.mxu0 0.0
      %493 = vmatprep.subr.mxu0 0.0
      %494 = vmatpush1.msra.mxu0 0.0
      %495 = vmatprep.subr.mxu0 0.0
      %496 = vmatpush1.msra.mxu0 0.0
      %497 = vmatprep.subr.mxu0 0.0
      %498 = vmatpush1.msra.mxu0 0.0
      %499 = vmatprep.subr.mxu0 0.0
      %500 = vmatpush1.msra.mxu0 0.0
      %501 = vmatprep.subr.mxu0 0.0
      %502 = vmatpush1.msra.mxu0 0.0
      %503 = vmatprep.subr.mxu0 0.0
      %504 = vmatpush1.msra.mxu0 0.0
      %505 = vmatprep.subr.mxu0 0.0
      %506 = vmatpush1.msra.mxu0 0.0
      %507 = vmatprep.subr.mxu0 0.0
      %508 = vmatpush1.msra.mxu0 0.0
      %509 = vmatprep.subr.mxu0 0.0
      %510 = vmatpush1.msra.mxu0 0.0
      %511 = vmatprep.subr.mxu0 0.0
      %512 = vmatpush1.msra.mxu0 0.0
      %513 = vmatprep.subr.mxu0 0.0
      %514 = vmatpush1.msra.mxu0 0.0
      %515 = vmatprep.subr.mxu0 0.0
      %516 = vmatpush1.msra.mxu0 0.0
      %517 = vmatprep.subr.mxu0 0.0
      %518 = vmatpush1.msra.mxu0 0.0
      %519 = vmatprep.subr.mxu0 0.0
      %520 = vmatpush1.msra.mxu0 0.0
      %521 = vmatprep.mubr.f32.mxu0 0.0
      %v522 = vand.u32 %v451, 4294901760
      %v523 = vsub.f32 %v451, %v522
      %v524 = vand.u32 %v523, 4294901760
      %v525 = vsub.f32 %v523, %v524
      %v526 = vand.u32 %v525, 4294901760
      %527 = vmatmul.mubr.f32.gmra.mrb[0].mxu0 %v526
      %v528 = vpop.f32.mrb[0].mxu0
      %v529 = vadd.f32 0.0, %v528
      %v530 = vpop.f32.mrb[0].mxu0
      %531 = vdwg.mxu0
      %532 = vmatprep.subr.mxu0 0.0
      %v533 = vand.u32 %v221, 4294901760
      %v534 = vsub.f32 %v221, %v533
      %v535 = vand.u32 %v534, 4294901760
      %v536 = vsub.f32 %v534, %v535
      %v537 = vand.u32 %v536, 4294901760
      %538 = vmatpush1.msra.mxu0 %v537
      %539 = vmatprep.subr.mxu0 0.0
      %v540 = vand.u32 %v222, 4294901760
      %v541 = vsub.f32 %v222, %v540
      %v542 = vand.u32 %v541, 4294901760
      %v543 = vsub.f32 %v541, %v542
      %v544 = vand.u32 %v543, 4294901760
      %545 = vmatpush1.msra.mxu0 %v544
      %546 = vmatprep.subr.mxu0 0.0
      %v547 = vand.u32 %v223, 4294901760
      %v548 = vsub.f32 %v223, %v547
      %v549 = vand.u32 %v548, 4294901760
      %v550 = vsub.f32 %v548, %v549
      %v551 = vand.u32 %v550, 4294901760
      %552 = vmatpush1.msra.mxu0 %v551
      %553 = vmatprep.subr.mxu0 0.0
      %v554 = vand.u32 %v224, 4294901760
      %v555 = vsub.f32 %v224, %v554
      %v556 = vand.u32 %v555, 4294901760
      %v557 = vsub.f32 %v555, %v556
      %v558 = vand.u32 %v557, 4294901760
      %559 = vmatpush1.msra.mxu0 %v558
      %560 = vmatprep.subr.mxu0 0.0
      %561 = vmatpush1.msra.mxu0 0.0
      %562 = vmatprep.subr.mxu0 0.0
      %563 = vmatpush1.msra.mxu0 0.0
      %564 = vmatprep.subr.mxu0 0.0
      %565 = vmatpush1.msra.mxu0 0.0
      %566 = vmatprep.subr.mxu0 0.0
      %567 = vmatpush1.msra.mxu0 0.0
      %568 = vmatprep.subr.mxu0 0.0
      %569 = vmatpush1.msra.mxu0 0.0
      %570 = vmatprep.subr.mxu0 0.0
      %571 = vmatpush1.msra.mxu0 0.0
      %572 = vmatprep.subr.mxu0 0.0
      %573 = vmatpush1.msra.mxu0 0.0
      %574 = vmatprep.subr.mxu0 0.0
      %575 = vmatpush1.msra.mxu0 0.0
      %576 = vmatprep.subr.mxu0 0.0
      %577 = vmatpush1.msra.mxu0 0.0
      %578 = vmatprep.subr.mxu0 0.0
      %579 = vmatpush1.msra.mxu0 0.0
      %580 = vmatprep.subr.mxu0 0.0
      %581 = vmatpush1.msra.mxu0 0.0
      %582 = vmatprep.subr.mxu0 0.0
      %583 = vmatpush1.msra.mxu0 0.0
      %584 = vmatprep.subr.mxu0 0.0
      %585 = vmatpush1.msra.mxu0 0.0
      %586 = vmatprep.subr.mxu0 0.0
      %587 = vmatpush1.msra.mxu0 0.0
      %588 = vmatprep.subr.mxu0 0.0
      %589 = vmatpush1.msra.mxu0 0.0
      %590 = vmatprep.subr.mxu0 0.0
      %591 = vmatpush1.msra.mxu0 0.0
      %592 = vmatprep.subr.mxu0 0.0
      %593 = vmatpush1.msra.mxu0 0.0
      %594 = vmatprep.subr.mxu0 0.0
      %595 = vmatpush1.msra.mxu0 0.0
      %596 = vmatprep.subr.mxu0 0.0
      %597 = vmatpush1.msra.mxu0 0.0
      %598 = vmatprep.subr.mxu0 0.0
      %599 = vmatpush1.msra.mxu0 0.0
      %600 = vmatprep.subr.mxu0 0.0
      %601 = vmatpush1.msra.mxu0 0.0
      %602 = vmatprep.subr.mxu0 0.0
      %603 = vmatpush1.msra.mxu0 0.0
      %604 = vmatprep.subr.mxu0 0.0
      %605 = vmatpush1.msra.mxu0 0.0
      %606 = vmatprep.subr.mxu0 0.0
      %607 = vmatpush1.msra.mxu0 0.0
      %608 = vmatprep.subr.mxu0 0.0
      %609 = vmatpush1.msra.mxu0 0.0
      %610 = vmatprep.subr.mxu0 0.0
      %611 = vmatpush1.msra.mxu0 0.0
      %612 = vmatprep.subr.mxu0 0.0
      %613 = vmatpush1.msra.mxu0 0.0
      %614 = vmatprep.subr.mxu0 0.0
      %615 = vmatpush1.msra.mxu0 0.0
      %616 = vmatprep.mubr.f32.mxu0 0.0
      %v617 = vand.u32 %v451, 4294901760
      %618 = vmatmul.mubr.f32.gmra.mrb[0].mxu0 %v617
      %v619 = vpop.f32.mrb[0].mxu0
      %v620 = vadd.f32 %v529, %v619
      %v621 = vpop.f32.mrb[0].mxu0
      %622 = vdwg.mxu0
      %623 = vmatprep.subr.mxu0 0.0
      %v624 = vand.u32 %v221, 4294901760
      %v625 = vsub.f32 %v221, %v624
      %626 = vmatpush1.msra.mxu0 %v625
      %627 = vmatprep.subr.mxu0 0.0
      %v628 = vand.u32 %v222, 4294901760
      %v629 = vsub.f32 %v222, %v628
      %630 = vmatpush1.msra.mxu0 %v629
      %631 = vmatprep.subr.mxu0 0.0
      %v632 = vand.u32 %v223, 4294901760
      %v633 = vsub.f32 %v223, %v632
      %634 = vmatpush1.msra.mxu0 %v633
      %635 = vmatprep.subr.mxu0 0.0
      %v636 = vand.u32 %v224, 4294901760
      %v637 = vsub.f32 %v224, %v636
      %638 = vmatpush1.msra.mxu0 %v637
      %639 = vmatprep.subr.mxu0 0.0
      %640 = vmatpush1.msra.mxu0 0.0
      %641 = vmatprep.subr.mxu0 0.0
      %642 = vmatpush1.msra.mxu0 0.0
      %643 = vmatprep.subr.mxu0 0.0
      %644 = vmatpush1.msra.mxu0 0.0
      %645 = vmatprep.subr.mxu0 0.0
      %646 = vmatpush1.msra.mxu0 0.0
      %647 = vmatprep.subr.mxu0 0.0
      %648 = vmatpush1.msra.mxu0 0.0
      %649 = vmatprep.subr.mxu0 0.0
      %650 = vmatpush1.msra.mxu0 0.0
      %651 = vmatprep.subr.mxu0 0.0
      %652 = vmatpush1.msra.mxu0 0.0
      %653 = vmatprep.subr.mxu0 0.0
      %654 = vmatpush1.msra.mxu0 0.0
      %655 = vmatprep.subr.mxu0 0.0
      %656 = vmatpush1.msra.mxu0 0.0
      %657 = vmatprep.subr.mxu0 0.0
      %658 = vmatpush1.msra.mxu0 0.0
      %659 = vmatprep.subr.mxu0 0.0
      %660 = vmatpush1.msra.mxu0 0.0
      %661 = vmatprep.subr.mxu0 0.0
      %662 = vmatpush1.msra.mxu0 0.0
      %663 = vmatprep.subr.mxu0 0.0
      %664 = vmatpush1.msra.mxu0 0.0
      %665 = vmatprep.subr.mxu0 0.0
      %666 = vmatpush1.msra.mxu0 0.0
      %667 = vmatprep.subr.mxu0 0.0
      %668 = vmatpush1.msra.mxu0 0.0
      %669 = vmatprep.subr.mxu0 0.0
      %670 = vmatpush1.msra.mxu0 0.0
      %671 = vmatprep.subr.mxu0 0.0
      %672 = vmatpush1.msra.mxu0 0.0
      %673 = vmatprep.subr.mxu0 0.0
      %674 = vmatpush1.msra.mxu0 0.0
      %675 = vmatprep.subr.mxu0 0.0
      %676 = vmatpush1.msra.mxu0 0.0
      %677 = vmatprep.subr.mxu0 0.0
      %678 = vmatpush1.msra.mxu0 0.0
      %679 = vmatprep.subr.mxu0 0.0
      %680 = vmatpush1.msra.mxu0 0.0
      %681 = vmatprep.subr.mxu0 0.0
      %682 = vmatpush1.msra.mxu0 0.0
      %683 = vmatprep.subr.mxu0 0.0
      %684 = vmatpush1.msra.mxu0 0.0
      %685 = vmatprep.subr.mxu0 0.0
      %686 = vmatpush1.msra.mxu0 0.0
      %687 = vmatprep.subr.mxu0 0.0
      %688 = vmatpush1.msra.mxu0 0.0
      %689 = vmatprep.subr.mxu0 0.0
      %690 = vmatpush1.msra.mxu0 0.0
      %691 = vmatprep.subr.mxu0 0.0
      %692 = vmatpush1.msra.mxu0 0.0
      %693 = vmatprep.subr.mxu0 0.0
      %694 = vmatpush1.msra.mxu0 0.0
      %695 = vmatprep.mubr.f32.mxu0 0.0
      %v696 = vand.u32 %v451, 4294901760
      %v697 = vsub.f32 %v451, %v696
      %698 = vmatmul.mubr.f32.gmra.mrb[0].mxu0 %v697
      %v699 = vpop.f32.mrb[0].mxu0
      %v700 = vadd.f32 %v620, %v699
      %v701 = vpop.f32.mrb[0].mxu0
      %702 = vdwg.mxu0
      %703 = vmatprep.subr.mxu0 0.0
      %v704 = vand.u32 %v221, 4294901760
      %705 = vmatpush1.msra.mxu0 %v704
      %706 = vmatprep.subr.mxu0 0.0
      %v707 = vand.u32 %v222, 4294901760
      %708 = vmatpush1.msra.mxu0 %v707
      %709 = vmatprep.subr.mxu0 0.0
      %v710 = vand.u32 %v223, 4294901760
      %711 = vmatpush1.msra.mxu0 %v710
      %712 = vmatprep.subr.mxu0 0.0
      %v713 = vand.u32 %v224, 4294901760
      %714 = vmatpush1.msra.mxu0 %v713
      %715 = vmatprep.subr.mxu0 0.0
      %716 = vmatpush1.msra.mxu0 0.0
      %717 = vmatprep.subr.mxu0 0.0
      %718 = vmatpush1.msra.mxu0 0.0
      %719 = vmatprep.subr.mxu0 0.0
      %720 = vmatpush1.msra.mxu0 0.0
      %721 = vmatprep.subr.mxu0 0.0
      %722 = vmatpush1.msra.mxu0 0.0
      %723 = vmatprep.subr.mxu0 0.0
      %724 = vmatpush1.msra.mxu0 0.0
      %725 = vmatprep.subr.mxu0 0.0
      %726 = vmatpush1.msra.mxu0 0.0
      %727 = vmatprep.subr.mxu0 0.0
      %728 = vmatpush1.msra.mxu0 0.0
      %729 = vmatprep.subr.mxu0 0.0
      %730 = vmatpush1.msra.mxu0 0.0
      %731 = vmatprep.subr.mxu0 0.0
      %732 = vmatpush1.msra.mxu0 0.0
      %733 = vmatprep.subr.mxu0 0.0
      %734 = vmatpush1.msra.mxu0 0.0
      %735 = vmatprep.subr.mxu0 0.0
      %736 = vmatpush1.msra.mxu0 0.0
      %737 = vmatprep.subr.mxu0 0.0
      %738 = vmatpush1.msra.mxu0 0.0
      %739 = vmatprep.subr.mxu0 0.0
      %740 = vmatpush1.msra.mxu0 0.0
      %741 = vmatprep.subr.mxu0 0.0
      %742 = vmatpush1.msra.mxu0 0.0
      %743 = vmatprep.subr.mxu0 0.0
      %744 = vmatpush1.msra.mxu0 0.0
      %745 = vmatprep.subr.mxu0 0.0
      %746 = vmatpush1.msra.mxu0 0.0
      %747 = vmatprep.subr.mxu0 0.0
      %748 = vmatpush1.msra.mxu0 0.0
      %749 = vmatprep.subr.mxu0 0.0
      %750 = vmatpush1.msra.mxu0 0.0
      %751 = vmatprep.subr.mxu0 0.0
      %752 = vmatpush1.msra.mxu0 0.0
      %753 = vmatprep.subr.mxu0 0.0
      %754 = vmatpush1.msra.mxu0 0.0
      %755 = vmatprep.subr.mxu0 0.0
      %756 = vmatpush1.msra.mxu0 0.0
      %757 = vmatprep.subr.mxu0 0.0
      %758 = vmatpush1.msra.mxu0 0.0
      %759 = vmatprep.subr.mxu0 0.0
      %760 = vmatpush1.msra.mxu0 0.0
      %761 = vmatprep.subr.mxu0 0.0
      %762 = vmatpush1.msra.mxu0 0.0
      %763 = vmatprep.subr.mxu0 0.0
      %764 = vmatpush1.msra.mxu0 0.0
      %765 = vmatprep.subr.mxu0 0.0
      %766 = vmatpush1.msra.mxu0 0.0
      %767 = vmatprep.subr.mxu0 0.0
      %768 = vmatpush1.msra.mxu0 0.0
      %769 = vmatprep.subr.mxu0 0.0
      %770 = vmatpush1.msra.mxu0 0.0
      %771 = vmatprep.mubr.f32.mxu0 0.0
      %v772 = vand.u32 %v451, 4294901760
      %v773 = vsub.f32 %v451, %v772
      %v774 = vand.u32 %v773, 4294901760
      %775 = vmatmul.mubr.f32.gmra.mrb[0].mxu0 %v774
      %v776 = vpop.f32.mrb[0].mxu0
      %v777 = vadd.f32 %v700, %v776
      %v778 = vpop.f32.mrb[0].mxu0
      %779 = vdwg.mxu0
      %780 = vmatprep.subr.mxu0 0.0
      %v781 = vand.u32 %v221, 4294901760
      %v782 = vsub.f32 %v221, %v781
      %v783 = vand.u32 %v782, 4294901760
      %784 = vmatpush1.msra.mxu0 %v783
      %785 = vmatprep.subr.mxu0 0.0
      %v786 = vand.u32 %v222, 4294901760
      %v787 = vsub.f32 %v222, %v786
      %v788 = vand.u32 %v787, 4294901760
      %789 = vmatpush1.msra.mxu0 %v788
      %790 = vmatprep.subr.mxu0 0.0
      %v791 = vand.u32 %v223, 4294901760
      %v792 = vsub.f32 %v223, %v791
      %v793 = vand.u32 %v792, 4294901760
      %794 = vmatpush1.msra.mxu0 %v793
      %795 = vmatprep.subr.mxu0 0.0
      %v796 = vand.u32 %v224, 4294901760
      %v797 = vsub.f32 %v224, %v796
      %v798 = vand.u32 %v797, 4294901760
      %799 = vmatpush1.msra.mxu0 %v798
      %800 = vmatprep.subr.mxu0 0.0
      %801 = vmatpush1.msra.mxu0 0.0
      %802 = vmatprep.subr.mxu0 0.0
      %803 = vmatpush1.msra.mxu0 0.0
      %804 = vmatprep.subr.mxu0 0.0
      %805 = vmatpush1.msra.mxu0 0.0
      %806 = vmatprep.subr.mxu0 0.0
      %807 = vmatpush1.msra.mxu0 0.0
      %808 = vmatprep.subr.mxu0 0.0
      %809 = vmatpush1.msra.mxu0 0.0
      %810 = vmatprep.subr.mxu0 0.0
      %811 = vmatpush1.msra.mxu0 0.0
      %812 = vmatprep.subr.mxu0 0.0
      %813 = vmatpush1.msra.mxu0 0.0
      %814 = vmatprep.subr.mxu0 0.0
      %815 = vmatpush1.msra.mxu0 0.0
      %816 = vmatprep.subr.mxu0 0.0
      %817 = vmatpush1.msra.mxu0 0.0
      %818 = vmatprep.subr.mxu0 0.0
      %819 = vmatpush1.msra.mxu0 0.0
      %820 = vmatprep.subr.mxu0 0.0
      %821 = vmatpush1.msra.mxu0 0.0
      %822 = vmatprep.subr.mxu0 0.0
      %823 = vmatpush1.msra.mxu0 0.0
      %824 = vmatprep.subr.mxu0 0.0
      %825 = vmatpush1.msra.mxu0 0.0
      %826 = vmatprep.subr.mxu0 0.0
      %827 = vmatpush1.msra.mxu0 0.0
      %828 = vmatprep.subr.mxu0 0.0
      %829 = vmatpush1.msra.mxu0 0.0
      %830 = vmatprep.subr.mxu0 0.0
      %831 = vmatpush1.msra.mxu0 0.0
      %832 = vmatprep.subr.mxu0 0.0
      %833 = vmatpush1.msra.mxu0 0.0
      %834 = vmatprep.subr.mxu0 0.0
      %835 = vmatpush1.msra.mxu0 0.0
      %836 = vmatprep.subr.mxu0 0.0
      %837 = vmatpush1.msra.mxu0 0.0
      %838 = vmatprep.subr.mxu0 0.0
      %839 = vmatpush1.msra.mxu0 0.0
      %840 = vmatprep.subr.mxu0 0.0
      %841 = vmatpush1.msra.mxu0 0.0
      %842 = vmatprep.subr.mxu0 0.0
      %843 = vmatpush1.msra.mxu0 0.0
      %844 = vmatprep.subr.mxu0 0.0
      %845 = vmatpush1.msra.mxu0 0.0
      %846 = vmatprep.subr.mxu0 0.0
      %847 = vmatpush1.msra.mxu0 0.0
      %848 = vmatprep.subr.mxu0 0.0
      %849 = vmatpush1.msra.mxu0 0.0
      %850 = vmatprep.subr.mxu0 0.0
      %851 = vmatpush1.msra.mxu0 0.0
      %852 = vmatprep.subr.mxu0 0.0
      %853 = vmatpush1.msra.mxu0 0.0
      %854 = vmatprep.subr.mxu0 0.0
      %855 = vmatpush1.msra.mxu0 0.0
      %856 = vmatprep.mubr.f32.mxu0 0.0
      %v857 = vand.u32 %v451, 4294901760
      %858 = vmatmul.mubr.f32.gmra.mrb[0].mxu0 %v857
      %v859 = vpop.f32.mrb[0].mxu0
      %v860 = vadd.f32 %v777, %v859
      %v861 = vpop.f32.mrb[0].mxu0
      %862 = vdwg.mxu0
      %863 = vmatprep.subr.mxu0 0.0
      %v864 = vand.u32 %v221, 4294901760
      %865 = vmatpush1.msra.mxu0 %v864
      %866 = vmatprep.subr.mxu0 0.0
      %v867 = vand.u32 %v222, 4294901760
      %868 = vmatpush1.msra.mxu0 %v867
      %869 = vmatprep.subr.mxu0 0.0
      %v870 = vand.u32 %v223, 4294901760
      %871 = vmatpush1.msra.mxu0 %v870
      %872 = vmatprep.subr.mxu0 0.0
      %v873 = vand.u32 %v224, 4294901760
      %874 = vmatpush1.msra.mxu0 %v873
      %875 = vmatprep.subr.mxu0 0.0
      %876 = vmatpush1.msra.mxu0 0.0
      %877 = vmatprep.subr.mxu0 0.0
      %878 = vmatpush1.msra.mxu0 0.0
      %879 = vmatprep.subr.mxu0 0.0
      %880 = vmatpush1.msra.mxu0 0.0
      %881 = vmatprep.subr.mxu0 0.0
      %882 = vmatpush1.msra.mxu0 0.0
      %883 = vmatprep.subr.mxu0 0.0
      %884 = vmatpush1.msra.mxu0 0.0
      %885 = vmatprep.subr.mxu0 0.0
      %886 = vmatpush1.msra.mxu0 0.0
      %887 = vmatprep.subr.mxu0 0.0
      %888 = vmatpush1.msra.mxu0 0.0
      %889 = vmatprep.subr.mxu0 0.0
      %890 = vmatpush1.msra.mxu0 0.0
      %891 = vmatprep.subr.mxu0 0.0
      %892 = vmatpush1.msra.mxu0 0.0
      %893 = vmatprep.subr.mxu0 0.0
      %894 = vmatpush1.msra.mxu0 0.0
      %895 = vmatprep.subr.mxu0 0.0
      %896 = vmatpush1.msra.mxu0 0.0
      %897 = vmatprep.subr.mxu0 0.0
      %898 = vmatpush1.msra.mxu0 0.0
      %899 = vmatprep.subr.mxu0 0.0
      %900 = vmatpush1.msra.mxu0 0.0
      %901 = vmatprep.subr.mxu0 0.0
      %902 = vmatpush1.msra.mxu0 0.0
      %903 = vmatprep.subr.mxu0 0.0
      %904 = vmatpush1.msra.mxu0 0.0
      %905 = vmatprep.subr.mxu0 0.0
      %906 = vmatpush1.msra.mxu0 0.0
      %907 = vmatprep.subr.mxu0 0.0
      %908 = vmatpush1.msra.mxu0 0.0
      %909 = vmatprep.subr.mxu0 0.0
      %910 = vmatpush1.msra.mxu0 0.0
      %911 = vmatprep.subr.mxu0 0.0
      %912 = vmatpush1.msra.mxu0 0.0
      %913 = vmatprep.subr.mxu0 0.0
      %914 = vmatpush1.msra.mxu0 0.0
      %915 = vmatprep.subr.mxu0 0.0
      %916 = vmatpush1.msra.mxu0 0.0
      %917 = vmatprep.subr.mxu0 0.0
      %918 = vmatpush1.msra.mxu0 0.0
      %919 = vmatprep.subr.mxu0 0.0
      %920 = vmatpush1.msra.mxu0 0.0
      %921 = vmatprep.subr.mxu0 0.0
      %922 = vmatpush1.msra.mxu0 0.0
      %923 = vmatprep.subr.mxu0 0.0
      %924 = vmatpush1.msra.mxu0 0.0
      %925 = vmatprep.subr.mxu0 0.0
      %926 = vmatpush1.msra.mxu0 0.0
      %927 = vmatprep.subr.mxu0 0.0
      %928 = vmatpush1.msra.mxu0 0.0
      %929 = vmatprep.subr.mxu0 0.0
      %930 = vmatpush1.msra.mxu0 0.0
      %931 = vmatprep.mubr.f32.mxu0 0.0
      %v932 = vand.u32 %v451, 4294901760
      %933 = vmatmul.mubr.f32.gmra.mrb[0].mxu0 %v932
      %v934 = vpop.f32.mrb[0].mxu0
      %v935 = vadd.f32 %v860, %v934
      %v936 = vpop.f32.mrb[0].mxu0
      %937 = vdwg.mxu0
      %v939 = vsel %vm449, %v442, 0
      %941 = vmatprep.subr.mxu0 0.0
      %v942 = vand.u32 %v225, 4294901760
      %943 = vmatpush1.msra.mxu0 %v942
      %944 = vmatprep.subr.mxu0 0.0
      %v945 = vand.u32 %v226, 4294901760
      %946 = vmatpush1.msra.mxu0 %v945
      %947 = vmatprep.subr.mxu0 0.0
      %v948 = vand.u32 %v227, 4294901760
      %949 = vmatpush1.msra.mxu0 %v948
      %950 = vmatprep.subr.mxu0 0.0
      %v951 = vand.u32 %v228, 4294901760
      %952 = vmatpush1.msra.mxu0 %v951
      %953 = vmatprep.subr.mxu0 0.0
      %954 = vmatpush1.msra.mxu0 0.0
      %955 = vmatprep.subr.mxu0 0.0
      %956 = vmatpush1.msra.mxu0 0.0
      %957 = vmatprep.subr.mxu0 0.0
      %958 = vmatpush1.msra.mxu0 0.0
      %959 = vmatprep.subr.mxu0 0.0
      %960 = vmatpush1.msra.mxu0 0.0
      %961 = vmatprep.subr.mxu0 0.0
      %962 = vmatpush1.msra.mxu0 0.0
      %963 = vmatprep.subr.mxu0 0.0
      %964 = vmatpush1.msra.mxu0 0.0
      %965 = vmatprep.subr.mxu0 0.0
      %966 = vmatpush1.msra.mxu0 0.0
      %967 = vmatprep.subr.mxu0 0.0
      %968 = vmatpush1.msra.mxu0 0.0
      %969 = vmatprep.subr.mxu0 0.0
      %970 = vmatpush1.msra.mxu0 0.0
      %971 = vmatprep.subr.mxu0 0.0
      %972 = vmatpush1.msra.mxu0 0.0
      %973 = vmatprep.subr.mxu0 0.0
      %974 = vmatpush1.msra.mxu0 0.0
      %975 = vmatprep.subr.mxu0 0.0
      %976 = vmatpush1.msra.mxu0 0.0
      %977 = vmatprep.subr.mxu0 0.0
      %978 = vmatpush1.msra.mxu0 0.0
      %979 = vmatprep.subr.mxu0 0.0
      %980 = vmatpush1.msra.mxu0 0.0
      %981 = vmatprep.subr.mxu0 0.0
      %982 = vmatpush1.msra.mxu0 0.0
      %983 = vmatprep.subr.mxu0 0.0
      %984 = vmatpush1.msra.mxu0 0.0
      %985 = vmatprep.subr.mxu0 0.0
      %986 = vmatpush1.msra.mxu0 0.0
      %987 = vmatprep.subr.mxu0 0.0
      %988 = vmatpush1.msra.mxu0 0.0
      %989 = vmatprep.subr.mxu0 0.0
      %990 = vmatpush1.msra.mxu0 0.0
      %991 = vmatprep.subr.mxu0 0.0
      %992 = vmatpush1.msra.mxu0 0.0
      %993 = vmatprep.subr.mxu0 0.0
      %994 = vmatpush1.msra.mxu0 0.0
      %995 = vmatprep.subr.mxu0 0.0
      %996 = vmatpush1.msra.mxu0 0.0
      %997 = vmatprep.subr.mxu0 0.0
      %998 = vmatpush1.msra.mxu0 0.0
      %999 = vmatprep.subr.mxu0 0.0
      %1000 = vmatpush1.msra.mxu0 0.0
      %1001 = vmatprep.subr.mxu0 0.0
      %1002 = vmatpush1.msra.mxu0 0.0
      %1003 = vmatprep.subr.mxu0 0.0
      %1004 = vmatpush1.msra.mxu0 0.0
      %1005 = vmatprep.subr.mxu0 0.0
      %1006 = vmatpush1.msra.mxu0 0.0
      %1007 = vmatprep.subr.mxu0 0.0
      %1008 = vmatpush1.msra.mxu0 0.0
      %1009 = vmatprep.mubr.f32.mxu0 0.0
      %v1010 = vand.u32 %v939, 4294901760
      %v1011 = vsub.f32 %v939, %v1010
      %v1012 = vand.u32 %v1011, 4294901760
      %v1013 = vsub.f32 %v1011, %v1012
      %v1014 = vand.u32 %v1013, 4294901760
      %1015 = vmatmul.mubr.f32.gmra.mrb[0].mxu0 %v1014
      %v1016 = vpop.f32.mrb[0].mxu0
      %v1017 = vadd.f32 0.0, %v1016
      %v1018 = vpop.f32.mrb[0].mxu0
      %1019 = vdwg.mxu0
      %1020 = vmatprep.subr.mxu0 0.0
      %v1021 = vand.u32 %v225, 4294901760
      %v1022 = vsub.f32 %v225, %v1021
      %v1023 = vand.u32 %v1022, 4294901760
      %v1024 = vsub.f32 %v1022, %v1023
      %v1025 = vand.u32 %v1024, 4294901760
      %1026 = vmatpush1.msra.mxu0 %v1025
      %1027 = vmatprep.subr.mxu0 0.0
      %v1028 = vand.u32 %v226, 4294901760
      %v1029 = vsub.f32 %v226, %v1028
      %v1030 = vand.u32 %v1029, 4294901760
      %v1031 = vsub.f32 %v1029, %v1030
      %v1032 = vand.u32 %v1031, 4294901760
      %1033 = vmatpush1.msra.mxu0 %v1032
      %1034 = vmatprep.subr.mxu0 0.0
      %v1035 = vand.u32 %v227, 4294901760
      %v1036 = vsub.f32 %v227, %v1035
      %v1037 = vand.u32 %v1036, 4294901760
      %v1038 = vsub.f32 %v1036, %v1037
      %v1039 = vand.u32 %v1038, 4294901760
      %1040 = vmatpush1.msra.mxu0 %v1039
      %1041 = vmatprep.subr.mxu0 0.0
      %v1042 = vand.u32 %v228, 4294901760
      %v1043 = vsub.f32 %v228, %v1042
      %v1044 = vand.u32 %v1043, 4294901760
      %v1045 = vsub.f32 %v1043, %v1044
      %v1046 = vand.u32 %v1045, 4294901760
      %1047 = vmatpush1.msra.mxu0 %v1046
      %1048 = vmatprep.subr.mxu0 0.0
      %1049 = vmatpush1.msra.mxu0 0.0
      %1050 = vmatprep.subr.mxu0 0.0
      %1051 = vmatpush1.msra.mxu0 0.0
      %1052 = vmatprep.subr.mxu0 0.0
      %1053 = vmatpush1.msra.mxu0 0.0
      %1054 = vmatprep.subr.mxu0 0.0
      %1055 = vmatpush1.msra.mxu0 0.0
      %1056 = vmatprep.subr.mxu0 0.0
      %1057 = vmatpush1.msra.mxu0 0.0
      %1058 = vmatprep.subr.mxu0 0.0
      %1059 = vmatpush1.msra.mxu0 0.0
      %1060 = vmatprep.subr.mxu0 0.0
      %1061 = vmatpush1.msra.mxu0 0.0
      %1062 = vmatprep.subr.mxu0 0.0
      %1063 = vmatpush1.msra.mxu0 0.0
      %1064 = vmatprep.subr.mxu0 0.0
      %1065 = vmatpush1.msra.mxu0 0.0
      %1066 = vmatprep.subr.mxu0 0.0
      %1067 = vmatpush1.msra.mxu0 0.0
      %1068 = vmatprep.subr.mxu0 0.0
      %1069 = vmatpush1.msra.mxu0 0.0
      %1070 = vmatprep.subr.mxu0 0.0
      %1071 = vmatpush1.msra.mxu0 0.0
      %1072 = vmatprep.subr.mxu0 0.0
      %1073 = vmatpush1.msra.mxu0 0.0
      %1074 = vmatprep.subr.mxu0 0.0
      %1075 = vmatpush1.msra.mxu0 0.0
      %1076 = vmatprep.subr.mxu0 0.0
      %1077 = vmatpush1.msra.mxu0 0.0
      %1078 = vmatprep.subr.mxu0 0.0
      %1079 = vmatpush1.msra.mxu0 0.0
      %1080 = vmatprep.subr.mxu0 0.0
      %1081 = vmatpush1.msra.mxu0 0.0
      %1082 = vmatprep.subr.mxu0 0.0
      %1083 = vmatpush1.msra.mxu0 0.0
      %1084 = vmatprep.subr.mxu0 0.0
      %1085 = vmatpush1.msra.mxu0 0.0
      %1086 = vmatprep.subr.mxu0 0.0
      %1087 = vmatpush1.msra.mxu0 0.0
      %1088 = vmatprep.subr.mxu0 0.0
      %1089 = vmatpush1.msra.mxu0 0.0
      %1090 = vmatprep.subr.mxu0 0.0
      %1091 = vmatpush1.msra.mxu0 0.0
      %1092 = vmatprep.subr.mxu0 0.0
      %1093 = vmatpush1.msra.mxu0 0.0
      %1094 = vmatprep.subr.mxu0 0.0
      %1095 = vmatpush1.msra.mxu0 0.0
      %1096 = vmatprep.subr.mxu0 0.0
      %1097 = vmatpush1.msra.mxu0 0.0
      %1098 = vmatprep.subr.mxu0 0.0
      %1099 = vmatpush1.msra.mxu0 0.0
      %1100 = vmatprep.subr.mxu0 0.0
      %1101 = vmatpush1.msra.mxu0 0.0
      %1102 = vmatprep.subr.mxu0 0.0
      %1103 = vmatpush1.msra.mxu0 0.0
      %1104 = vmatprep.mubr.f32.mxu0 0.0
      %v1105 = vand.u32 %v939, 4294901760
      %1106 = vmatmul.mubr.f32.gmra.mrb[0].mxu0 %v1105
      %v1107 = vpop.f32.mrb[0].mxu0
      %v1108 = vadd.f32 %v1017, %v1107
      %v1109 = vpop.f32.mrb[0].mxu0
      %1110 = vdwg.mxu0
      %1111 = vmatprep.subr.mxu0 0.0
      %v1112 = vand.u32 %v225, 4294901760
      %v1113 = vsub.f32 %v225, %v1112
      %1114 = vmatpush1.msra.mxu0 %v1113
      %1115 = vmatprep.subr.mxu0 0.0
      %v1116 = vand.u32 %v226, 4294901760
      %v1117 = vsub.f32 %v226, %v1116
      %1118 = vmatpush1.msra.mxu0 %v1117
      %1119 = vmatprep.subr.mxu0 0.0
      %v1120 = vand.u32 %v227, 4294901760
      %v1121 = vsub.f32 %v227, %v1120
      %1122 = vmatpush1.msra.mxu0 %v1121
      %1123 = vmatprep.subr.mxu0 0.0
      %v1124 = vand.u32 %v228, 4294901760
      %v1125 = vsub.f32 %v228, %v1124
      %1126 = vmatpush1.msra.mxu0 %v1125
      %1127 = vmatprep.subr.mxu0 0.0
      %1128 = vmatpush1.msra.mxu0 0.0
      %1129 = vmatprep.subr.mxu0 0.0
      %1130 = vmatpush1.msra.mxu0 0.0
      %1131 = vmatprep.subr.mxu0 0.0
      %1132 = vmatpush1.msra.mxu0 0.0
      %1133 = vmatprep.subr.mxu0 0.0
      %1134 = vmatpush1.msra.mxu0 0.0
      %1135 = vmatprep.subr.mxu0 0.0
      %1136 = vmatpush1.msra.mxu0 0.0
      %1137 = vmatprep.subr.mxu0 0.0
      %1138 = vmatpush1.msra.mxu0 0.0
      %1139 = vmatprep.subr.mxu0 0.0
      %1140 = vmatpush1.msra.mxu0 0.0
      %1141 = vmatprep.subr.mxu0 0.0
      %1142 = vmatpush1.msra.mxu0 0.0
      %1143 = vmatprep.subr.mxu0 0.0
      %1144 = vmatpush1.msra.mxu0 0.0
      %1145 = vmatprep.subr.mxu0 0.0
      %1146 = vmatpush1.msra.mxu0 0.0
      %1147 = vmatprep.subr.mxu0 0.0
      %1148 = vmatpush1.msra.mxu0 0.0
      %1149 = vmatprep.subr.mxu0 0.0
      %1150 = vmatpush1.msra.mxu0 0.0
      %1151 = vmatprep.subr.mxu0 0.0
      %1152 = vmatpush1.msra.mxu0 0.0
      %1153 = vmatprep.subr.mxu0 0.0
      %1154 = vmatpush1.msra.mxu0 0.0
      %1155 = vmatprep.subr.mxu0 0.0
      %1156 = vmatpush1.msra.mxu0 0.0
      %1157 = vmatprep.subr.mxu0 0.0
      %1158 = vmatpush1.msra.mxu0 0.0
      %1159 = vmatprep.subr.mxu0 0.0
      %1160 = vmatpush1.msra.mxu0 0.0
      %1161 = vmatprep.subr.mxu0 0.0
      %1162 = vmatpush1.msra.mxu0 0.0
      %1163 = vmatprep.subr.mxu0 0.0
      %1164 = vmatpush1.msra.mxu0 0.0
      %1165 = vmatprep.subr.mxu0 0.0
      %1166 = vmatpush1.msra.mxu0 0.0
      %1167 = vmatprep.subr.mxu0 0.0
      %1168 = vmatpush1.msra.mxu0 0.0
      %1169 = vmatprep.subr.mxu0 0.0
      %1170 = vmatpush1.msra.mxu0 0.0
      %1171 = vmatprep.subr.mxu0 0.0
      %1172 = vmatpush1.msra.mxu0 0.0
      %1173 = vmatprep.subr.mxu0 0.0
      %1174 = vmatpush1.msra.mxu0 0.0
      %1175 = vmatprep.subr.mxu0 0.0
      %1176 = vmatpush1.msra.mxu0 0.0
      %1177 = vmatprep.subr.mxu0 0.0
      %1178 = vmatpush1.msra.mxu0 0.0
      %1179 = vmatprep.subr.mxu0 0.0
      %1180 = vmatpush1.msra.mxu0 0.0
      %1181 = vmatprep.subr.mxu0 0.0
      %1182 = vmatpush1.msra.mxu0 0.0
      %1183 = vmatprep.mubr.f32.mxu0 0.0
      %v1184 = vand.u32 %v939, 4294901760
      %v1185 = vsub.f32 %v939, %v1184
      %1186 = vmatmul.mubr.f32.gmra.mrb[0].mxu0 %v1185
      %v1187 = vpop.f32.mrb[0].mxu0
      %v1188 = vadd.f32 %v1108, %v1187
      %v1189 = vpop.f32.mrb[0].mxu0
      %1190 = vdwg.mxu0
      %1191 = vmatprep.subr.mxu0 0.0
      %v1192 = vand.u32 %v225, 4294901760
      %1193 = vmatpush1.msra.mxu0 %v1192
      %1194 = vmatprep.subr.mxu0 0.0
      %v1195 = vand.u32 %v226, 4294901760
      %1196 = vmatpush1.msra.mxu0 %v1195
      %1197 = vmatprep.subr.mxu0 0.0
      %v1198 = vand.u32 %v227, 4294901760
      %1199 = vmatpush1.msra.mxu0 %v1198
      %1200 = vmatprep.subr.mxu0 0.0
      %v1201 = vand.u32 %v228, 4294901760
      %1202 = vmatpush1.msra.mxu0 %v1201
      %1203 = vmatprep.subr.mxu0 0.0
      %1204 = vmatpush1.msra.mxu0 0.0
      %1205 = vmatprep.subr.mxu0 0.0
      %1206 = vmatpush1.msra.mxu0 0.0
      %1207 = vmatprep.subr.mxu0 0.0
      %1208 = vmatpush1.msra.mxu0 0.0
      %1209 = vmatprep.subr.mxu0 0.0
      %1210 = vmatpush1.msra.mxu0 0.0
      %1211 = vmatprep.subr.mxu0 0.0
      %1212 = vmatpush1.msra.mxu0 0.0
      %1213 = vmatprep.subr.mxu0 0.0
      %1214 = vmatpush1.msra.mxu0 0.0
      %1215 = vmatprep.subr.mxu0 0.0
      %1216 = vmatpush1.msra.mxu0 0.0
      %1217 = vmatprep.subr.mxu0 0.0
      %1218 = vmatpush1.msra.mxu0 0.0
      %1219 = vmatprep.subr.mxu0 0.0
      %1220 = vmatpush1.msra.mxu0 0.0
      %1221 = vmatprep.subr.mxu0 0.0
      %1222 = vmatpush1.msra.mxu0 0.0
      %1223 = vmatprep.subr.mxu0 0.0
      %1224 = vmatpush1.msra.mxu0 0.0
      %1225 = vmatprep.subr.mxu0 0.0
      %1226 = vmatpush1.msra.mxu0 0.0
      %1227 = vmatprep.subr.mxu0 0.0
      %1228 = vmatpush1.msra.mxu0 0.0
      %1229 = vmatprep.subr.mxu0 0.0
      %1230 = vmatpush1.msra.mxu0 0.0
      %1231 = vmatprep.subr.mxu0 0.0
      %1232 = vmatpush1.msra.mxu0 0.0
      %1233 = vmatprep.subr.mxu0 0.0
      %1234 = vmatpush1.msra.mxu0 0.0
      %1235 = vmatprep.subr.mxu0 0.0
      %1236 = vmatpush1.msra.mxu0 0.0
      %1237 = vmatprep.subr.mxu0 0.0
      %1238 = vmatpush1.msra.mxu0 0.0
      %1239 = vmatprep.subr.mxu0 0.0
      %1240 = vmatpush1.msra.mxu0 0.0
      %1241 = vmatprep.subr.mxu0 0.0
      %1242 = vmatpush1.msra.mxu0 0.0
      %1243 = vmatprep.subr.mxu0 0.0
      %1244 = vmatpush1.msra.mxu0 0.0
      %1245 = vmatprep.subr.mxu0 0.0
      %1246 = vmatpush1.msra.mxu0 0.0
      %1247 = vmatprep.subr.mxu0 0.0
      %1248 = vmatpush1.msra.mxu0 0.0
      %1249 = vmatprep.subr.mxu0 0.0
      %1250 = vmatpush1.msra.mxu0 0.0
      %1251 = vmatprep.subr.mxu0 0.0
      %1252 = vmatpush1.msra.mxu0 0.0
      %1253 = vmatprep.subr.mxu0 0.0
      %1254 = vmatpush1.msra.mxu0 0.0
      %1255 = vmatprep.subr.mxu0 0.0
      %1256 = vmatpush1.msra.mxu0 0.0
      %1257 = vmatprep.subr.mxu0 0.0
      %1258 = vmatpush1.msra.mxu0 0.0
      %1259 = vmatprep.mubr.f32.mxu0 0.0
      %v1260 = vand.u32 %v939, 4294901760
      %v1261 = vsub.f32 %v939, %v1260
      %v1262 = vand.u32 %v1261, 4294901760
      %1263 = vmatmul.mubr.f32.gmra.mrb[0].mxu0 %v1262
      %v1264 = vpop.f32.mrb[0].mxu0
      %v1265 = vadd.f32 %v1188, %v1264
      %v1266 = vpop.f32.mrb[0].mxu0
      %1267 = vdwg.mxu0
      %1268 = vmatprep.subr.mxu0 0.0
      %v1269 = vand.u32 %v225, 4294901760
      %v1270 = vsub.f32 %v225, %v1269
      %v1271 = vand.u32 %v1270, 4294901760
      %1272 = vmatpush1.msra.mxu0 %v1271
      %1273 = vmatprep.subr.mxu0 0.0
      %v1274 = vand.u32 %v226, 4294901760
      %v1275 = vsub.f32 %v226, %v1274
      %v1276 = vand.u32 %v1275, 4294901760
      %1277 = vmatpush1.msra.mxu0 %v1276
      %1278 = vmatprep.subr.mxu0 0.0
      %v1279 = vand.u32 %v227, 4294901760
      %v1280 = vsub.f32 %v227, %v1279
      %v1281 = vand.u32 %v1280, 4294901760
      %1282 = vmatpush1.msra.mxu0 %v1281
      %1283 = vmatprep.subr.mxu0 0.0
      %v1284 = vand.u32 %v228, 4294901760
      %v1285 = vsub.f32 %v228, %v1284
      %v1286 = vand.u32 %v1285, 4294901760
      %1287 = vmatpush1.msra.mxu0 %v1286
      %1288 = vmatprep.subr.mxu0 0.0
      %1289 = vmatpush1.msra.mxu0 0.0
      %1290 = vmatprep.subr.mxu0 0.0
      %1291 = vmatpush1.msra.mxu0 0.0
      %1292 = vmatprep.subr.mxu0 0.0
      %1293 = vmatpush1.msra.mxu0 0.0
      %1294 = vmatprep.subr.mxu0 0.0
      %1295 = vmatpush1.msra.mxu0 0.0
      %1296 = vmatprep.subr.mxu0 0.0
      %1297 = vmatpush1.msra.mxu0 0.0
      %1298 = vmatprep.subr.mxu0 0.0
      %1299 = vmatpush1.msra.mxu0 0.0
      %1300 = vmatprep.subr.mxu0 0.0
      %1301 = vmatpush1.msra.mxu0 0.0
      %1302 = vmatprep.subr.mxu0 0.0
      %1303 = vmatpush1.msra.mxu0 0.0
      %1304 = vmatprep.subr.mxu0 0.0
      %1305 = vmatpush1.msra.mxu0 0.0
      %1306 = vmatprep.subr.mxu0 0.0
      %1307 = vmatpush1.msra.mxu0 0.0
      %1308 = vmatprep.subr.mxu0 0.0
      %1309 = vmatpush1.msra.mxu0 0.0
      %1310 = vmatprep.subr.mxu0 0.0
      %1311 = vmatpush1.msra.mxu0 0.0
      %1312 = vmatprep.subr.mxu0 0.0
      %1313 = vmatpush1.msra.mxu0 0.0
      %1314 = vmatprep.subr.mxu0 0.0
      %1315 = vmatpush1.msra.mxu0 0.0
      %1316 = vmatprep.subr.mxu0 0.0
      %1317 = vmatpush1.msra.mxu0 0.0
      %1318 = vmatprep.subr.mxu0 0.0
      %1319 = vmatpush1.msra.mxu0 0.0
      %1320 = vmatprep.subr.mxu0 0.0
      %1321 = vmatpush1.msra.mxu0 0.0
      %1322 = vmatprep.subr.mxu0 0.0
      %1323 = vmatpush1.msra.mxu0 0.0
      %1324 = vmatprep.subr.mxu0 0.0
      %1325 = vmatpush1.msra.mxu0 0.0
      %1326 = vmatprep.subr.mxu0 0.0
      %1327 = vmatpush1.msra.mxu0 0.0
      %1328 = vmatprep.subr.mxu0 0.0
      %1329 = vmatpush1.msra.mxu0 0.0
      %1330 = vmatprep.subr.mxu0 0.0
      %1331 = vmatpush1.msra.mxu0 0.0
      %1332 = vmatprep.subr.mxu0 0.0
      %1333 = vmatpush1.msra.mxu0 0.0
      %1334 = vmatprep.subr.mxu0 0.0
      %1335 = vmatpush1.msra.mxu0 0.0
      %1336 = vmatprep.subr.mxu0 0.0
      %1337 = vmatpush1.msra.mxu0 0.0
      %1338 = vmatprep.subr.mxu0 0.0
      %1339 = vmatpush1.msra.mxu0 0.0
      %1340 = vmatprep.subr.mxu0 0.0
      %1341 = vmatpush1.msra.mxu0 0.0
      %1342 = vmatprep.subr.mxu0 0.0
      %1343 = vmatpush1.msra.mxu0 0.0
      %1344 = vmatprep.mubr.f32.mxu0 0.0
      %v1345 = vand.u32 %v939, 4294901760
      %1346 = vmatmul.mubr.f32.gmra.mrb[0].mxu0 %v1345
      %v1347 = vpop.f32.mrb[0].mxu0
      %v1348 = vadd.f32 %v1265, %v1347
      %v1349 = vpop.f32.mrb[0].mxu0
      %1350 = vdwg.mxu0
      %1351 = vmatprep.subr.mxu0 0.0
      %v1352 = vand.u32 %v225, 4294901760
      %1353 = vmatpush1.msra.mxu0 %v1352
      %1354 = vmatprep.subr.mxu0 0.0
      %v1355 = vand.u32 %v226, 4294901760
      %1356 = vmatpush1.msra.mxu0 %v1355
      %1357 = vmatprep.subr.mxu0 0.0
      %v1358 = vand.u32 %v227, 4294901760
      %1359 = vmatpush1.msra.mxu0 %v1358
      %1360 = vmatprep.subr.mxu0 0.0
      %v1361 = vand.u32 %v228, 4294901760
      %1362 = vmatpush1.msra.mxu0 %v1361
      %1363 = vmatprep.subr.mxu0 0.0
      %1364 = vmatpush1.msra.mxu0 0.0
      %1365 = vmatprep.subr.mxu0 0.0
      %1366 = vmatpush1.msra.mxu0 0.0
      %1367 = vmatprep.subr.mxu0 0.0
      %1368 = vmatpush1.msra.mxu0 0.0
      %1369 = vmatprep.subr.mxu0 0.0
      %1370 = vmatpush1.msra.mxu0 0.0
      %1371 = vmatprep.subr.mxu0 0.0
      %1372 = vmatpush1.msra.mxu0 0.0
      %1373 = vmatprep.subr.mxu0 0.0
      %1374 = vmatpush1.msra.mxu0 0.0
      %1375 = vmatprep.subr.mxu0 0.0
      %1376 = vmatpush1.msra.mxu0 0.0
      %1377 = vmatprep.subr.mxu0 0.0
      %1378 = vmatpush1.msra.mxu0 0.0
      %1379 = vmatprep.subr.mxu0 0.0
      %1380 = vmatpush1.msra.mxu0 0.0
      %1381 = vmatprep.subr.mxu0 0.0
      %1382 = vmatpush1.msra.mxu0 0.0
      %1383 = vmatprep.subr.mxu0 0.0
      %1384 = vmatpush1.msra.mxu0 0.0
      %1385 = vmatprep.subr.mxu0 0.0
      %1386 = vmatpush1.msra.mxu0 0.0
      %1387 = vmatprep.subr.mxu0 0.0
      %1388 = vmatpush1.msra.mxu0 0.0
      %1389 = vmatprep.subr.mxu0 0.0
      %1390 = vmatpush1.msra.mxu0 0.0
      %1391 = vmatprep.subr.mxu0 0.0
      %1392 = vmatpush1.msra.mxu0 0.0
      %1393 = vmatprep.subr.mxu0 0.0
      %1394 = vmatpush1.msra.mxu0 0.0
      %1395 = vmatprep.subr.mxu0 0.0
      %1396 = vmatpush1.msra.mxu0 0.0
      %1397 = vmatprep.subr.mxu0 0.0
      %1398 = vmatpush1.msra.mxu0 0.0
      %1399 = vmatprep.subr.mxu0 0.0
      %1400 = vmatpush1.msra.mxu0 0.0
      %1401 = vmatprep.subr.mxu0 0.0
      %1402 = vmatpush1.msra.mxu0 0.0
      %1403 = vmatprep.subr.mxu0 0.0
      %1404 = vmatpush1.msra.mxu0 0.0
      %1405 = vmatprep.subr.mxu0 0.0
      %1406 = vmatpush1.msra.mxu0 0.0
      %1407 = vmatprep.subr.mxu0 0.0
      %1408 = vmatpush1.msra.mxu0 0.0
      %1409 = vmatprep.subr.mxu0 0.0
      %1410 = vmatpush1.msra.mxu0 0.0
      %1411 = vmatprep.subr.mxu0 0.0
      %1412 = vmatpush1.msra.mxu0 0.0
      %1413 = vmatprep.subr.mxu0 0.0
      %1414 = vmatpush1.msra.mxu0 0.0
      %1415 = vmatprep.subr.mxu0 0.0
      %1416 = vmatpush1.msra.mxu0 0.0
      %1417 = vmatprep.subr.mxu0 0.0
      %1418 = vmatpush1.msra.mxu0 0.0
      %1419 = vmatprep.mubr.f32.mxu0 0.0
      %v1420 = vand.u32 %v939, 4294901760
      %1421 = vmatmul.mubr.f32.gmra.mrb[0].mxu0 %v1420
      %v1422 = vpop.f32.mrb[0].mxu0
      %v1423 = vadd.f32 %v1348, %v1422
      %v1424 = vpop.f32.mrb[0].mxu0
      %1425 = vdwg.mxu0
      %v1427 = vsel %vm449, %v443, 0
      %1429 = vmatprep.subr.mxu0 0.0
      %v1430 = vand.u32 %v229, 4294901760
      %1431 = vmatpush1.msra.mxu0 %v1430
      %1432 = vmatprep.subr.mxu0 0.0
      %v1433 = vand.u32 %v230, 4294901760
      %1434 = vmatpush1.msra.mxu0 %v1433
      %1435 = vmatprep.subr.mxu0 0.0
      %v1436 = vand.u32 %v231, 4294901760
      %1437 = vmatpush1.msra.mxu0 %v1436
      %1438 = vmatprep.subr.mxu0 0.0
      %v1439 = vand.u32 %v232, 4294901760
      %1440 = vmatpush1.msra.mxu0 %v1439
      %1441 = vmatprep.subr.mxu0 0.0
      %1442 = vmatpush1.msra.mxu0 0.0
      %1443 = vmatprep.subr.mxu0 0.0
      %1444 = vmatpush1.msra.mxu0 0.0
      %1445 = vmatprep.subr.mxu0 0.0
      %1446 = vmatpush1.msra.mxu0 0.0
      %1447 = vmatprep.subr.mxu0 0.0
      %1448 = vmatpush1.msra.mxu0 0.0
      %1449 = vmatprep.subr.mxu0 0.0
      %1450 = vmatpush1.msra.mxu0 0.0
      %1451 = vmatprep.subr.mxu0 0.0
      %1452 = vmatpush1.msra.mxu0 0.0
      %1453 = vmatprep.subr.mxu0 0.0
      %1454 = vmatpush1.msra.mxu0 0.0
      %1455 = vmatprep.subr.mxu0 0.0
      %1456 = vmatpush1.msra.mxu0 0.0
      %1457 = vmatprep.subr.mxu0 0.0
      %1458 = vmatpush1.msra.mxu0 0.0
      %1459 = vmatprep.subr.mxu0 0.0
      %1460 = vmatpush1.msra.mxu0 0.0
      %1461 = vmatprep.subr.mxu0 0.0
      %1462 = vmatpush1.msra.mxu0 0.0
      %1463 = vmatprep.subr.mxu0 0.0
      %1464 = vmatpush1.msra.mxu0 0.0
      %1465 = vmatprep.subr.mxu0 0.0
      %1466 = vmatpush1.msra.mxu0 0.0
      %1467 = vmatprep.subr.mxu0 0.0
      %1468 = vmatpush1.msra.mxu0 0.0
      %1469 = vmatprep.subr.mxu0 0.0
      %1470 = vmatpush1.msra.mxu0 0.0
      %1471 = vmatprep.subr.mxu0 0.0
      %1472 = vmatpush1.msra.mxu0 0.0
      %1473 = vmatprep.subr.mxu0 0.0
      %1474 = vmatpush1.msra.mxu0 0.0
      %1475 = vmatprep.subr.mxu0 0.0
      %1476 = vmatpush1.msra.mxu0 0.0
      %1477 = vmatprep.subr.mxu0 0.0
      %1478 = vmatpush1.msra.mxu0 0.0
      %1479 = vmatprep.subr.mxu0 0.0
      %1480 = vmatpush1.msra.mxu0 0.0
      %1481 = vmatprep.subr.mxu0 0.0
      %1482 = vmatpush1.msra.mxu0 0.0
      %1483 = vmatprep.subr.mxu0 0.0
      %1484 = vmatpush1.msra.mxu0 0.0
      %1485 = vmatprep.subr.mxu0 0.0
      %1486 = vmatpush1.msra.mxu0 0.0
      %1487 = vmatprep.subr.mxu0 0.0
      %1488 = vmatpush1.msra.mxu0 0.0
      %1489 = vmatprep.subr.mxu0 0.0
      %1490 = vmatpush1.msra.mxu0 0.0
      %1491 = vmatprep.subr.mxu0 0.0
      %1492 = vmatpush1.msra.mxu0 0.0
      %1493 = vmatprep.subr.mxu0 0.0
      %1494 = vmatpush1.msra.mxu0 0.0
      %1495 = vmatprep.subr.mxu0 0.0
      %1496 = vmatpush1.msra.mxu0 0.0
      %1497 = vmatprep.mubr.f32.mxu0 0.0
      %v1498 = vand.u32 %v1427, 4294901760
      %v1499 = vsub.f32 %v1427, %v1498
      %v1500 = vand.u32 %v1499, 4294901760
      %v1501 = vsub.f32 %v1499, %v1500
      %v1502 = vand.u32 %v1501, 4294901760
      %1503 = vmatmul.mubr.f32.gmra.mrb[0].mxu0 %v1502
      %v1504 = vpop.f32.mrb[0].mxu0
      %v1505 = vadd.f32 0.0, %v1504
      %v1506 = vpop.f32.mrb[0].mxu0
      %1507 = vdwg.mxu0
      %1508 = vmatprep.subr.mxu0 0.0
      %v1509 = vand.u32 %v229, 4294901760
      %v1510 = vsub.f32 %v229, %v1509
      %v1511 = vand.u32 %v1510, 4294901760
      %v1512 = vsub.f32 %v1510, %v1511
      %v1513 = vand.u32 %v1512, 4294901760
      %1514 = vmatpush1.msra.mxu0 %v1513
      %1515 = vmatprep.subr.mxu0 0.0
      %v1516 = vand.u32 %v230, 4294901760
      %v1517 = vsub.f32 %v230, %v1516
      %v1518 = vand.u32 %v1517, 4294901760
      %v1519 = vsub.f32 %v1517, %v1518
      %v1520 = vand.u32 %v1519, 4294901760
      %1521 = vmatpush1.msra.mxu0 %v1520
      %1522 = vmatprep.subr.mxu0 0.0
      %v1523 = vand.u32 %v231, 4294901760
      %v1524 = vsub.f32 %v231, %v1523
      %v1525 = vand.u32 %v1524, 4294901760
      %v1526 = vsub.f32 %v1524, %v1525
      %v1527 = vand.u32 %v1526, 4294901760
      %1528 = vmatpush1.msra.mxu0 %v1527
      %1529 = vmatprep.subr.mxu0 0.0
      %v1530 = vand.u32 %v232, 4294901760
      %v1531 = vsub.f32 %v232, %v1530
      %v1532 = vand.u32 %v1531, 4294901760
      %v1533 = vsub.f32 %v1531, %v1532
      %v1534 = vand.u32 %v1533, 4294901760
      %1535 = vmatpush1.msra.mxu0 %v1534
      %1536 = vmatprep.subr.mxu0 0.0
      %1537 = vmatpush1.msra.mxu0 0.0
      %1538 = vmatprep.subr.mxu0 0.0
      %1539 = vmatpush1.msra.mxu0 0.0
      %1540 = vmatprep.subr.mxu0 0.0
      %1541 = vmatpush1.msra.mxu0 0.0
      %1542 = vmatprep.subr.mxu0 0.0
      %1543 = vmatpush1.msra.mxu0 0.0
      %1544 = vmatprep.subr.mxu0 0.0
      %1545 = vmatpush1.msra.mxu0 0.0
      %1546 = vmatprep.subr.mxu0 0.0
      %1547 = vmatpush1.msra.mxu0 0.0
      %1548 = vmatprep.subr.mxu0 0.0
      %1549 = vmatpush1.msra.mxu0 0.0
      %1550 = vmatprep.subr.mxu0 0.0
      %1551 = vmatpush1.msra.mxu0 0.0
      %1552 = vmatprep.subr.mxu0 0.0
      %1553 = vmatpush1.msra.mxu0 0.0
      %1554 = vmatprep.subr.mxu0 0.0
      %1555 = vmatpush1.msra.mxu0 0.0
      %1556 = vmatprep.subr.mxu0 0.0
      %1557 = vmatpush1.msra.mxu0 0.0
      %1558 = vmatprep.subr.mxu0 0.0
      %1559 = vmatpush1.msra.mxu0 0.0
      %1560 = vmatprep.subr.mxu0 0.0
      %1561 = vmatpush1.msra.mxu0 0.0
      %1562 = vmatprep.subr.mxu0 0.0
      %1563 = vmatpush1.msra.mxu0 0.0
      %1564 = vmatprep.subr.mxu0 0.0
      %1565 = vmatpush1.msra.mxu0 0.0
      %1566 = vmatprep.subr.mxu0 0.0
      %1567 = vmatpush1.msra.mxu0 0.0
      %1568 = vmatprep.subr.mxu0 0.0
      %1569 = vmatpush1.msra.mxu0 0.0
      %1570 = vmatprep.subr.mxu0 0.0
      %1571 = vmatpush1.msra.mxu0 0.0
      %1572 = vmatprep.subr.mxu0 0.0
      %1573 = vmatpush1.msra.mxu0 0.0
      %1574 = vmatprep.subr.mxu0 0.0
      %1575 = vmatpush1.msra.mxu0 0.0
      %1576 = vmatprep.subr.mxu0 0.0
      %1577 = vmatpush1.msra.mxu0 0.0
      %1578 = vmatprep.subr.mxu0 0.0
      %1579 = vmatpush1.msra.mxu0 0.0
      %1580 = vmatprep.subr.mxu0 0.0
      %1581 = vmatpush1.msra.mxu0 0.0
      %1582 = vmatprep.subr.mxu0 0.0
      %1583 = vmatpush1.msra.mxu0 0.0
      %1584 = vmatprep.subr.mxu0 0.0
      %1585 = vmatpush1.msra.mxu0 0.0
      %1586 = vmatprep.subr.mxu0 0.0
      %1587 = vmatpush1.msra.mxu0 0.0
      %1588 = vmatprep.subr.mxu0 0.0
      %1589 = vmatpush1.msra.mxu0 0.0
      %1590 = vmatprep.subr.mxu0 0.0
      %1591 = vmatpush1.msra.mxu0 0.0
      %1592 = vmatprep.mubr.f32.mxu0 0.0
      %v1593 = vand.u32 %v1427, 4294901760
      %1594 = vmatmul.mubr.f32.gmra.mrb[0].mxu0 %v1593
      %v1595 = vpop.f32.mrb[0].mxu0
      %v1596 = vadd.f32 %v1505, %v1595
      %v1597 = vpop.f32.mrb[0].mxu0
      %1598 = vdwg.mxu0
      %1599 = vmatprep.subr.mxu0 0.0
      %v1600 = vand.u32 %v229, 4294901760
      %v1601 = vsub.f32 %v229, %v1600
      %1602 = vmatpush1.msra.mxu0 %v1601
      %1603 = vmatprep.subr.mxu0 0.0
      %v1604 = vand.u32 %v230, 4294901760
      %v1605 = vsub.f32 %v230, %v1604
      %1606 = vmatpush1.msra.mxu0 %v1605
      %1607 = vmatprep.subr.mxu0 0.0
      %v1608 = vand.u32 %v231, 4294901760
      %v1609 = vsub.f32 %v231, %v1608
      %1610 = vmatpush1.msra.mxu0 %v1609
      %1611 = vmatprep.subr.mxu0 0.0
      %v1612 = vand.u32 %v232, 4294901760
      %v1613 = vsub.f32 %v232, %v1612
      %1614 = vmatpush1.msra.mxu0 %v1613
      %1615 = vmatprep.subr.mxu0 0.0
      %1616 = vmatpush1.msra.mxu0 0.0
      %1617 = vmatprep.subr.mxu0 0.0
      %1618 = vmatpush1.msra.mxu0 0.0
      %1619 = vmatprep.subr.mxu0 0.0
      %1620 = vmatpush1.msra.mxu0 0.0
      %1621 = vmatprep.subr.mxu0 0.0
      %1622 = vmatpush1.msra.mxu0 0.0
      %1623 = vmatprep.subr.mxu0 0.0
      %1624 = vmatpush1.msra.mxu0 0.0
      %1625 = vmatprep.subr.mxu0 0.0
      %1626 = vmatpush1.msra.mxu0 0.0
      %1627 = vmatprep.subr.mxu0 0.0
      %1628 = vmatpush1.msra.mxu0 0.0
      %1629 = vmatprep.subr.mxu0 0.0
      %1630 = vmatpush1.msra.mxu0 0.0
      %1631 = vmatprep.subr.mxu0 0.0
      %1632 = vmatpush1.msra.mxu0 0.0
      %1633 = vmatprep.subr.mxu0 0.0
      %1634 = vmatpush1.msra.mxu0 0.0
      %1635 = vmatprep.subr.mxu0 0.0
      %1636 = vmatpush1.msra.mxu0 0.0
      %1637 = vmatprep.subr.mxu0 0.0
      %1638 = vmatpush1.msra.mxu0 0.0
      %1639 = vmatprep.subr.mxu0 0.0
      %1640 = vmatpush1.msra.mxu0 0.0
      %1641 = vmatprep.subr.mxu0 0.0
      %1642 = vmatpush1.msra.mxu0 0.0
      %1643 = vmatprep.subr.mxu0 0.0
      %1644 = vmatpush1.msra.mxu0 0.0
      %1645 = vmatprep.subr.mxu0 0.0
      %1646 = vmatpush1.msra.mxu0 0.0
      %1647 = vmatprep.subr.mxu0 0.0
      %1648 = vmatpush1.msra.mxu0 0.0
      %1649 = vmatprep.subr.mxu0 0.0
      %1650 = vmatpush1.msra.mxu0 0.0
      %1651 = vmatprep.subr.mxu0 0.0
      %1652 = vmatpush1.msra.mxu0 0.0
      %1653 = vmatprep.subr.mxu0 0.0
      %1654 = vmatpush1.msra.mxu0 0.0
      %1655 = vmatprep.subr.mxu0 0.0
      %1656 = vmatpush1.msra.mxu0 0.0
      %1657 = vmatprep.subr.mxu0 0.0
      %1658 = vmatpush1.msra.mxu0 0.0
      %1659 = vmatprep.subr.mxu0 0.0
      %1660 = vmatpush1.msra.mxu0 0.0
      %1661 = vmatprep.subr.mxu0 0.0
      %1662 = vmatpush1.msra.mxu0 0.0
      %1663 = vmatprep.subr.mxu0 0.0
      %1664 = vmatpush1.msra.mxu0 0.0
      %1665 = vmatprep.subr.mxu0 0.0
      %1666 = vmatpush1.msra.mxu0 0.0
      %1667 = vmatprep.subr.mxu0 0.0
      %1668 = vmatpush1.msra.mxu0 0.0
      %1669 = vmatprep.subr.mxu0 0.0
      %1670 = vmatpush1.msra.mxu0 0.0
      %1671 = vmatprep.mubr.f32.mxu0 0.0
      %v1672 = vand.u32 %v1427, 4294901760
      %v1673 = vsub.f32 %v1427, %v1672
      %1674 = vmatmul.mubr.f32.gmra.mrb[0].mxu0 %v1673
      %v1675 = vpop.f32.mrb[0].mxu0
      %v1676 = vadd.f32 %v1596, %v1675
      %v1677 = vpop.f32.mrb[0].mxu0
      %1678 = vdwg.mxu0
      %1679 = vmatprep.subr.mxu0 0.0
      %v1680 = vand.u32 %v229, 4294901760
      %1681 = vmatpush1.msra.mxu0 %v1680
      %1682 = vmatprep.subr.mxu0 0.0
      %v1683 = vand.u32 %v230, 4294901760
      %1684 = vmatpush1.msra.mxu0 %v1683
      %1685 = vmatprep.subr.mxu0 0.0
      %v1686 = vand.u32 %v231, 4294901760
      %1687 = vmatpush1.msra.mxu0 %v1686
      %1688 = vmatprep.subr.mxu0 0.0
      %v1689 = vand.u32 %v232, 4294901760
      %1690 = vmatpush1.msra.mxu0 %v1689
      %1691 = vmatprep.subr.mxu0 0.0
      %1692 = vmatpush1.msra.mxu0 0.0
      %1693 = vmatprep.subr.mxu0 0.0
      %1694 = vmatpush1.msra.mxu0 0.0
      %1695 = vmatprep.subr.mxu0 0.0
      %1696 = vmatpush1.msra.mxu0 0.0
      %1697 = vmatprep.subr.mxu0 0.0
      %1698 = vmatpush1.msra.mxu0 0.0
      %1699 = vmatprep.subr.mxu0 0.0
      %1700 = vmatpush1.msra.mxu0 0.0
      %1701 = vmatprep.subr.mxu0 0.0
      %1702 = vmatpush1.msra.mxu0 0.0
      %1703 = vmatprep.subr.mxu0 0.0
      %1704 = vmatpush1.msra.mxu0 0.0
      %1705 = vmatprep.subr.mxu0 0.0
      %1706 = vmatpush1.msra.mxu0 0.0
      %1707 = vmatprep.subr.mxu0 0.0
      %1708 = vmatpush1.msra.mxu0 0.0
      %1709 = vmatprep.subr.mxu0 0.0
      %1710 = vmatpush1.msra.mxu0 0.0
      %1711 = vmatprep.subr.mxu0 0.0
      %1712 = vmatpush1.msra.mxu0 0.0
      %1713 = vmatprep.subr.mxu0 0.0
      %1714 = vmatpush1.msra.mxu0 0.0
      %1715 = vmatprep.subr.mxu0 0.0
      %1716 = vmatpush1.msra.mxu0 0.0
      %1717 = vmatprep.subr.mxu0 0.0
      %1718 = vmatpush1.msra.mxu0 0.0
      %1719 = vmatprep.subr.mxu0 0.0
      %1720 = vmatpush1.msra.mxu0 0.0
      %1721 = vmatprep.subr.mxu0 0.0
      %1722 = vmatpush1.msra.mxu0 0.0
      %1723 = vmatprep.subr.mxu0 0.0
      %1724 = vmatpush1.msra.mxu0 0.0
      %1725 = vmatprep.subr.mxu0 0.0
      %1726 = vmatpush1.msra.mxu0 0.0
      %1727 = vmatprep.subr.mxu0 0.0
      %1728 = vmatpush1.msra.mxu0 0.0
      %1729 = vmatprep.subr.mxu0 0.0
      %1730 = vmatpush1.msra.mxu0 0.0
      %1731 = vmatprep.subr.mxu0 0.0
      %1732 = vmatpush1.msra.mxu0 0.0
      %1733 = vmatprep.subr.mxu0 0.0
      %1734 = vmatpush1.msra.mxu0 0.0
      %1735 = vmatprep.subr.mxu0 0.0
      %1736 = vmatpush1.msra.mxu0 0.0
      %1737 = vmatprep.subr.mxu0 0.0
      %1738 = vmatpush1.msra.mxu0 0.0
      %1739 = vmatprep.subr.mxu0 0.0
      %1740 = vmatpush1.msra.mxu0 0.0
      %1741 = vmatprep.subr.mxu0 0.0
      %1742 = vmatpush1.msra.mxu0 0.0
      %1743 = vmatprep.subr.mxu0 0.0
      %1744 = vmatpush1.msra.mxu0 0.0
      %1745 = vmatprep.subr.mxu0 0.0
      %1746 = vmatpush1.msra.mxu0 0.0
      %1747 = vmatprep.mubr.f32.mxu0 0.0
      %v1748 = vand.u32 %v1427, 4294901760
      %v1749 = vsub.f32 %v1427, %v1748
      %v1750 = vand.u32 %v1749, 4294901760
      %1751 = vmatmul.mubr.f32.gmra.mrb[0].mxu0 %v1750
      %v1752 = vpop.f32.mrb[0].mxu0
      %v1753 = vadd.f32 %v1676, %v1752
      %v1754 = vpop.f32.mrb[0].mxu0
      %1755 = vdwg.mxu0
      %1756 = vmatprep.subr.mxu0 0.0
      %v1757 = vand.u32 %v229, 4294901760
      %v1758 = vsub.f32 %v229, %v1757
      %v1759 = vand.u32 %v1758, 4294901760
      %1760 = vmatpush1.msra.mxu0 %v1759
      %1761 = vmatprep.subr.mxu0 0.0
      %v1762 = vand.u32 %v230, 4294901760
      %v1763 = vsub.f32 %v230, %v1762
      %v1764 = vand.u32 %v1763, 4294901760
      %1765 = vmatpush1.msra.mxu0 %v1764
      %1766 = vmatprep.subr.mxu0 0.0
      %v1767 = vand.u32 %v231, 4294901760
      %v1768 = vsub.f32 %v231, %v1767
      %v1769 = vand.u32 %v1768, 4294901760
      %1770 = vmatpush1.msra.mxu0 %v1769
      %1771 = vmatprep.subr.mxu0 0.0
      %v1772 = vand.u32 %v232, 4294901760
      %v1773 = vsub.f32 %v232, %v1772
      %v1774 = vand.u32 %v1773, 4294901760
      %1775 = vmatpush1.msra.mxu0 %v1774
      %1776 = vmatprep.subr.mxu0 0.0
      %1777 = vmatpush1.msra.mxu0 0.0
      %1778 = vmatprep.subr.mxu0 0.0
      %1779 = vmatpush1.msra.mxu0 0.0
      %1780 = vmatprep.subr.mxu0 0.0
      %1781 = vmatpush1.msra.mxu0 0.0
      %1782 = vmatprep.subr.mxu0 0.0
      %1783 = vmatpush1.msra.mxu0 0.0
      %1784 = vmatprep.subr.mxu0 0.0
      %1785 = vmatpush1.msra.mxu0 0.0
      %1786 = vmatprep.subr.mxu0 0.0
      %1787 = vmatpush1.msra.mxu0 0.0
      %1788 = vmatprep.subr.mxu0 0.0
      %1789 = vmatpush1.msra.mxu0 0.0
      %1790 = vmatprep.subr.mxu0 0.0
      %1791 = vmatpush1.msra.mxu0 0.0
      %1792 = vmatprep.subr.mxu0 0.0
      %1793 = vmatpush1.msra.mxu0 0.0
      %1794 = vmatprep.subr.mxu0 0.0
      %1795 = vmatpush1.msra.mxu0 0.0
      %1796 = vmatprep.subr.mxu0 0.0
      %1797 = vmatpush1.msra.mxu0 0.0
      %1798 = vmatprep.subr.mxu0 0.0
      %1799 = vmatpush1.msra.mxu0 0.0
      %1800 = vmatprep.subr.mxu0 0.0
      %1801 = vmatpush1.msra.mxu0 0.0
      %1802 = vmatprep.subr.mxu0 0.0
      %1803 = vmatpush1.msra.mxu0 0.0
      %1804 = vmatprep.subr.mxu0 0.0
      %1805 = vmatpush1.msra.mxu0 0.0
      %1806 = vmatprep.subr.mxu0 0.0
      %1807 = vmatpush1.msra.mxu0 0.0
      %1808 = vmatprep.subr.mxu0 0.0
      %1809 = vmatpush1.msra.mxu0 0.0
      %1810 = vmatprep.subr.mxu0 0.0
      %1811 = vmatpush1.msra.mxu0 0.0
      %1812 = vmatprep.subr.mxu0 0.0
      %1813 = vmatpush1.msra.mxu0 0.0
      %1814 = vmatprep.subr.mxu0 0.0
      %1815 = vmatpush1.msra.mxu0 0.0
      %1816 = vmatprep.subr.mxu0 0.0
      %1817 = vmatpush1.msra.mxu0 0.0
      %1818 = vmatprep.subr.mxu0 0.0
      %1819 = vmatpush1.msra.mxu0 0.0
      %1820 = vmatprep.subr.mxu0 0.0
      %1821 = vmatpush1.msra.mxu0 0.0
      %1822 = vmatprep.subr.mxu0 0.0
      %1823 = vmatpush1.msra.mxu0 0.0
      %1824 = vmatprep.subr.mxu0 0.0
      %1825 = vmatpush1.msra.mxu0 0.0
      %1826 = vmatprep.subr.mxu0 0.0
      %1827 = vmatpush1.msra.mxu0 0.0
      %1828 = vmatprep.subr.mxu0 0.0
      %1829 = vmatpush1.msra.mxu0 0.0
      %1830 = vmatprep.subr.mxu0 0.0
      %1831 = vmatpush1.msra.mxu0 0.0
      %1832 = vmatprep.mubr.f32.mxu0 0.0
      %v1833 = vand.u32 %v1427, 4294901760
      %1834 = vmatmul.mubr.f32.gmra.mrb[0].mxu0 %v1833
      %v1835 = vpop.f32.mrb[0].mxu0
      %v1836 = vadd.f32 %v1753, %v1835
      %v1837 = vpop.f32.mrb[0].mxu0
      %1838 = vdwg.mxu0
      %1839 = vmatprep.subr.mxu0 0.0
      %v1840 = vand.u32 %v229, 4294901760
      %1841 = vmatpush1.msra.mxu0 %v1840
      %1842 = vmatprep.subr.mxu0 0.0
      %v1843 = vand.u32 %v230, 4294901760
      %1844 = vmatpush1.msra.mxu0 %v1843
      %1845 = vmatprep.subr.mxu0 0.0
      %v1846 = vand.u32 %v231, 4294901760
      %1847 = vmatpush1.msra.mxu0 %v1846
      %1848 = vmatprep.subr.mxu0 0.0
      %v1849 = vand.u32 %v232, 4294901760
      %1850 = vmatpush1.msra.mxu0 %v1849
      %1851 = vmatprep.subr.mxu0 0.0
      %1852 = vmatpush1.msra.mxu0 0.0
      %1853 = vmatprep.subr.mxu0 0.0
      %1854 = vmatpush1.msra.mxu0 0.0
      %1855 = vmatprep.subr.mxu0 0.0
      %1856 = vmatpush1.msra.mxu0 0.0
      %1857 = vmatprep.subr.mxu0 0.0
      %1858 = vmatpush1.msra.mxu0 0.0
      %1859 = vmatprep.subr.mxu0 0.0
      %1860 = vmatpush1.msra.mxu0 0.0
      %1861 = vmatprep.subr.mxu0 0.0
      %1862 = vmatpush1.msra.mxu0 0.0
      %1863 = vmatprep.subr.mxu0 0.0
      %1864 = vmatpush1.msra.mxu0 0.0
      %1865 = vmatprep.subr.mxu0 0.0
      %1866 = vmatpush1.msra.mxu0 0.0
      %1867 = vmatprep.subr.mxu0 0.0
      %1868 = vmatpush1.msra.mxu0 0.0
      %1869 = vmatprep.subr.mxu0 0.0
      %1870 = vmatpush1.msra.mxu0 0.0
      %1871 = vmatprep.subr.mxu0 0.0
      %1872 = vmatpush1.msra.mxu0 0.0
      %1873 = vmatprep.subr.mxu0 0.0
      %1874 = vmatpush1.msra.mxu0 0.0
      %1875 = vmatprep.subr.mxu0 0.0
      %1876 = vmatpush1.msra.mxu0 0.0
      %1877 = vmatprep.subr.mxu0 0.0
      %1878 = vmatpush1.msra.mxu0 0.0
      %1879 = vmatprep.subr.mxu0 0.0
      %1880 = vmatpush1.msra.mxu0 0.0
      %1881 = vmatprep.subr.mxu0 0.0
      %1882 = vmatpush1.msra.mxu0 0.0
      %1883 = vmatprep.subr.mxu0 0.0
      %1884 = vmatpush1.msra.mxu0 0.0
      %1885 = vmatprep.subr.mxu0 0.0
      %1886 = vmatpush1.msra.mxu0 0.0
      %1887 = vmatprep.subr.mxu0 0.0
      %1888 = vmatpush1.msra.mxu0 0.0
      %1889 = vmatprep.subr.mxu0 0.0
      %1890 = vmatpush1.msra.mxu0 0.0
      %1891 = vmatprep.subr.mxu0 0.0
      %1892 = vmatpush1.msra.mxu0 0.0
      %1893 = vmatprep.subr.mxu0 0.0
      %1894 = vmatpush1.msra.mxu0 0.0
      %1895 = vmatprep.subr.mxu0 0.0
      %1896 = vmatpush1.msra.mxu0 0.0
      %1897 = vmatprep.subr.mxu0 0.0
      %1898 = vmatpush1.msra.mxu0 0.0
      %1899 = vmatprep.subr.mxu0 0.0
      %1900 = vmatpush1.msra.mxu0 0.0
      %1901 = vmatprep.subr.mxu0 0.0
      %1902 = vmatpush1.msra.mxu0 0.0
      %1903 = vmatprep.subr.mxu0 0.0
      %1904 = vmatpush1.msra.mxu0 0.0
      %1905 = vmatprep.subr.mxu0 0.0
      %1906 = vmatpush1.msra.mxu0 0.0
      %1907 = vmatprep.mubr.f32.mxu0 0.0
      %v1908 = vand.u32 %v1427, 4294901760
      %1909 = vmatmul.mubr.f32.gmra.mrb[0].mxu0 %v1908
      %v1910 = vpop.f32.mrb[0].mxu0
      %v1911 = vadd.f32 %v1836, %v1910
      %v1912 = vpop.f32.mrb[0].mxu0
      %1913 = vdwg.mxu0
      %v1915 = vsel %vm449, %v444, 0
      %1917 = vmatprep.subr.mxu0 0.0
      %v1918 = vand.u32 %v233, 4294901760
      %1919 = vmatpush1.msra.mxu0 %v1918
      %1920 = vmatprep.subr.mxu0 0.0
      %v1921 = vand.u32 %v234, 4294901760
      %1922 = vmatpush1.msra.mxu0 %v1921
      %1923 = vmatprep.subr.mxu0 0.0
      %v1924 = vand.u32 %v235, 4294901760
      %1925 = vmatpush1.msra.mxu0 %v1924
      %1926 = vmatprep.subr.mxu0 0.0
      %v1927 = vand.u32 %v236, 4294901760
      %1928 = vmatpush1.msra.mxu0 %v1927
      %1929 = vmatprep.subr.mxu0 0.0
      %1930 = vmatpush1.msra.mxu0 0.0
      %1931 = vmatprep.subr.mxu0 0.0
      %1932 = vmatpush1.msra.mxu0 0.0
      %1933 = vmatprep.subr.mxu0 0.0
      %1934 = vmatpush1.msra.mxu0 0.0
      %1935 = vmatprep.subr.mxu0 0.0
      %1936 = vmatpush1.msra.mxu0 0.0
      %1937 = vmatprep.subr.mxu0 0.0
      %1938 = vmatpush1.msra.mxu0 0.0
      %1939 = vmatprep.subr.mxu0 0.0
      %1940 = vmatpush1.msra.mxu0 0.0
      %1941 = vmatprep.subr.mxu0 0.0
      %1942 = vmatpush1.msra.mxu0 0.0
      %1943 = vmatprep.subr.mxu0 0.0
      %1944 = vmatpush1.msra.mxu0 0.0
      %1945 = vmatprep.subr.mxu0 0.0
      %1946 = vmatpush1.msra.mxu0 0.0
      %1947 = vmatprep.subr.mxu0 0.0
      %1948 = vmatpush1.msra.mxu0 0.0
      %1949 = vmatprep.subr.mxu0 0.0
      %1950 = vmatpush1.msra.mxu0 0.0
      %1951 = vmatprep.subr.mxu0 0.0
      %1952 = vmatpush1.msra.mxu0 0.0
      %1953 = vmatprep.subr.mxu0 0.0
      %1954 = vmatpush1.msra.mxu0 0.0
      %1955 = vmatprep.subr.mxu0 0.0
      %1956 = vmatpush1.msra.mxu0 0.0
      %1957 = vmatprep.subr.mxu0 0.0
      %1958 = vmatpush1.msra.mxu0 0.0
      %1959 = vmatprep.subr.mxu0 0.0
      %1960 = vmatpush1.msra.mxu0 0.0
      %1961 = vmatprep.subr.mxu0 0.0
      %1962 = vmatpush1.msra.mxu0 0.0
      %1963 = vmatprep.subr.mxu0 0.0
      %1964 = vmatpush1.msra.mxu0 0.0
      %1965 = vmatprep.subr.mxu0 0.0
      %1966 = vmatpush1.msra.mxu0 0.0
      %1967 = vmatprep.subr.mxu0 0.0
      %1968 = vmatpush1.msra.mxu0 0.0
      %1969 = vmatprep.subr.mxu0 0.0
      %1970 = vmatpush1.msra.mxu0 0.0
      %1971 = vmatprep.subr.mxu0 0.0
      %1972 = vmatpush1.msra.mxu0 0.0
      %1973 = vmatprep.subr.mxu0 0.0
      %1974 = vmatpush1.msra.mxu0 0.0
      %1975 = vmatprep.subr.mxu0 0.0
      %1976 = vmatpush1.msra.mxu0 0.0
      %1977 = vmatprep.subr.mxu0 0.0
      %1978 = vmatpush1.msra.mxu0 0.0
      %1979 = vmatprep.subr.mxu0 0.0
      %1980 = vmatpush1.msra.mxu0 0.0
      %1981 = vmatprep.subr.mxu0 0.0
      %1982 = vmatpush1.msra.mxu0 0.0
      %1983 = vmatprep.subr.mxu0 0.0
      %1984 = vmatpush1.msra.mxu0 0.0
      %1985 = vmatprep.mubr.f32.mxu0 0.0
      %v1986 = vand.u32 %v1915, 4294901760
      %v1987 = vsub.f32 %v1915, %v1986
      %v1988 = vand.u32 %v1987, 4294901760
      %v1989 = vsub.f32 %v1987, %v1988
      %v1990 = vand.u32 %v1989, 4294901760
      %1991 = vmatmul.mubr.f32.gmra.mrb[0].mxu0 %v1990
      %v1992 = vpop.f32.mrb[0].mxu0
      %v1993 = vadd.f32 0.0, %v1992
      %v1994 = vpop.f32.mrb[0].mxu0
      %1995 = vdwg.mxu0
      %1996 = vmatprep.subr.mxu0 0.0
      %v1997 = vand.u32 %v233, 4294901760
      %v1998 = vsub.f32 %v233, %v1997
      %v1999 = vand.u32 %v1998, 4294901760
      %v2000 = vsub.f32 %v1998, %v1999
      %v2001 = vand.u32 %v2000, 4294901760
      %2002 = vmatpush1.msra.mxu0 %v2001
      %2003 = vmatprep.subr.mxu0 0.0
      %v2004 = vand.u32 %v234, 4294901760
      %v2005 = vsub.f32 %v234, %v2004
      %v2006 = vand.u32 %v2005, 4294901760
      %v2007 = vsub.f32 %v2005, %v2006
      %v2008 = vand.u32 %v2007, 4294901760
      %2009 = vmatpush1.msra.mxu0 %v2008
      %2010 = vmatprep.subr.mxu0 0.0
      %v2011 = vand.u32 %v235, 4294901760
      %v2012 = vsub.f32 %v235, %v2011
      %v2013 = vand.u32 %v2012, 4294901760
      %v2014 = vsub.f32 %v2012, %v2013
      %v2015 = vand.u32 %v2014, 4294901760
      %2016 = vmatpush1.msra.mxu0 %v2015
      %2017 = vmatprep.subr.mxu0 0.0
      %v2018 = vand.u32 %v236, 4294901760
      %v2019 = vsub.f32 %v236, %v2018
      %v2020 = vand.u32 %v2019, 4294901760
      %v2021 = vsub.f32 %v2019, %v2020
      %v2022 = vand.u32 %v2021, 4294901760
      %2023 = vmatpush1.msra.mxu0 %v2022
      %2024 = vmatprep.subr.mxu0 0.0
      %2025 = vmatpush1.msra.mxu0 0.0
      %2026 = vmatprep.subr.mxu0 0.0
      %2027 = vmatpush1.msra.mxu0 0.0
      %2028 = vmatprep.subr.mxu0 0.0
      %2029 = vmatpush1.msra.mxu0 0.0
      %2030 = vmatprep.subr.mxu0 0.0
      %2031 = vmatpush1.msra.mxu0 0.0
      %2032 = vmatprep.subr.mxu0 0.0
      %2033 = vmatpush1.msra.mxu0 0.0
      %2034 = vmatprep.subr.mxu0 0.0
      %2035 = vmatpush1.msra.mxu0 0.0
      %2036 = vmatprep.subr.mxu0 0.0
      %2037 = vmatpush1.msra.mxu0 0.0
      %2038 = vmatprep.subr.mxu0 0.0
      %2039 = vmatpush1.msra.mxu0 0.0
      %2040 = vmatprep.subr.mxu0 0.0
      %2041 = vmatpush1.msra.mxu0 0.0
      %2042 = vmatprep.subr.mxu0 0.0
      %2043 = vmatpush1.msra.mxu0 0.0
      %2044 = vmatprep.subr.mxu0 0.0
      %2045 = vmatpush1.msra.mxu0 0.0
      %2046 = vmatprep.subr.mxu0 0.0
      %2047 = vmatpush1.msra.mxu0 0.0
      %2048 = vmatprep.subr.mxu0 0.0
      %2049 = vmatpush1.msra.mxu0 0.0
      %2050 = vmatprep.subr.mxu0 0.0
      %2051 = vmatpush1.msra.mxu0 0.0
      %2052 = vmatprep.subr.mxu0 0.0
      %2053 = vmatpush1.msra.mxu0 0.0
      %2054 = vmatprep.subr.mxu0 0.0
      %2055 = vmatpush1.msra.mxu0 0.0
      %2056 = vmatprep.subr.mxu0 0.0
      %2057 = vmatpush1.msra.mxu0 0.0
      %2058 = vmatprep.subr.mxu0 0.0
      %2059 = vmatpush1.msra.mxu0 0.0
      %2060 = vmatprep.subr.mxu0 0.0
      %2061 = vmatpush1.msra.mxu0 0.0
      %2062 = vmatprep.subr.mxu0 0.0
      %2063 = vmatpush1.msra.mxu0 0.0
      %2064 = vmatprep.subr.mxu0 0.0
      %2065 = vmatpush1.msra.mxu0 0.0
      %2066 = vmatprep.subr.mxu0 0.0
      %2067 = vmatpush1.msra.mxu0 0.0
      %2068 = vmatprep.subr.mxu0 0.0
      %2069 = vmatpush1.msra.mxu0 0.0
      %2070 = vmatprep.subr.mxu0 0.0
      %2071 = vmatpush1.msra.mxu0 0.0
      %2072 = vmatprep.subr.mxu0 0.0
      %2073 = vmatpush1.msra.mxu0 0.0
      %2074 = vmatprep.subr.mxu0 0.0
      %2075 = vmatpush1.msra.mxu0 0.0
      %2076 = vmatprep.subr.mxu0 0.0
      %2077 = vmatpush1.msra.mxu0 0.0
      %2078 = vmatprep.subr.mxu0 0.0
      %2079 = vmatpush1.msra.mxu0 0.0
      %2080 = vmatprep.mubr.f32.mxu0 0.0
      %v2081 = vand.u32 %v1915, 4294901760
      %2082 = vmatmul.mubr.f32.gmra.mrb[0].mxu0 %v2081
      %v2083 = vpop.f32.mrb[0].mxu0
      %v2084 = vadd.f32 %v1993, %v2083
      %v2085 = vpop.f32.mrb[0].mxu0
      %2086 = vdwg.mxu0
      %2087 = vmatprep.subr.mxu0 0.0
      %v2088 = vand.u32 %v233, 4294901760
      %v2089 = vsub.f32 %v233, %v2088
      %2090 = vmatpush1.msra.mxu0 %v2089
      %2091 = vmatprep.subr.mxu0 0.0
      %v2092 = vand.u32 %v234, 4294901760
      %v2093 = vsub.f32 %v234, %v2092
      %2094 = vmatpush1.msra.mxu0 %v2093
      %2095 = vmatprep.subr.mxu0 0.0
      %v2096 = vand.u32 %v235, 4294901760
      %v2097 = vsub.f32 %v235, %v2096
      %2098 = vmatpush1.msra.mxu0 %v2097
      %2099 = vmatprep.subr.mxu0 0.0
      %v2100 = vand.u32 %v236, 4294901760
      %v2101 = vsub.f32 %v236, %v2100
      %2102 = vmatpush1.msra.mxu0 %v2101
      %2103 = vmatprep.subr.mxu0 0.0
      %2104 = vmatpush1.msra.mxu0 0.0
      %2105 = vmatprep.subr.mxu0 0.0
      %2106 = vmatpush1.msra.mxu0 0.0
      %2107 = vmatprep.subr.mxu0 0.0
      %2108 = vmatpush1.msra.mxu0 0.0
      %2109 = vmatprep.subr.mxu0 0.0
      %2110 = vmatpush1.msra.mxu0 0.0
      %2111 = vmatprep.subr.mxu0 0.0
      %2112 = vmatpush1.msra.mxu0 0.0
      %2113 = vmatprep.subr.mxu0 0.0
      %2114 = vmatpush1.msra.mxu0 0.0
      %2115 = vmatprep.subr.mxu0 0.0
      %2116 = vmatpush1.msra.mxu0 0.0
      %2117 = vmatprep.subr.mxu0 0.0
      %2118 = vmatpush1.msra.mxu0 0.0
      %2119 = vmatprep.subr.mxu0 0.0
      %2120 = vmatpush1.msra.mxu0 0.0
      %2121 = vmatprep.subr.mxu0 0.0
      %2122 = vmatpush1.msra.mxu0 0.0
      %2123 = vmatprep.subr.mxu0 0.0
      %2124 = vmatpush1.msra.mxu0 0.0
      %2125 = vmatprep.subr.mxu0 0.0
      %2126 = vmatpush1.msra.mxu0 0.0
      %2127 = vmatprep.subr.mxu0 0.0
      %2128 = vmatpush1.msra.mxu0 0.0
      %2129 = vmatprep.subr.mxu0 0.0
      %2130 = vmatpush1.msra.mxu0 0.0
      %2131 = vmatprep.subr.mxu0 0.0
      %2132 = vmatpush1.msra.mxu0 0.0
      %2133 = vmatprep.subr.mxu0 0.0
      %2134 = vmatpush1.msra.mxu0 0.0
      %2135 = vmatprep.subr.mxu0 0.0
      %2136 = vmatpush1.msra.mxu0 0.0
      %2137 = vmatprep.subr.mxu0 0.0
      %2138 = vmatpush1.msra.mxu0 0.0
      %2139 = vmatprep.subr.mxu0 0.0
      %2140 = vmatpush1.msra.mxu0 0.0
      %2141 = vmatprep.subr.mxu0 0.0
      %2142 = vmatpush1.msra.mxu0 0.0
      %2143 = vmatprep.subr.mxu0 0.0
      %2144 = vmatpush1.msra.mxu0 0.0
      %2145 = vmatprep.subr.mxu0 0.0
      %2146 = vmatpush1.msra.mxu0 0.0
      %2147 = vmatprep.subr.mxu0 0.0
      %2148 = vmatpush1.msra.mxu0 0.0
      %2149 = vmatprep.subr.mxu0 0.0
      %2150 = vmatpush1.msra.mxu0 0.0
      %2151 = vmatprep.subr.mxu0 0.0
      %2152 = vmatpush1.msra.mxu0 0.0
      %2153 = vmatprep.subr.mxu0 0.0
      %2154 = vmatpush1.msra.mxu0 0.0
      %2155 = vmatprep.subr.mxu0 0.0
      %2156 = vmatpush1.msra.mxu0 0.0
      %2157 = vmatprep.subr.mxu0 0.0
      %2158 = vmatpush1.msra.mxu0 0.0
      %2159 = vmatprep.mubr.f32.mxu0 0.0
      %v2160 = vand.u32 %v1915, 4294901760
      %v2161 = vsub.f32 %v1915, %v2160
      %2162 = vmatmul.mubr.f32.gmra.mrb[0].mxu0 %v2161
      %v2163 = vpop.f32.mrb[0].mxu0
      %v2164 = vadd.f32 %v2084, %v2163
      %v2165 = vpop.f32.mrb[0].mxu0
      %2166 = vdwg.mxu0
      %2167 = vmatprep.subr.mxu0 0.0
      %v2168 = vand.u32 %v233, 4294901760
      %2169 = vmatpush1.msra.mxu0 %v2168
      %2170 = vmatprep.subr.mxu0 0.0
      %v2171 = vand.u32 %v234, 4294901760
      %2172 = vmatpush1.msra.mxu0 %v2171
      %2173 = vmatprep.subr.mxu0 0.0
      %v2174 = vand.u32 %v235, 4294901760
      %2175 = vmatpush1.msra.mxu0 %v2174
      %2176 = vmatprep.subr.mxu0 0.0
      %v2177 = vand.u32 %v236, 4294901760
      %2178 = vmatpush1.msra.mxu0 %v2177
      %2179 = vmatprep.subr.mxu0 0.0
      %2180 = vmatpush1.msra.mxu0 0.0
      %2181 = vmatprep.subr.mxu0 0.0
      %2182 = vmatpush1.msra.mxu0 0.0
      %2183 = vmatprep.subr.mxu0 0.0
      %2184 = vmatpush1.msra.mxu0 0.0
      %2185 = vmatprep.subr.mxu0 0.0
      %2186 = vmatpush1.msra.mxu0 0.0
      %2187 = vmatprep.subr.mxu0 0.0
      %2188 = vmatpush1.msra.mxu0 0.0
      %2189 = vmatprep.subr.mxu0 0.0
      %2190 = vmatpush1.msra.mxu0 0.0
      %2191 = vmatprep.subr.mxu0 0.0
      %2192 = vmatpush1.msra.mxu0 0.0
      %2193 = vmatprep.subr.mxu0 0.0
      %2194 = vmatpush1.msra.mxu0 0.0
      %2195 = vmatprep.subr.mxu0 0.0
      %2196 = vmatpush1.msra.mxu0 0.0
      %2197 = vmatprep.subr.mxu0 0.0
      %2198 = vmatpush1.msra.mxu0 0.0
      %2199 = vmatprep.subr.mxu0 0.0
      %2200 = vmatpush1.msra.mxu0 0.0
      %2201 = vmatprep.subr.mxu0 0.0
      %2202 = vmatpush1.msra.mxu0 0.0
      %2203 = vmatprep.subr.mxu0 0.0
      %2204 = vmatpush1.msra.mxu0 0.0
      %2205 = vmatprep.subr.mxu0 0.0
      %2206 = vmatpush1.msra.mxu0 0.0
      %2207 = vmatprep.subr.mxu0 0.0
      %2208 = vmatpush1.msra.mxu0 0.0
      %2209 = vmatprep.subr.mxu0 0.0
      %2210 = vmatpush1.msra.mxu0 0.0
      %2211 = vmatprep.subr.mxu0 0.0
      %2212 = vmatpush1.msra.mxu0 0.0
      %2213 = vmatprep.subr.mxu0 0.0
      %2214 = vmatpush1.msra.mxu0 0.0
      %2215 = vmatprep.subr.mxu0 0.0
      %2216 = vmatpush1.msra.mxu0 0.0
      %2217 = vmatprep.subr.mxu0 0.0
      %2218 = vmatpush1.msra.mxu0 0.0
      %2219 = vmatprep.subr.mxu0 0.0
      %2220 = vmatpush1.msra.mxu0 0.0
      %2221 = vmatprep.subr.mxu0 0.0
      %2222 = vmatpush1.msra.mxu0 0.0
      %2223 = vmatprep.subr.mxu0 0.0
      %2224 = vmatpush1.msra.mxu0 0.0
      %2225 = vmatprep.subr.mxu0 0.0
      %2226 = vmatpush1.msra.mxu0 0.0
      %2227 = vmatprep.subr.mxu0 0.0
      %2228 = vmatpush1.msra.mxu0 0.0
      %2229 = vmatprep.subr.mxu0 0.0
      %2230 = vmatpush1.msra.mxu0 0.0
      %2231 = vmatprep.subr.mxu0 0.0
      %2232 = vmatpush1.msra.mxu0 0.0
      %2233 = vmatprep.subr.mxu0 0.0
      %2234 = vmatpush1.msra.mxu0 0.0
      %2235 = vmatprep.mubr.f32.mxu0 0.0
      %v2236 = vand.u32 %v1915, 4294901760
      %v2237 = vsub.f32 %v1915, %v2236
      %v2238 = vand.u32 %v2237, 4294901760
      %2239 = vmatmul.mubr.f32.gmra.mrb[0].mxu0 %v2238
      %v2240 = vpop.f32.mrb[0].mxu0
      %v2241 = vadd.f32 %v2164, %v2240
      %v2242 = vpop.f32.mrb[0].mxu0
      %2243 = vdwg.mxu0
      %2244 = vmatprep.subr.mxu0 0.0
      %v2245 = vand.u32 %v233, 4294901760
      %v2246 = vsub.f32 %v233, %v2245
      %v2247 = vand.u32 %v2246, 4294901760
      %2248 = vmatpush1.msra.mxu0 %v2247
      %2249 = vmatprep.subr.mxu0 0.0
      %v2250 = vand.u32 %v234, 4294901760
      %v2251 = vsub.f32 %v234, %v2250
      %v2252 = vand.u32 %v2251, 4294901760
      %2253 = vmatpush1.msra.mxu0 %v2252
      %2254 = vmatprep.subr.mxu0 0.0
      %v2255 = vand.u32 %v235, 4294901760
      %v2256 = vsub.f32 %v235, %v2255
      %v2257 = vand.u32 %v2256, 4294901760
      %2258 = vmatpush1.msra.mxu0 %v2257
      %2259 = vmatprep.subr.mxu0 0.0
      %v2260 = vand.u32 %v236, 4294901760
      %v2261 = vsub.f32 %v236, %v2260
      %v2262 = vand.u32 %v2261, 4294901760
      %2263 = vmatpush1.msra.mxu0 %v2262
      %2264 = vmatprep.subr.mxu0 0.0
      %2265 = vmatpush1.msra.mxu0 0.0
      %2266 = vmatprep.subr.mxu0 0.0
      %2267 = vmatpush1.msra.mxu0 0.0
      %2268 = vmatprep.subr.mxu0 0.0
      %2269 = vmatpush1.msra.mxu0 0.0
      %2270 = vmatprep.subr.mxu0 0.0
      %2271 = vmatpush1.msra.mxu0 0.0
      %2272 = vmatprep.subr.mxu0 0.0
      %2273 = vmatpush1.msra.mxu0 0.0
      %2274 = vmatprep.subr.mxu0 0.0
      %2275 = vmatpush1.msra.mxu0 0.0
      %2276 = vmatprep.subr.mxu0 0.0
      %2277 = vmatpush1.msra.mxu0 0.0
      %2278 = vmatprep.subr.mxu0 0.0
      %2279 = vmatpush1.msra.mxu0 0.0
      %2280 = vmatprep.subr.mxu0 0.0
      %2281 = vmatpush1.msra.mxu0 0.0
      %2282 = vmatprep.subr.mxu0 0.0
      %2283 = vmatpush1.msra.mxu0 0.0
      %2284 = vmatprep.subr.mxu0 0.0
      %2285 = vmatpush1.msra.mxu0 0.0
      %2286 = vmatprep.subr.mxu0 0.0
      %2287 = vmatpush1.msra.mxu0 0.0
      %2288 = vmatprep.subr.mxu0 0.0
      %2289 = vmatpush1.msra.mxu0 0.0
      %2290 = vmatprep.subr.mxu0 0.0
      %2291 = vmatpush1.msra.mxu0 0.0
      %2292 = vmatprep.subr.mxu0 0.0
      %2293 = vmatpush1.msra.mxu0 0.0
      %2294 = vmatprep.subr.mxu0 0.0
      %2295 = vmatpush1.msra.mxu0 0.0
      %2296 = vmatprep.subr.mxu0 0.0
      %2297 = vmatpush1.msra.mxu0 0.0
      %2298 = vmatprep.subr.mxu0 0.0
      %2299 = vmatpush1.msra.mxu0 0.0
      %2300 = vmatprep.subr.mxu0 0.0
      %2301 = vmatpush1.msra.mxu0 0.0
      %2302 = vmatprep.subr.mxu0 0.0
      %2303 = vmatpush1.msra.mxu0 0.0
      %2304 = vmatprep.subr.mxu0 0.0
      %2305 = vmatpush1.msra.mxu0 0.0
      %2306 = vmatprep.subr.mxu0 0.0
      %2307 = vmatpush1.msra.mxu0 0.0
      %2308 = vmatprep.subr.mxu0 0.0
      %2309 = vmatpush1.msra.mxu0 0.0
      %2310 = vmatprep.subr.mxu0 0.0
      %2311 = vmatpush1.msra.mxu0 0.0
      %2312 = vmatprep.subr.mxu0 0.0
      %2313 = vmatpush1.msra.mxu0 0.0
      %2314 = vmatprep.subr.mxu0 0.0
      %2315 = vmatpush1.msra.mxu0 0.0
      %2316 = vmatprep.subr.mxu0 0.0
      %2317 = vmatpush1.msra.mxu0 0.0
      %2318 = vmatprep.subr.mxu0 0.0
      %2319 = vmatpush1.msra.mxu0 0.0
      %2320 = vmatprep.mubr.f32.mxu0 0.0
      %v2321 = vand.u32 %v1915, 4294901760
      %2322 = vmatmul.mubr.f32.gmra.mrb[0].mxu0 %v2321
      %v2323 = vpop.f32.mrb[0].mxu0
      %v2324 = vadd.f32 %v2241, %v2323
      %v2325 = vpop.f32.mrb[0].mxu0
      %2326 = vdwg.mxu0
      %2327 = vmatprep.subr.mxu0 0.0
      %v2328 = vand.u32 %v233, 4294901760
      %2329 = vmatpush1.msra.mxu0 %v2328
      %2330 = vmatprep.subr.mxu0 0.0
      %v2331 = vand.u32 %v234, 4294901760
      %2332 = vmatpush1.msra.mxu0 %v2331
      %2333 = vmatprep.subr.mxu0 0.0
      %v2334 = vand.u32 %v235, 4294901760
      %2335 = vmatpush1.msra.mxu0 %v2334
      %2336 = vmatprep.subr.mxu0 0.0
      %v2337 = vand.u32 %v236, 4294901760
      %2338 = vmatpush1.msra.mxu0 %v2337
      %2339 = vmatprep.subr.mxu0 0.0
      %2340 = vmatpush1.msra.mxu0 0.0
      %2341 = vmatprep.subr.mxu0 0.0
      %2342 = vmatpush1.msra.mxu0 0.0
      %2343 = vmatprep.subr.mxu0 0.0
      %2344 = vmatpush1.msra.mxu0 0.0
      %2345 = vmatprep.subr.mxu0 0.0
      %2346 = vmatpush1.msra.mxu0 0.0
      %2347 = vmatprep.subr.mxu0 0.0
      %2348 = vmatpush1.msra.mxu0 0.0
      %2349 = vmatprep.subr.mxu0 0.0
      %2350 = vmatpush1.msra.mxu0 0.0
      %2351 = vmatprep.subr.mxu0 0.0
      %2352 = vmatpush1.msra.mxu0 0.0
      %2353 = vmatprep.subr.mxu0 0.0
      %2354 = vmatpush1.msra.mxu0 0.0
      %2355 = vmatprep.subr.mxu0 0.0
      %2356 = vmatpush1.msra.mxu0 0.0
      %2357 = vmatprep.subr.mxu0 0.0
      %2358 = vmatpush1.msra.mxu0 0.0
      %2359 = vmatprep.subr.mxu0 0.0
      %2360 = vmatpush1.msra.mxu0 0.0
      %2361 = vmatprep.subr.mxu0 0.0
      %2362 = vmatpush1.msra.mxu0 0.0
      %2363 = vmatprep.subr.mxu0 0.0
      %2364 = vmatpush1.msra.mxu0 0.0
      %2365 = vmatprep.subr.mxu0 0.0
      %2366 = vmatpush1.msra.mxu0 0.0
      %2367 = vmatprep.subr.mxu0 0.0
      %2368 = vmatpush1.msra.mxu0 0.0
      %2369 = vmatprep.subr.mxu0 0.0
      %2370 = vmatpush1.msra.mxu0 0.0
      %2371 = vmatprep.subr.mxu0 0.0
      %2372 = vmatpush1.msra.mxu0 0.0
      %2373 = vmatprep.subr.mxu0 0.0
      %2374 = vmatpush1.msra.mxu0 0.0
      %2375 = vmatprep.subr.mxu0 0.0
      %2376 = vmatpush1.msra.mxu0 0.0
      %2377 = vmatprep.subr.mxu0 0.0
      %2378 = vmatpush1.msra.mxu0 0.0
      %2379 = vmatprep.subr.mxu0 0.0
      %2380 = vmatpush1.msra.mxu0 0.0
      %2381 = vmatprep.subr.mxu0 0.0
      %2382 = vmatpush1.msra.mxu0 0.0
      %2383 = vmatprep.subr.mxu0 0.0
      %2384 = vmatpush1.msra.mxu0 0.0
      %2385 = vmatprep.subr.mxu0 0.0
      %2386 = vmatpush1.msra.mxu0 0.0
      %2387 = vmatprep.subr.mxu0 0.0
      %2388 = vmatpush1.msra.mxu0 0.0
      %2389 = vmatprep.subr.mxu0 0.0
      %2390 = vmatpush1.msra.mxu0 0.0
      %2391 = vmatprep.subr.mxu0 0.0
      %2392 = vmatpush1.msra.mxu0 0.0
      %2393 = vmatprep.subr.mxu0 0.0
      %2394 = vmatpush1.msra.mxu0 0.0
      %2395 = vmatprep.mubr.f32.mxu0 0.0
      %v2396 = vand.u32 %v1915, 4294901760
      %2397 = vmatmul.mubr.f32.gmra.mrb[0].mxu0 %v2396
      %v2398 = vpop.f32.mrb[0].mxu0
      %v2399 = vadd.f32 %v2324, %v2398
      %v2400 = vpop.f32.mrb[0].mxu0
      %2401 = vdwg.mxu0
      %v2403 = vsel %vm449, %v445, 0
      %2405 = vmatprep.subr.mxu0 0.0
      %v2406 = vand.u32 %v237, 4294901760
      %2407 = vmatpush1.msra.mxu0 %v2406
      %2408 = vmatprep.subr.mxu0 0.0
      %v2409 = vand.u32 %v238, 4294901760
      %2410 = vmatpush1.msra.mxu0 %v2409
      %2411 = vmatprep.subr.mxu0 0.0
      %v2412 = vand.u32 %v239, 4294901760
      %2413 = vmatpush1.msra.mxu0 %v2412
      %2414 = vmatprep.subr.mxu0 0.0
      %v2415 = vand.u32 %v240, 4294901760
      %2416 = vmatpush1.msra.mxu0 %v2415
      %2417 = vmatprep.subr.mxu0 0.0
      %2418 = vmatpush1.msra.mxu0 0.0
      %2419 = vmatprep.subr.mxu0 0.0
      %2420 = vmatpush1.msra.mxu0 0.0
      %2421 = vmatprep.subr.mxu0 0.0
      %2422 = vmatpush1.msra.mxu0 0.0
      %2423 = vmatprep.subr.mxu0 0.0
      %2424 = vmatpush1.msra.mxu0 0.0
      %2425 = vmatprep.subr.mxu0 0.0
      %2426 = vmatpush1.msra.mxu0 0.0
      %2427 = vmatprep.subr.mxu0 0.0
      %2428 = vmatpush1.msra.mxu0 0.0
      %2429 = vmatprep.subr.mxu0 0.0
      %2430 = vmatpush1.msra.mxu0 0.0
      %2431 = vmatprep.subr.mxu0 0.0
      %2432 = vmatpush1.msra.mxu0 0.0
      %2433 = vmatprep.subr.mxu0 0.0
      %2434 = vmatpush1.msra.mxu0 0.0
      %2435 = vmatprep.subr.mxu0 0.0
      %2436 = vmatpush1.msra.mxu0 0.0
      %2437 = vmatprep.subr.mxu0 0.0
      %2438 = vmatpush1.msra.mxu0 0.0
      %2439 = vmatprep.subr.mxu0 0.0
      %2440 = vmatpush1.msra.mxu0 0.0
      %2441 = vmatprep.subr.mxu0 0.0
      %2442 = vmatpush1.msra.mxu0 0.0
      %2443 = vmatprep.subr.mxu0 0.0
      %2444 = vmatpush1.msra.mxu0 0.0
      %2445 = vmatprep.subr.mxu0 0.0
      %2446 = vmatpush1.msra.mxu0 0.0
      %2447 = vmatprep.subr.mxu0 0.0
      %2448 = vmatpush1.msra.mxu0 0.0
      %2449 = vmatprep.subr.mxu0 0.0
      %2450 = vmatpush1.msra.mxu0 0.0
      %2451 = vmatprep.subr.mxu0 0.0
      %2452 = vmatpush1.msra.mxu0 0.0
      %2453 = vmatprep.subr.mxu0 0.0
      %2454 = vmatpush1.msra.mxu0 0.0
      %2455 = vmatprep.subr.mxu0 0.0
      %2456 = vmatpush1.msra.mxu0 0.0
      %2457 = vmatprep.subr.mxu0 0.0
      %2458 = vmatpush1.msra.mxu0 0.0
      %2459 = vmatprep.subr.mxu0 0.0
      %2460 = vmatpush1.msra.mxu0 0.0
      %2461 = vmatprep.subr.mxu0 0.0
      %2462 = vmatpush1.msra.mxu0 0.0
      %2463 = vmatprep.subr.mxu0 0.0
      %2464 = vmatpush1.msra.mxu0 0.0
      %2465 = vmatprep.subr.mxu0 0.0
      %2466 = vmatpush1.msra.mxu0 0.0
      %2467 = vmatprep.subr.mxu0 0.0
      %2468 = vmatpush1.msra.mxu0 0.0
      %2469 = vmatprep.subr.mxu0 0.0
      %2470 = vmatpush1.msra.mxu0 0.0
      %2471 = vmatprep.subr.mxu0 0.0
      %2472 = vmatpush1.msra.mxu0 0.0
      %2473 = vmatprep.mubr.f32.mxu0 0.0
      %v2474 = vand.u32 %v2403, 4294901760
      %v2475 = vsub.f32 %v2403, %v2474
      %v2476 = vand.u32 %v2475, 4294901760
      %v2477 = vsub.f32 %v2475, %v2476
      %v2478 = vand.u32 %v2477, 4294901760
      %2479 = vmatmul.mubr.f32.gmra.mrb[0].mxu0 %v2478
      %v2480 = vpop.f32.mrb[0].mxu0
      %v2481 = vadd.f32 0.0, %v2480
      %v2482 = vpop.f32.mrb[0].mxu0
      %2483 = vdwg.mxu0
      %2484 = vmatprep.subr.mxu0 0.0
      %v2485 = vand.u32 %v237, 4294901760
      %v2486 = vsub.f32 %v237, %v2485
      %v2487 = vand.u32 %v2486, 4294901760
      %v2488 = vsub.f32 %v2486, %v2487
      %v2489 = vand.u32 %v2488, 4294901760
      %2490 = vmatpush1.msra.mxu0 %v2489
      %2491 = vmatprep.subr.mxu0 0.0
      %v2492 = vand.u32 %v238, 4294901760
      %v2493 = vsub.f32 %v238, %v2492
      %v2494 = vand.u32 %v2493, 4294901760
      %v2495 = vsub.f32 %v2493, %v2494
      %v2496 = vand.u32 %v2495, 4294901760
      %2497 = vmatpush1.msra.mxu0 %v2496
      %2498 = vmatprep.subr.mxu0 0.0
      %v2499 = vand.u32 %v239, 4294901760
      %v2500 = vsub.f32 %v239, %v2499
      %v2501 = vand.u32 %v2500, 4294901760
      %v2502 = vsub.f32 %v2500, %v2501
      %v2503 = vand.u32 %v2502, 4294901760
      %2504 = vmatpush1.msra.mxu0 %v2503
      %2505 = vmatprep.subr.mxu0 0.0
      %v2506 = vand.u32 %v240, 4294901760
      %v2507 = vsub.f32 %v240, %v2506
      %v2508 = vand.u32 %v2507, 4294901760
      %v2509 = vsub.f32 %v2507, %v2508
      %v2510 = vand.u32 %v2509, 4294901760
      %2511 = vmatpush1.msra.mxu0 %v2510
      %2512 = vmatprep.subr.mxu0 0.0
      %2513 = vmatpush1.msra.mxu0 0.0
      %2514 = vmatprep.subr.mxu0 0.0
      %2515 = vmatpush1.msra.mxu0 0.0
      %2516 = vmatprep.subr.mxu0 0.0
      %2517 = vmatpush1.msra.mxu0 0.0
      %2518 = vmatprep.subr.mxu0 0.0
      %2519 = vmatpush1.msra.mxu0 0.0
      %2520 = vmatprep.subr.mxu0 0.0
      %2521 = vmatpush1.msra.mxu0 0.0
      %2522 = vmatprep.subr.mxu0 0.0
      %2523 = vmatpush1.msra.mxu0 0.0
      %2524 = vmatprep.subr.mxu0 0.0
      %2525 = vmatpush1.msra.mxu0 0.0
      %2526 = vmatprep.subr.mxu0 0.0
      %2527 = vmatpush1.msra.mxu0 0.0
      %2528 = vmatprep.subr.mxu0 0.0
      %2529 = vmatpush1.msra.mxu0 0.0
      %2530 = vmatprep.subr.mxu0 0.0
      %2531 = vmatpush1.msra.mxu0 0.0
      %2532 = vmatprep.subr.mxu0 0.0
      %2533 = vmatpush1.msra.mxu0 0.0
      %2534 = vmatprep.subr.mxu0 0.0
      %2535 = vmatpush1.msra.mxu0 0.0
      %2536 = vmatprep.subr.mxu0 0.0
      %2537 = vmatpush1.msra.mxu0 0.0
      %2538 = vmatprep.subr.mxu0 0.0
      %2539 = vmatpush1.msra.mxu0 0.0
      %2540 = vmatprep.subr.mxu0 0.0
      %2541 = vmatpush1.msra.mxu0 0.0
      %2542 = vmatprep.subr.mxu0 0.0
      %2543 = vmatpush1.msra.mxu0 0.0
      %2544 = vmatprep.subr.mxu0 0.0
      %2545 = vmatpush1.msra.mxu0 0.0
      %2546 = vmatprep.subr.mxu0 0.0
      %2547 = vmatpush1.msra.mxu0 0.0
      %2548 = vmatprep.subr.mxu0 0.0
      %2549 = vmatpush1.msra.mxu0 0.0
      %2550 = vmatprep.subr.mxu0 0.0
      %2551 = vmatpush1.msra.mxu0 0.0
      %2552 = vmatprep.subr.mxu0 0.0
      %2553 = vmatpush1.msra.mxu0 0.0
      %2554 = vmatprep.subr.mxu0 0.0
      %2555 = vmatpush1.msra.mxu0 0.0
      %2556 = vmatprep.subr.mxu0 0.0
      %2557 = vmatpush1.msra.mxu0 0.0
      %2558 = vmatprep.subr.mxu0 0.0
      %2559 = vmatpush1.msra.mxu0 0.0
      %2560 = vmatprep.subr.mxu0 0.0
      %2561 = vmatpush1.msra.mxu0 0.0
      %2562 = vmatprep.subr.mxu0 0.0
      %2563 = vmatpush1.msra.mxu0 0.0
      %2564 = vmatprep.subr.mxu0 0.0
      %2565 = vmatpush1.msra.mxu0 0.0
      %2566 = vmatprep.subr.mxu0 0.0
      %2567 = vmatpush1.msra.mxu0 0.0
      %2568 = vmatprep.mubr.f32.mxu0 0.0
      %v2569 = vand.u32 %v2403, 4294901760
      %2570 = vmatmul.mubr.f32.gmra.mrb[0].mxu0 %v2569
      %v2571 = vpop.f32.mrb[0].mxu0
      %v2572 = vadd.f32 %v2481, %v2571
      %v2573 = vpop.f32.mrb[0].mxu0
      %2574 = vdwg.mxu0
      %2575 = vmatprep.subr.mxu0 0.0
      %v2576 = vand.u32 %v237, 4294901760
      %v2577 = vsub.f32 %v237, %v2576
      %2578 = vmatpush1.msra.mxu0 %v2577
      %2579 = vmatprep.subr.mxu0 0.0
      %v2580 = vand.u32 %v238, 4294901760
      %v2581 = vsub.f32 %v238, %v2580
      %2582 = vmatpush1.msra.mxu0 %v2581
      %2583 = vmatprep.subr.mxu0 0.0
      %v2584 = vand.u32 %v239, 4294901760
      %v2585 = vsub.f32 %v239, %v2584
      %2586 = vmatpush1.msra.mxu0 %v2585
      %2587 = vmatprep.subr.mxu0 0.0
      %v2588 = vand.u32 %v240, 4294901760
      %v2589 = vsub.f32 %v240, %v2588
      %2590 = vmatpush1.msra.mxu0 %v2589
      %2591 = vmatprep.subr.mxu0 0.0
      %2592 = vmatpush1.msra.mxu0 0.0
      %2593 = vmatprep.subr.mxu0 0.0
      %2594 = vmatpush1.msra.mxu0 0.0
      %2595 = vmatprep.subr.mxu0 0.0
      %2596 = vmatpush1.msra.mxu0 0.0
      %2597 = vmatprep.subr.mxu0 0.0
      %2598 = vmatpush1.msra.mxu0 0.0
      %2599 = vmatprep.subr.mxu0 0.0
      %2600 = vmatpush1.msra.mxu0 0.0
      %2601 = vmatprep.subr.mxu0 0.0
      %2602 = vmatpush1.msra.mxu0 0.0
      %2603 = vmatprep.subr.mxu0 0.0
      %2604 = vmatpush1.msra.mxu0 0.0
      %2605 = vmatprep.subr.mxu0 0.0
      %2606 = vmatpush1.msra.mxu0 0.0
      %2607 = vmatprep.subr.mxu0 0.0
      %2608 = vmatpush1.msra.mxu0 0.0
      %2609 = vmatprep.subr.mxu0 0.0
      %2610 = vmatpush1.msra.mxu0 0.0
      %2611 = vmatprep.subr.mxu0 0.0
      %2612 = vmatpush1.msra.mxu0 0.0
      %2613 = vmatprep.subr.mxu0 0.0
      %2614 = vmatpush1.msra.mxu0 0.0
      %2615 = vmatprep.subr.mxu0 0.0
      %2616 = vmatpush1.msra.mxu0 0.0
      %2617 = vmatprep.subr.mxu0 0.0
      %2618 = vmatpush1.msra.mxu0 0.0
      %2619 = vmatprep.subr.mxu0 0.0
      %2620 = vmatpush1.msra.mxu0 0.0
      %2621 = vmatprep.subr.mxu0 0.0
      %2622 = vmatpush1.msra.mxu0 0.0
      %2623 = vmatprep.subr.mxu0 0.0
      %2624 = vmatpush1.msra.mxu0 0.0
      %2625 = vmatprep.subr.mxu0 0.0
      %2626 = vmatpush1.msra.mxu0 0.0
      %2627 = vmatprep.subr.mxu0 0.0
      %2628 = vmatpush1.msra.mxu0 0.0
      %2629 = vmatprep.subr.mxu0 0.0
      %2630 = vmatpush1.msra.mxu0 0.0
      %2631 = vmatprep.subr.mxu0 0.0
      %2632 = vmatpush1.msra.mxu0 0.0
      %2633 = vmatprep.subr.mxu0 0.0
      %2634 = vmatpush1.msra.mxu0 0.0
      %2635 = vmatprep.subr.mxu0 0.0
      %2636 = vmatpush1.msra.mxu0 0.0
      %2637 = vmatprep.subr.mxu0 0.0
      %2638 = vmatpush1.msra.mxu0 0.0
      %2639 = vmatprep.subr.mxu0 0.0
      %2640 = vmatpush1.msra.mxu0 0.0
      %2641 = vmatprep.subr.mxu0 0.0
      %2642 = vmatpush1.msra.mxu0 0.0
      %2643 = vmatprep.subr.mxu0 0.0
      %2644 = vmatpush1.msra.mxu0 0.0
      %2645 = vmatprep.subr.mxu0 0.0
      %2646 = vmatpush1.msra.mxu0 0.0
      %2647 = vmatprep.mubr.f32.mxu0 0.0
      %v2648 = vand.u32 %v2403, 4294901760
      %v2649 = vsub.f32 %v2403, %v2648
      %2650 = vmatmul.mubr.f32.gmra.mrb[0].mxu0 %v2649
      %v2651 = vpop.f32.mrb[0].mxu0
      %v2652 = vadd.f32 %v2572, %v2651
      %v2653 = vpop.f32.mrb[0].mxu0
      %2654 = vdwg.mxu0
      %2655 = vmatprep.subr.mxu0 0.0
      %v2656 = vand.u32 %v237, 4294901760
      %2657 = vmatpush1.msra.mxu0 %v2656
      %2658 = vmatprep.subr.mxu0 0.0
      %v2659 = vand.u32 %v238, 4294901760
      %2660 = vmatpush1.msra.mxu0 %v2659
      %2661 = vmatprep.subr.mxu0 0.0
      %v2662 = vand.u32 %v239, 4294901760
      %2663 = vmatpush1.msra.mxu0 %v2662
      %2664 = vmatprep.subr.mxu0 0.0
      %v2665 = vand.u32 %v240, 4294901760
      %2666 = vmatpush1.msra.mxu0 %v2665
      %2667 = vmatprep.subr.mxu0 0.0
      %2668 = vmatpush1.msra.mxu0 0.0
      %2669 = vmatprep.subr.mxu0 0.0
      %2670 = vmatpush1.msra.mxu0 0.0
      %2671 = vmatprep.subr.mxu0 0.0
      %2672 = vmatpush1.msra.mxu0 0.0
      %2673 = vmatprep.subr.mxu0 0.0
      %2674 = vmatpush1.msra.mxu0 0.0
      %2675 = vmatprep.subr.mxu0 0.0
      %2676 = vmatpush1.msra.mxu0 0.0
      %2677 = vmatprep.subr.mxu0 0.0
      %2678 = vmatpush1.msra.mxu0 0.0
      %2679 = vmatprep.subr.mxu0 0.0
      %2680 = vmatpush1.msra.mxu0 0.0
      %2681 = vmatprep.subr.mxu0 0.0
      %2682 = vmatpush1.msra.mxu0 0.0
      %2683 = vmatprep.subr.mxu0 0.0
      %2684 = vmatpush1.msra.mxu0 0.0
      %2685 = vmatprep.subr.mxu0 0.0
      %2686 = vmatpush1.msra.mxu0 0.0
      %2687 = vmatprep.subr.mxu0 0.0
      %2688 = vmatpush1.msra.mxu0 0.0
      %2689 = vmatprep.subr.mxu0 0.0
      %2690 = vmatpush1.msra.mxu0 0.0
      %2691 = vmatprep.subr.mxu0 0.0
      %2692 = vmatpush1.msra.mxu0 0.0
      %2693 = vmatprep.subr.mxu0 0.0
      %2694 = vmatpush1.msra.mxu0 0.0
      %2695 = vmatprep.subr.mxu0 0.0
      %2696 = vmatpush1.msra.mxu0 0.0
      %2697 = vmatprep.subr.mxu0 0.0
      %2698 = vmatpush1.msra.mxu0 0.0
      %2699 = vmatprep.subr.mxu0 0.0
      %2700 = vmatpush1.msra.mxu0 0.0
      %2701 = vmatprep.subr.mxu0 0.0
      %2702 = vmatpush1.msra.mxu0 0.0
      %2703 = vmatprep.subr.mxu0 0.0
      %2704 = vmatpush1.msra.mxu0 0.0
      %2705 = vmatprep.subr.mxu0 0.0
      %2706 = vmatpush1.msra.mxu0 0.0
      %2707 = vmatprep.subr.mxu0 0.0
      %2708 = vmatpush1.msra.mxu0 0.0
      %2709 = vmatprep.subr.mxu0 0.0
      %2710 = vmatpush1.msra.mxu0 0.0
      %2711 = vmatprep.subr.mxu0 0.0
      %2712 = vmatpush1.msra.mxu0 0.0
      %2713 = vmatprep.subr.mxu0 0.0
      %2714 = vmatpush1.msra.mxu0 0.0
      %2715 = vmatprep.subr.mxu0 0.0
      %2716 = vmatpush1.msra.mxu0 0.0
      %2717 = vmatprep.subr.mxu0 0.0
      %2718 = vmatpush1.msra.mxu0 0.0
      %2719 = vmatprep.subr.mxu0 0.0
      %2720 = vmatpush1.msra.mxu0 0.0
      %2721 = vmatprep.subr.mxu0 0.0
      %2722 = vmatpush1.msra.mxu0 0.0
      %2723 = vmatprep.mubr.f32.mxu0 0.0
      %v2724 = vand.u32 %v2403, 4294901760
      %v2725 = vsub.f32 %v2403, %v2724
      %v2726 = vand.u32 %v2725, 4294901760
      %2727 = vmatmul.mubr.f32.gmra.mrb[0].mxu0 %v2726
      %v2728 = vpop.f32.mrb[0].mxu0
      %v2729 = vadd.f32 %v2652, %v2728
      %v2730 = vpop.f32.mrb[0].mxu0
      %2731 = vdwg.mxu0
      %2732 = vmatprep.subr.mxu0 0.0
      %v2733 = vand.u32 %v237, 4294901760
      %v2734 = vsub.f32 %v237, %v2733
      %v2735 = vand.u32 %v2734, 4294901760
      %2736 = vmatpush1.msra.mxu0 %v2735
      %2737 = vmatprep.subr.mxu0 0.0
      %v2738 = vand.u32 %v238, 4294901760
      %v2739 = vsub.f32 %v238, %v2738
      %v2740 = vand.u32 %v2739, 4294901760
      %2741 = vmatpush1.msra.mxu0 %v2740
      %2742 = vmatprep.subr.mxu0 0.0
      %v2743 = vand.u32 %v239, 4294901760
      %v2744 = vsub.f32 %v239, %v2743
      %v2745 = vand.u32 %v2744, 4294901760
      %2746 = vmatpush1.msra.mxu0 %v2745
      %2747 = vmatprep.subr.mxu0 0.0
      %v2748 = vand.u32 %v240, 4294901760
      %v2749 = vsub.f32 %v240, %v2748
      %v2750 = vand.u32 %v2749, 4294901760
      %2751 = vmatpush1.msra.mxu0 %v2750
      %2752 = vmatprep.subr.mxu0 0.0
      %2753 = vmatpush1.msra.mxu0 0.0
      %2754 = vmatprep.subr.mxu0 0.0
      %2755 = vmatpush1.msra.mxu0 0.0
      %2756 = vmatprep.subr.mxu0 0.0
      %2757 = vmatpush1.msra.mxu0 0.0
      %2758 = vmatprep.subr.mxu0 0.0
      %2759 = vmatpush1.msra.mxu0 0.0
      %2760 = vmatprep.subr.mxu0 0.0
      %2761 = vmatpush1.msra.mxu0 0.0
      %2762 = vmatprep.subr.mxu0 0.0
      %2763 = vmatpush1.msra.mxu0 0.0
      %2764 = vmatprep.subr.mxu0 0.0
      %2765 = vmatpush1.msra.mxu0 0.0
      %2766 = vmatprep.subr.mxu0 0.0
      %2767 = vmatpush1.msra.mxu0 0.0
      %2768 = vmatprep.subr.mxu0 0.0
      %2769 = vmatpush1.msra.mxu0 0.0
      %2770 = vmatprep.subr.mxu0 0.0
      %2771 = vmatpush1.msra.mxu0 0.0
      %2772 = vmatprep.subr.mxu0 0.0
      %2773 = vmatpush1.msra.mxu0 0.0
      %2774 = vmatprep.subr.mxu0 0.0
      %2775 = vmatpush1.msra.mxu0 0.0
      %2776 = vmatprep.subr.mxu0 0.0
      %2777 = vmatpush1.msra.mxu0 0.0
      %2778 = vmatprep.subr.mxu0 0.0
      %2779 = vmatpush1.msra.mxu0 0.0
      %2780 = vmatprep.subr.mxu0 0.0
      %2781 = vmatpush1.msra.mxu0 0.0
      %2782 = vmatprep.subr.mxu0 0.0
      %2783 = vmatpush1.msra.mxu0 0.0
      %2784 = vmatprep.subr.mxu0 0.0
      %2785 = vmatpush1.msra.mxu0 0.0
      %2786 = vmatprep.subr.mxu0 0.0
      %2787 = vmatpush1.msra.mxu0 0.0
      %2788 = vmatprep.subr.mxu0 0.0
      %2789 = vmatpush1.msra.mxu0 0.0
      %2790 = vmatprep.subr.mxu0 0.0
      %2791 = vmatpush1.msra.mxu0 0.0
      %2792 = vmatprep.subr.mxu0 0.0
      %2793 = vmatpush1.msra.mxu0 0.0
      %2794 = vmatprep.subr.mxu0 0.0
      %2795 = vmatpush1.msra.mxu0 0.0
      %2796 = vmatprep.subr.mxu0 0.0
      %2797 = vmatpush1.msra.mxu0 0.0
      %2798 = vmatprep.subr.mxu0 0.0
      %2799 = vmatpush1.msra.mxu0 0.0
      %2800 = vmatprep.subr.mxu0 0.0
      %2801 = vmatpush1.msra.mxu0 0.0
      %2802 = vmatprep.subr.mxu0 0.0
      %2803 = vmatpush1.msra.mxu0 0.0
      %2804 = vmatprep.subr.mxu0 0.0
      %2805 = vmatpush1.msra.mxu0 0.0
      %2806 = vmatprep.subr.mxu0 0.0
      %2807 = vmatpush1.msra.mxu0 0.0
      %2808 = vmatprep.mubr.f32.mxu0 0.0
      %v2809 = vand.u32 %v2403, 4294901760
      %2810 = vmatmul.mubr.f32.gmra.mrb[0].mxu0 %v2809
      %v2811 = vpop.f32.mrb[0].mxu0
      %v2812 = vadd.f32 %v2729, %v2811
      %v2813 = vpop.f32.mrb[0].mxu0
      %2814 = vdwg.mxu0
      %2815 = vmatprep.subr.mxu0 0.0
      %v2816 = vand.u32 %v237, 4294901760
      %2817 = vmatpush1.msra.mxu0 %v2816
      %2818 = vmatprep.subr.mxu0 0.0
      %v2819 = vand.u32 %v238, 4294901760
      %2820 = vmatpush1.msra.mxu0 %v2819
      %2821 = vmatprep.subr.mxu0 0.0
      %v2822 = vand.u32 %v239, 4294901760
      %2823 = vmatpush1.msra.mxu0 %v2822
      %2824 = vmatprep.subr.mxu0 0.0
      %v2825 = vand.u32 %v240, 4294901760
      %2826 = vmatpush1.msra.mxu0 %v2825
      %2827 = vmatprep.subr.mxu0 0.0
      %2828 = vmatpush1.msra.mxu0 0.0
      %2829 = vmatprep.subr.mxu0 0.0
      %2830 = vmatpush1.msra.mxu0 0.0
      %2831 = vmatprep.subr.mxu0 0.0
      %2832 = vmatpush1.msra.mxu0 0.0
      %2833 = vmatprep.subr.mxu0 0.0
      %2834 = vmatpush1.msra.mxu0 0.0
      %2835 = vmatprep.subr.mxu0 0.0
      %2836 = vmatpush1.msra.mxu0 0.0
      %2837 = vmatprep.subr.mxu0 0.0
      %2838 = vmatpush1.msra.mxu0 0.0
      %2839 = vmatprep.subr.mxu0 0.0
      %2840 = vmatpush1.msra.mxu0 0.0
      %2841 = vmatprep.subr.mxu0 0.0
      %2842 = vmatpush1.msra.mxu0 0.0
      %2843 = vmatprep.subr.mxu0 0.0
      %2844 = vmatpush1.msra.mxu0 0.0
      %2845 = vmatprep.subr.mxu0 0.0
      %2846 = vmatpush1.msra.mxu0 0.0
      %2847 = vmatprep.subr.mxu0 0.0
      %2848 = vmatpush1.msra.mxu0 0.0
      %2849 = vmatprep.subr.mxu0 0.0
      %2850 = vmatpush1.msra.mxu0 0.0
      %2851 = vmatprep.subr.mxu0 0.0
      %2852 = vmatpush1.msra.mxu0 0.0
      %2853 = vmatprep.subr.mxu0 0.0
      %2854 = vmatpush1.msra.mxu0 0.0
      %2855 = vmatprep.subr.mxu0 0.0
      %2856 = vmatpush1.msra.mxu0 0.0
      %2857 = vmatprep.subr.mxu0 0.0
      %2858 = vmatpush1.msra.mxu0 0.0
      %2859 = vmatprep.subr.mxu0 0.0
      %2860 = vmatpush1.msra.mxu0 0.0
      %2861 = vmatprep.subr.mxu0 0.0
      %2862 = vmatpush1.msra.mxu0 0.0
      %2863 = vmatprep.subr.mxu0 0.0
      %2864 = vmatpush1.msra.mxu0 0.0
      %2865 = vmatprep.subr.mxu0 0.0
      %2866 = vmatpush1.msra.mxu0 0.0
      %2867 = vmatprep.subr.mxu0 0.0
      %2868 = vmatpush1.msra.mxu0 0.0
      %2869 = vmatprep.subr.mxu0 0.0
      %2870 = vmatpush1.msra.mxu0 0.0
      %2871 = vmatprep.subr.mxu0 0.0
      %2872 = vmatpush1.msra.mxu0 0.0
      %2873 = vmatprep.subr.mxu0 0.0
      %2874 = vmatpush1.msra.mxu0 0.0
      %2875 = vmatprep.subr.mxu0 0.0
      %2876 = vmatpush1.msra.mxu0 0.0
      %2877 = vmatprep.subr.mxu0 0.0
      %2878 = vmatpush1.msra.mxu0 0.0
      %2879 = vmatprep.subr.mxu0 0.0
      %2880 = vmatpush1.msra.mxu0 0.0
      %2881 = vmatprep.subr.mxu0 0.0
      %2882 = vmatpush1.msra.mxu0 0.0
      %2883 = vmatprep.mubr.f32.mxu0 0.0
      %v2884 = vand.u32 %v2403, 4294901760
      %2885 = vmatmul.mubr.f32.gmra.mrb[0].mxu0 %v2884
      %v2886 = vpop.f32.mrb[0].mxu0
      %v2887 = vadd.f32 %v2812, %v2886
      %v2888 = vpop.f32.mrb[0].mxu0
      %2889 = vdwg.mxu0
      %v2891 = vsel %vm449, %v446, 0
      %2893 = vmatprep.subr.mxu0 0.0
      %v2894 = vand.u32 %v241, 4294901760
      %2895 = vmatpush1.msra.mxu0 %v2894
      %2896 = vmatprep.subr.mxu0 0.0
      %v2897 = vand.u32 %v242, 4294901760
      %2898 = vmatpush1.msra.mxu0 %v2897
      %2899 = vmatprep.subr.mxu0 0.0
      %v2900 = vand.u32 %v243, 4294901760
      %2901 = vmatpush1.msra.mxu0 %v2900
      %2902 = vmatprep.subr.mxu0 0.0
      %v2903 = vand.u32 %v244, 4294901760
      %2904 = vmatpush1.msra.mxu0 %v2903
      %2905 = vmatprep.subr.mxu0 0.0
      %2906 = vmatpush1.msra.mxu0 0.0
      %2907 = vmatprep.subr.mxu0 0.0
      %2908 = vmatpush1.msra.mxu0 0.0
      %2909 = vmatprep.subr.mxu0 0.0
      %2910 = vmatpush1.msra.mxu0 0.0
      %2911 = vmatprep.subr.mxu0 0.0
      %2912 = vmatpush1.msra.mxu0 0.0
      %2913 = vmatprep.subr.mxu0 0.0
      %2914 = vmatpush1.msra.mxu0 0.0
      %2915 = vmatprep.subr.mxu0 0.0
      %2916 = vmatpush1.msra.mxu0 0.0
      %2917 = vmatprep.subr.mxu0 0.0
      %2918 = vmatpush1.msra.mxu0 0.0
      %2919 = vmatprep.subr.mxu0 0.0
      %2920 = vmatpush1.msra.mxu0 0.0
      %2921 = vmatprep.subr.mxu0 0.0
      %2922 = vmatpush1.msra.mxu0 0.0
      %2923 = vmatprep.subr.mxu0 0.0
      %2924 = vmatpush1.msra.mxu0 0.0
      %2925 = vmatprep.subr.mxu0 0.0
      %2926 = vmatpush1.msra.mxu0 0.0
      %2927 = vmatprep.subr.mxu0 0.0
      %2928 = vmatpush1.msra.mxu0 0.0
      %2929 = vmatprep.subr.mxu0 0.0
      %2930 = vmatpush1.msra.mxu0 0.0
      %2931 = vmatprep.subr.mxu0 0.0
      %2932 = vmatpush1.msra.mxu0 0.0
      %2933 = vmatprep.subr.mxu0 0.0
      %2934 = vmatpush1.msra.mxu0 0.0
      %2935 = vmatprep.subr.mxu0 0.0
      %2936 = vmatpush1.msra.mxu0 0.0
      %2937 = vmatprep.subr.mxu0 0.0
      %2938 = vmatpush1.msra.mxu0 0.0
      %2939 = vmatprep.subr.mxu0 0.0
      %2940 = vmatpush1.msra.mxu0 0.0
      %2941 = vmatprep.subr.mxu0 0.0
      %2942 = vmatpush1.msra.mxu0 0.0
      %2943 = vmatprep.subr.mxu0 0.0
      %2944 = vmatpush1.msra.mxu0 0.0
      %2945 = vmatprep.subr.mxu0 0.0
      %2946 = vmatpush1.msra.mxu0 0.0
      %2947 = vmatprep.subr.mxu0 0.0
      %2948 = vmatpush1.msra.mxu0 0.0
      %2949 = vmatprep.subr.mxu0 0.0
      %2950 = vmatpush1.msra.mxu0 0.0
      %2951 = vmatprep.subr.mxu0 0.0
      %2952 = vmatpush1.msra.mxu0 0.0
      %2953 = vmatprep.subr.mxu0 0.0
      %2954 = vmatpush1.msra.mxu0 0.0
      %2955 = vmatprep.subr.mxu0 0.0
      %2956 = vmatpush1.msra.mxu0 0.0
      %2957 = vmatprep.subr.mxu0 0.0
      %2958 = vmatpush1.msra.mxu0 0.0
      %2959 = vmatprep.subr.mxu0 0.0
      %2960 = vmatpush1.msra.mxu0 0.0
      %2961 = vmatprep.mubr.f32.mxu0 0.0
      %v2962 = vand.u32 %v2891, 4294901760
      %v2963 = vsub.f32 %v2891, %v2962
      %v2964 = vand.u32 %v2963, 4294901760
      %v2965 = vsub.f32 %v2963, %v2964
      %v2966 = vand.u32 %v2965, 4294901760
      %2967 = vmatmul.mubr.f32.gmra.mrb[0].mxu0 %v2966
      %v2968 = vpop.f32.mrb[0].mxu0
      %v2969 = vadd.f32 0.0, %v2968
      %v2970 = vpop.f32.mrb[0].mxu0
      %2971 = vdwg.mxu0
      %2972 = vmatprep.subr.mxu0 0.0
      %v2973 = vand.u32 %v241, 4294901760
      %v2974 = vsub.f32 %v241, %v2973
      %v2975 = vand.u32 %v2974, 4294901760
      %v2976 = vsub.f32 %v2974, %v2975
      %v2977 = vand.u32 %v2976, 4294901760
      %2978 = vmatpush1.msra.mxu0 %v2977
      %2979 = vmatprep.subr.mxu0 0.0
      %v2980 = vand.u32 %v242, 4294901760
      %v2981 = vsub.f32 %v242, %v2980
      %v2982 = vand.u32 %v2981, 4294901760
      %v2983 = vsub.f32 %v2981, %v2982
      %v2984 = vand.u32 %v2983, 4294901760
      %2985 = vmatpush1.msra.mxu0 %v2984
      %2986 = vmatprep.subr.mxu0 0.0
      %v2987 = vand.u32 %v243, 4294901760
      %v2988 = vsub.f32 %v243, %v2987
      %v2989 = vand.u32 %v2988, 4294901760
      %v2990 = vsub.f32 %v2988, %v2989
      %v2991 = vand.u32 %v2990, 4294901760
      %2992 = vmatpush1.msra.mxu0 %v2991
      %2993 = vmatprep.subr.mxu0 0.0
      %v2994 = vand.u32 %v244, 4294901760
      %v2995 = vsub.f32 %v244, %v2994
      %v2996 = vand.u32 %v2995, 4294901760
      %v2997 = vsub.f32 %v2995, %v2996
      %v2998 = vand.u32 %v2997, 4294901760
      %2999 = vmatpush1.msra.mxu0 %v2998
      %3000 = vmatprep.subr.mxu0 0.0
      %3001 = vmatpush1.msra.mxu0 0.0
      %3002 = vmatprep.subr.mxu0 0.0
      %3003 = vmatpush1.msra.mxu0 0.0
      %3004 = vmatprep.subr.mxu0 0.0
      %3005 = vmatpush1.msra.mxu0 0.0
      %3006 = vmatprep.subr.mxu0 0.0
      %3007 = vmatpush1.msra.mxu0 0.0
      %3008 = vmatprep.subr.mxu0 0.0
      %3009 = vmatpush1.msra.mxu0 0.0
      %3010 = vmatprep.subr.mxu0 0.0
      %3011 = vmatpush1.msra.mxu0 0.0
      %3012 = vmatprep.subr.mxu0 0.0
      %3013 = vmatpush1.msra.mxu0 0.0
      %3014 = vmatprep.subr.mxu0 0.0
      %3015 = vmatpush1.msra.mxu0 0.0
      %3016 = vmatprep.subr.mxu0 0.0
      %3017 = vmatpush1.msra.mxu0 0.0
      %3018 = vmatprep.subr.mxu0 0.0
      %3019 = vmatpush1.msra.mxu0 0.0
      %3020 = vmatprep.subr.mxu0 0.0
      %3021 = vmatpush1.msra.mxu0 0.0
      %3022 = vmatprep.subr.mxu0 0.0
      %3023 = vmatpush1.msra.mxu0 0.0
      %3024 = vmatprep.subr.mxu0 0.0
      %3025 = vmatpush1.msra.mxu0 0.0
      %3026 = vmatprep.subr.mxu0 0.0
      %3027 = vmatpush1.msra.mxu0 0.0
      %3028 = vmatprep.subr.mxu0 0.0
      %3029 = vmatpush1.msra.mxu0 0.0
      %3030 = vmatprep.subr.mxu0 0.0
      %3031 = vmatpush1.msra.mxu0 0.0
      %3032 = vmatprep.subr.mxu0 0.0
      %3033 = vmatpush1.msra.mxu0 0.0
      %3034 = vmatprep.subr.mxu0 0.0
      %3035 = vmatpush1.msra.mxu0 0.0
      %3036 = vmatprep.subr.mxu0 0.0
      %3037 = vmatpush1.msra.mxu0 0.0
      %3038 = vmatprep.subr.mxu0 0.0
      %3039 = vmatpush1.msra.mxu0 0.0
      %3040 = vmatprep.subr.mxu0 0.0
      %3041 = vmatpush1.msra.mxu0 0.0
      %3042 = vmatprep.subr.mxu0 0.0
      %3043 = vmatpush1.msra.mxu0 0.0
      %3044 = vmatprep.subr.mxu0 0.0
      %3045 = vmatpush1.msra.mxu0 0.0
      %3046 = vmatprep.subr.mxu0 0.0
      %3047 = vmatpush1.msra.mxu0 0.0
      %3048 = vmatprep.subr.mxu0 0.0
      %3049 = vmatpush1.msra.mxu0 0.0
      %3050 = vmatprep.subr.mxu0 0.0
      %3051 = vmatpush1.msra.mxu0 0.0
      %3052 = vmatprep.subr.mxu0 0.0
      %3053 = vmatpush1.msra.mxu0 0.0
      %3054 = vmatprep.subr.mxu0 0.0
      %3055 = vmatpush1.msra.mxu0 0.0
      %3056 = vmatprep.mubr.f32.mxu0 0.0
      %v3057 = vand.u32 %v2891, 4294901760
      %3058 = vmatmul.mubr.f32.gmra.mrb[0].mxu0 %v3057
      %v3059 = vpop.f32.mrb[0].mxu0
      %v3060 = vadd.f32 %v2969, %v3059
      %v3061 = vpop.f32.mrb[0].mxu0
      %3062 = vdwg.mxu0
      %3063 = vmatprep.subr.mxu0 0.0
      %v3064 = vand.u32 %v241, 4294901760
      %v3065 = vsub.f32 %v241, %v3064
      %3066 = vmatpush1.msra.mxu0 %v3065
      %3067 = vmatprep.subr.mxu0 0.0
      %v3068 = vand.u32 %v242, 4294901760
      %v3069 = vsub.f32 %v242, %v3068
      %3070 = vmatpush1.msra.mxu0 %v3069
      %3071 = vmatprep.subr.mxu0 0.0
      %v3072 = vand.u32 %v243, 4294901760
      %v3073 = vsub.f32 %v243, %v3072
      %3074 = vmatpush1.msra.mxu0 %v3073
      %3075 = vmatprep.subr.mxu0 0.0
      %v3076 = vand.u32 %v244, 4294901760
      %v3077 = vsub.f32 %v244, %v3076
      %3078 = vmatpush1.msra.mxu0 %v3077
      %3079 = vmatprep.subr.mxu0 0.0
      %3080 = vmatpush1.msra.mxu0 0.0
      %3081 = vmatprep.subr.mxu0 0.0
      %3082 = vmatpush1.msra.mxu0 0.0
      %3083 = vmatprep.subr.mxu0 0.0
      %3084 = vmatpush1.msra.mxu0 0.0
      %3085 = vmatprep.subr.mxu0 0.0
      %3086 = vmatpush1.msra.mxu0 0.0
      %3087 = vmatprep.subr.mxu0 0.0
      %3088 = vmatpush1.msra.mxu0 0.0
      %3089 = vmatprep.subr.mxu0 0.0
      %3090 = vmatpush1.msra.mxu0 0.0
      %3091 = vmatprep.subr.mxu0 0.0
      %3092 = vmatpush1.msra.mxu0 0.0
      %3093 = vmatprep.subr.mxu0 0.0
      %3094 = vmatpush1.msra.mxu0 0.0
      %3095 = vmatprep.subr.mxu0 0.0
      %3096 = vmatpush1.msra.mxu0 0.0
      %3097 = vmatprep.subr.mxu0 0.0
      %3098 = vmatpush1.msra.mxu0 0.0
      %3099 = vmatprep.subr.mxu0 0.0
      %3100 = vmatpush1.msra.mxu0 0.0
      %3101 = vmatprep.subr.mxu0 0.0
      %3102 = vmatpush1.msra.mxu0 0.0
      %3103 = vmatprep.subr.mxu0 0.0
      %3104 = vmatpush1.msra.mxu0 0.0
      %3105 = vmatprep.subr.mxu0 0.0
      %3106 = vmatpush1.msra.mxu0 0.0
      %3107 = vmatprep.subr.mxu0 0.0
      %3108 = vmatpush1.msra.mxu0 0.0
      %3109 = vmatprep.subr.mxu0 0.0
      %3110 = vmatpush1.msra.mxu0 0.0
      %3111 = vmatprep.subr.mxu0 0.0
      %3112 = vmatpush1.msra.mxu0 0.0
      %3113 = vmatprep.subr.mxu0 0.0
      %3114 = vmatpush1.msra.mxu0 0.0
      %3115 = vmatprep.subr.mxu0 0.0
      %3116 = vmatpush1.msra.mxu0 0.0
      %3117 = vmatprep.subr.mxu0 0.0
      %3118 = vmatpush1.msra.mxu0 0.0
      %3119 = vmatprep.subr.mxu0 0.0
      %3120 = vmatpush1.msra.mxu0 0.0
      %3121 = vmatprep.subr.mxu0 0.0
      %3122 = vmatpush1.msra.mxu0 0.0
      %3123 = vmatprep.subr.mxu0 0.0
      %3124 = vmatpush1.msra.mxu0 0.0
      %3125 = vmatprep.subr.mxu0 0.0
      %3126 = vmatpush1.msra.mxu0 0.0
      %3127 = vmatprep.subr.mxu0 0.0
      %3128 = vmatpush1.msra.mxu0 0.0
      %3129 = vmatprep.subr.mxu0 0.0
      %3130 = vmatpush1.msra.mxu0 0.0
      %3131 = vmatprep.subr.mxu0 0.0
      %3132 = vmatpush1.msra.mxu0 0.0
      %3133 = vmatprep.subr.mxu0 0.0
      %3134 = vmatpush1.msra.mxu0 0.0
      %3135 = vmatprep.mubr.f32.mxu0 0.0
      %v3136 = vand.u32 %v2891, 4294901760
      %v3137 = vsub.f32 %v2891, %v3136
      %3138 = vmatmul.mubr.f32.gmra.mrb[0].mxu0 %v3137
      %v3139 = vpop.f32.mrb[0].mxu0
      %v3140 = vadd.f32 %v3060, %v3139
      %v3141 = vpop.f32.mrb[0].mxu0
      %3142 = vdwg.mxu0
      %3143 = vmatprep.subr.mxu0 0.0
      %v3144 = vand.u32 %v241, 4294901760
      %3145 = vmatpush1.msra.mxu0 %v3144
      %3146 = vmatprep.subr.mxu0 0.0
      %v3147 = vand.u32 %v242, 4294901760
      %3148 = vmatpush1.msra.mxu0 %v3147
      %3149 = vmatprep.subr.mxu0 0.0
      %v3150 = vand.u32 %v243, 4294901760
      %3151 = vmatpush1.msra.mxu0 %v3150
      %3152 = vmatprep.subr.mxu0 0.0
      %v3153 = vand.u32 %v244, 4294901760
      %3154 = vmatpush1.msra.mxu0 %v3153
      %3155 = vmatprep.subr.mxu0 0.0
      %3156 = vmatpush1.msra.mxu0 0.0
      %3157 = vmatprep.subr.mxu0 0.0
      %3158 = vmatpush1.msra.mxu0 0.0
      %3159 = vmatprep.subr.mxu0 0.0
      %3160 = vmatpush1.msra.mxu0 0.0
      %3161 = vmatprep.subr.mxu0 0.0
      %3162 = vmatpush1.msra.mxu0 0.0
      %3163 = vmatprep.subr.mxu0 0.0
      %3164 = vmatpush1.msra.mxu0 0.0
      %3165 = vmatprep.subr.mxu0 0.0
      %3166 = vmatpush1.msra.mxu0 0.0
      %3167 = vmatprep.subr.mxu0 0.0
      %3168 = vmatpush1.msra.mxu0 0.0
      %3169 = vmatprep.subr.mxu0 0.0
      %3170 = vmatpush1.msra.mxu0 0.0
      %3171 = vmatprep.subr.mxu0 0.0
      %3172 = vmatpush1.msra.mxu0 0.0
      %3173 = vmatprep.subr.mxu0 0.0
      %3174 = vmatpush1.msra.mxu0 0.0
      %3175 = vmatprep.subr.mxu0 0.0
      %3176 = vmatpush1.msra.mxu0 0.0
      %3177 = vmatprep.subr.mxu0 0.0
      %3178 = vmatpush1.msra.mxu0 0.0
      %3179 = vmatprep.subr.mxu0 0.0
      %3180 = vmatpush1.msra.mxu0 0.0
      %3181 = vmatprep.subr.mxu0 0.0
      %3182 = vmatpush1.msra.mxu0 0.0
      %3183 = vmatprep.subr.mxu0 0.0
      %3184 = vmatpush1.msra.mxu0 0.0
      %3185 = vmatprep.subr.mxu0 0.0
      %3186 = vmatpush1.msra.mxu0 0.0
      %3187 = vmatprep.subr.mxu0 0.0
      %3188 = vmatpush1.msra.mxu0 0.0
      %3189 = vmatprep.subr.mxu0 0.0
      %3190 = vmatpush1.msra.mxu0 0.0
      %3191 = vmatprep.subr.mxu0 0.0
      %3192 = vmatpush1.msra.mxu0 0.0
      %3193 = vmatprep.subr.mxu0 0.0
      %3194 = vmatpush1.msra.mxu0 0.0
      %3195 = vmatprep.subr.mxu0 0.0
      %3196 = vmatpush1.msra.mxu0 0.0
      %3197 = vmatprep.subr.mxu0 0.0
      %3198 = vmatpush1.msra.mxu0 0.0
      %3199 = vmatprep.subr.mxu0 0.0
      %3200 = vmatpush1.msra.mxu0 0.0
      %3201 = vmatprep.subr.mxu0 0.0
      %3202 = vmatpush1.msra.mxu0 0.0
      %3203 = vmatprep.subr.mxu0 0.0
      %3204 = vmatpush1.msra.mxu0 0.0
      %3205 = vmatprep.subr.mxu0 0.0
      %3206 = vmatpush1.msra.mxu0 0.0
      %3207 = vmatprep.subr.mxu0 0.0
      %3208 = vmatpush1.msra.mxu0 0.0
      %3209 = vmatprep.subr.mxu0 0.0
      %3210 = vmatpush1.msra.mxu0 0.0
      %3211 = vmatprep.mubr.f32.mxu0 0.0
      %v3212 = vand.u32 %v2891, 4294901760
      %v3213 = vsub.f32 %v2891, %v3212
      %v3214 = vand.u32 %v3213, 4294901760
      %3215 = vmatmul.mubr.f32.gmra.mrb[0].mxu0 %v3214
      %v3216 = vpop.f32.mrb[0].mxu0
      %v3217 = vadd.f32 %v3140, %v3216
      %v3218 = vpop.f32.mrb[0].mxu0
      %3219 = vdwg.mxu0
      %3220 = vmatprep.subr.mxu0 0.0
      %v3221 = vand.u32 %v241, 4294901760
      %v3222 = vsub.f32 %v241, %v3221
      %v3223 = vand.u32 %v3222, 4294901760
      %3224 = vmatpush1.msra.mxu0 %v3223
      %3225 = vmatprep.subr.mxu0 0.0
      %v3226 = vand.u32 %v242, 4294901760
      %v3227 = vsub.f32 %v242, %v3226
      %v3228 = vand.u32 %v3227, 4294901760
      %3229 = vmatpush1.msra.mxu0 %v3228
      %3230 = vmatprep.subr.mxu0 0.0
      %v3231 = vand.u32 %v243, 4294901760
      %v3232 = vsub.f32 %v243, %v3231
      %v3233 = vand.u32 %v3232, 4294901760
      %3234 = vmatpush1.msra.mxu0 %v3233
      %3235 = vmatprep.subr.mxu0 0.0
      %v3236 = vand.u32 %v244, 4294901760
      %v3237 = vsub.f32 %v244, %v3236
      %v3238 = vand.u32 %v3237, 4294901760
      %3239 = vmatpush1.msra.mxu0 %v3238
      %3240 = vmatprep.subr.mxu0 0.0
      %3241 = vmatpush1.msra.mxu0 0.0
      %3242 = vmatprep.subr.mxu0 0.0
      %3243 = vmatpush1.msra.mxu0 0.0
      %3244 = vmatprep.subr.mxu0 0.0
      %3245 = vmatpush1.msra.mxu0 0.0
      %3246 = vmatprep.subr.mxu0 0.0
      %3247 = vmatpush1.msra.mxu0 0.0
      %3248 = vmatprep.subr.mxu0 0.0
      %3249 = vmatpush1.msra.mxu0 0.0
      %3250 = vmatprep.subr.mxu0 0.0
      %3251 = vmatpush1.msra.mxu0 0.0
      %3252 = vmatprep.subr.mxu0 0.0
      %3253 = vmatpush1.msra.mxu0 0.0
      %3254 = vmatprep.subr.mxu0 0.0
      %3255 = vmatpush1.msra.mxu0 0.0
      %3256 = vmatprep.subr.mxu0 0.0
      %3257 = vmatpush1.msra.mxu0 0.0
      %3258 = vmatprep.subr.mxu0 0.0
      %3259 = vmatpush1.msra.mxu0 0.0
      %3260 = vmatprep.subr.mxu0 0.0
      %3261 = vmatpush1.msra.mxu0 0.0
      %3262 = vmatprep.subr.mxu0 0.0
      %3263 = vmatpush1.msra.mxu0 0.0
      %3264 = vmatprep.subr.mxu0 0.0
      %3265 = vmatpush1.msra.mxu0 0.0
      %3266 = vmatprep.subr.mxu0 0.0
      %3267 = vmatpush1.msra.mxu0 0.0
      %3268 = vmatprep.subr.mxu0 0.0
      %3269 = vmatpush1.msra.mxu0 0.0
      %3270 = vmatprep.subr.mxu0 0.0
      %3271 = vmatpush1.msra.mxu0 0.0
      %3272 = vmatprep.subr.mxu0 0.0
      %3273 = vmatpush1.msra.mxu0 0.0
      %3274 = vmatprep.subr.mxu0 0.0
      %3275 = vmatpush1.msra.mxu0 0.0
      %3276 = vmatprep.subr.mxu0 0.0
      %3277 = vmatpush1.msra.mxu0 0.0
      %3278 = vmatprep.subr.mxu0 0.0
      %3279 = vmatpush1.msra.mxu0 0.0
      %3280 = vmatprep.subr.mxu0 0.0
      %3281 = vmatpush1.msra.mxu0 0.0
      %3282 = vmatprep.subr.mxu0 0.0
      %3283 = vmatpush1.msra.mxu0 0.0
      %3284 = vmatprep.subr.mxu0 0.0
      %3285 = vmatpush1.msra.mxu0 0.0
      %3286 = vmatprep.subr.mxu0 0.0
      %3287 = vmatpush1.msra.mxu0 0.0
      %3288 = vmatprep.subr.mxu0 0.0
      %3289 = vmatpush1.msra.mxu0 0.0
      %3290 = vmatprep.subr.mxu0 0.0
      %3291 = vmatpush1.msra.mxu0 0.0
      %3292 = vmatprep.subr.mxu0 0.0
      %3293 = vmatpush1.msra.mxu0 0.0
      %3294 = vmatprep.subr.mxu0 0.0
      %3295 = vmatpush1.msra.mxu0 0.0
      %3296 = vmatprep.mubr.f32.mxu0 0.0
      %v3297 = vand.u32 %v2891, 4294901760
      %3298 = vmatmul.mubr.f32.gmra.mrb[0].mxu0 %v3297
      %v3299 = vpop.f32.mrb[0].mxu0
      %v3300 = vadd.f32 %v3217, %v3299
      %v3301 = vpop.f32.mrb[0].mxu0
      %3302 = vdwg.mxu0
      %3303 = vmatprep.subr.mxu0 0.0
      %v3304 = vand.u32 %v241, 4294901760
      %3305 = vmatpush1.msra.mxu0 %v3304
      %3306 = vmatprep.subr.mxu0 0.0
      %v3307 = vand.u32 %v242, 4294901760
      %3308 = vmatpush1.msra.mxu0 %v3307
      %3309 = vmatprep.subr.mxu0 0.0
      %v3310 = vand.u32 %v243, 4294901760
      %3311 = vmatpush1.msra.mxu0 %v3310
      %3312 = vmatprep.subr.mxu0 0.0
      %v3313 = vand.u32 %v244, 4294901760
      %3314 = vmatpush1.msra.mxu0 %v3313
      %3315 = vmatprep.subr.mxu0 0.0
      %3316 = vmatpush1.msra.mxu0 0.0
      %3317 = vmatprep.subr.mxu0 0.0
      %3318 = vmatpush1.msra.mxu0 0.0
      %3319 = vmatprep.subr.mxu0 0.0
      %3320 = vmatpush1.msra.mxu0 0.0
      %3321 = vmatprep.subr.mxu0 0.0
      %3322 = vmatpush1.msra.mxu0 0.0
      %3323 = vmatprep.subr.mxu0 0.0
      %3324 = vmatpush1.msra.mxu0 0.0
      %3325 = vmatprep.subr.mxu0 0.0
      %3326 = vmatpush1.msra.mxu0 0.0
      %3327 = vmatprep.subr.mxu0 0.0
      %3328 = vmatpush1.msra.mxu0 0.0
      %3329 = vmatprep.subr.mxu0 0.0
      %3330 = vmatpush1.msra.mxu0 0.0
      %3331 = vmatprep.subr.mxu0 0.0
      %3332 = vmatpush1.msra.mxu0 0.0
      %3333 = vmatprep.subr.mxu0 0.0
      %3334 = vmatpush1.msra.mxu0 0.0
      %3335 = vmatprep.subr.mxu0 0.0
      %3336 = vmatpush1.msra.mxu0 0.0
      %3337 = vmatprep.subr.mxu0 0.0
      %3338 = vmatpush1.msra.mxu0 0.0
      %3339 = vmatprep.subr.mxu0 0.0
      %3340 = vmatpush1.msra.mxu0 0.0
      %3341 = vmatprep.subr.mxu0 0.0
      %3342 = vmatpush1.msra.mxu0 0.0
      %3343 = vmatprep.subr.mxu0 0.0
      %3344 = vmatpush1.msra.mxu0 0.0
      %3345 = vmatprep.subr.mxu0 0.0
      %3346 = vmatpush1.msra.mxu0 0.0
      %3347 = vmatprep.subr.mxu0 0.0
      %3348 = vmatpush1.msra.mxu0 0.0
      %3349 = vmatprep.subr.mxu0 0.0
      %3350 = vmatpush1.msra.mxu0 0.0
      %3351 = vmatprep.subr.mxu0 0.0
      %3352 = vmatpush1.msra.mxu0 0.0
      %3353 = vmatprep.subr.mxu0 0.0
      %3354 = vmatpush1.msra.mxu0 0.0
      %3355 = vmatprep.subr.mxu0 0.0
      %3356 = vmatpush1.msra.mxu0 0.0
      %3357 = vmatprep.subr.mxu0 0.0
      %3358 = vmatpush1.msra.mxu0 0.0
      %3359 = vmatprep.subr.mxu0 0.0
      %3360 = vmatpush1.msra.mxu0 0.0
      %3361 = vmatprep.subr.mxu0 0.0
      %3362 = vmatpush1.msra.mxu0 0.0
      %3363 = vmatprep.subr.mxu0 0.0
      %3364 = vmatpush1.msra.mxu0 0.0
      %3365 = vmatprep.subr.mxu0 0.0
      %3366 = vmatpush1.msra.mxu0 0.0
      %3367 = vmatprep.subr.mxu0 0.0
      %3368 = vmatpush1.msra.mxu0 0.0
      %3369 = vmatprep.subr.mxu0 0.0
      %3370 = vmatpush1.msra.mxu0 0.0
      %3371 = vmatprep.mubr.f32.mxu0 0.0
      %v3372 = vand.u32 %v2891, 4294901760
      %3373 = vmatmul.mubr.f32.gmra.mrb[0].mxu0 %v3372
      %v3374 = vpop.f32.mrb[0].mxu0
      %v3375 = vadd.f32 %v3300, %v3374
      %v3376 = vpop.f32.mrb[0].mxu0
      %3377 = vdwg.mxu0
      %v3379 = vsel %vm449, %v447, 0
      %3381 = vmatprep.subr.mxu0 0.0
      %v3382 = vand.u32 %v245, 4294901760
      %3383 = vmatpush1.msra.mxu0 %v3382
      %3384 = vmatprep.subr.mxu0 0.0
      %v3385 = vand.u32 %v246, 4294901760
      %3386 = vmatpush1.msra.mxu0 %v3385
      %3387 = vmatprep.subr.mxu0 0.0
      %v3388 = vand.u32 %v247, 4294901760
      %3389 = vmatpush1.msra.mxu0 %v3388
      %3390 = vmatprep.subr.mxu0 0.0
      %v3391 = vand.u32 %v248, 4294901760
      %3392 = vmatpush1.msra.mxu0 %v3391
      %3393 = vmatprep.subr.mxu0 0.0
      %3394 = vmatpush1.msra.mxu0 0.0
      %3395 = vmatprep.subr.mxu0 0.0
      %3396 = vmatpush1.msra.mxu0 0.0
      %3397 = vmatprep.subr.mxu0 0.0
      %3398 = vmatpush1.msra.mxu0 0.0
      %3399 = vmatprep.subr.mxu0 0.0
      %3400 = vmatpush1.msra.mxu0 0.0
      %3401 = vmatprep.subr.mxu0 0.0
      %3402 = vmatpush1.msra.mxu0 0.0
      %3403 = vmatprep.subr.mxu0 0.0
      %3404 = vmatpush1.msra.mxu0 0.0
      %3405 = vmatprep.subr.mxu0 0.0
      %3406 = vmatpush1.msra.mxu0 0.0
      %3407 = vmatprep.subr.mxu0 0.0
      %3408 = vmatpush1.msra.mxu0 0.0
      %3409 = vmatprep.subr.mxu0 0.0
      %3410 = vmatpush1.msra.mxu0 0.0
      %3411 = vmatprep.subr.mxu0 0.0
      %3412 = vmatpush1.msra.mxu0 0.0
      %3413 = vmatprep.subr.mxu0 0.0
      %3414 = vmatpush1.msra.mxu0 0.0
      %3415 = vmatprep.subr.mxu0 0.0
      %3416 = vmatpush1.msra.mxu0 0.0
      %3417 = vmatprep.subr.mxu0 0.0
      %3418 = vmatpush1.msra.mxu0 0.0
      %3419 = vmatprep.subr.mxu0 0.0
      %3420 = vmatpush1.msra.mxu0 0.0
      %3421 = vmatprep.subr.mxu0 0.0
      %3422 = vmatpush1.msra.mxu0 0.0
      %3423 = vmatprep.subr.mxu0 0.0
      %3424 = vmatpush1.msra.mxu0 0.0
      %3425 = vmatprep.subr.mxu0 0.0
      %3426 = vmatpush1.msra.mxu0 0.0
      %3427 = vmatprep.subr.mxu0 0.0
      %3428 = vmatpush1.msra.mxu0 0.0
      %3429 = vmatprep.subr.mxu0 0.0
      %3430 = vmatpush1.msra.mxu0 0.0
      %3431 = vmatprep.subr.mxu0 0.0
      %3432 = vmatpush1.msra.mxu0 0.0
      %3433 = vmatprep.subr.mxu0 0.0
      %3434 = vmatpush1.msra.mxu0 0.0
      %3435 = vmatprep.subr.mxu0 0.0
      %3436 = vmatpush1.msra.mxu0 0.0
      %3437 = vmatprep.subr.mxu0 0.0
      %3438 = vmatpush1.msra.mxu0 0.0
      %3439 = vmatprep.subr.mxu0 0.0
      %3440 = vmatpush1.msra.mxu0 0.0
      %3441 = vmatprep.subr.mxu0 0.0
      %3442 = vmatpush1.msra.mxu0 0.0
      %3443 = vmatprep.subr.mxu0 0.0
      %3444 = vmatpush1.msra.mxu0 0.0
      %3445 = vmatprep.subr.mxu0 0.0
      %3446 = vmatpush1.msra.mxu0 0.0
      %3447 = vmatprep.subr.mxu0 0.0
      %3448 = vmatpush1.msra.mxu0 0.0
      %3449 = vmatprep.mubr.f32.mxu0 0.0
      %v3450 = vand.u32 %v3379, 4294901760
      %v3451 = vsub.f32 %v3379, %v3450
      %v3452 = vand.u32 %v3451, 4294901760
      %v3453 = vsub.f32 %v3451, %v3452
      %v3454 = vand.u32 %v3453, 4294901760
      %3455 = vmatmul.mubr.f32.gmra.mrb[0].mxu0 %v3454
      %v3456 = vpop.f32.mrb[0].mxu0
      %v3457 = vadd.f32 0.0, %v3456
      %v3458 = vpop.f32.mrb[0].mxu0
      %3459 = vdwg.mxu0
      %3460 = vmatprep.subr.mxu0 0.0
      %v3461 = vand.u32 %v245, 4294901760
      %v3462 = vsub.f32 %v245, %v3461
      %v3463 = vand.u32 %v3462, 4294901760
      %v3464 = vsub.f32 %v3462, %v3463
      %v3465 = vand.u32 %v3464, 4294901760
      %3466 = vmatpush1.msra.mxu0 %v3465
      %3467 = vmatprep.subr.mxu0 0.0
      %v3468 = vand.u32 %v246, 4294901760
      %v3469 = vsub.f32 %v246, %v3468
      %v3470 = vand.u32 %v3469, 4294901760
      %v3471 = vsub.f32 %v3469, %v3470
      %v3472 = vand.u32 %v3471, 4294901760
      %3473 = vmatpush1.msra.mxu0 %v3472
      %3474 = vmatprep.subr.mxu0 0.0
      %v3475 = vand.u32 %v247, 4294901760
      %v3476 = vsub.f32 %v247, %v3475
      %v3477 = vand.u32 %v3476, 4294901760
      %v3478 = vsub.f32 %v3476, %v3477
      %v3479 = vand.u32 %v3478, 4294901760
      %3480 = vmatpush1.msra.mxu0 %v3479
      %3481 = vmatprep.subr.mxu0 0.0
      %v3482 = vand.u32 %v248, 4294901760
      %v3483 = vsub.f32 %v248, %v3482
      %v3484 = vand.u32 %v3483, 4294901760
      %v3485 = vsub.f32 %v3483, %v3484
      %v3486 = vand.u32 %v3485, 4294901760
      %3487 = vmatpush1.msra.mxu0 %v3486
      %3488 = vmatprep.subr.mxu0 0.0
      %3489 = vmatpush1.msra.mxu0 0.0
      %3490 = vmatprep.subr.mxu0 0.0
      %3491 = vmatpush1.msra.mxu0 0.0
      %3492 = vmatprep.subr.mxu0 0.0
      %3493 = vmatpush1.msra.mxu0 0.0
      %3494 = vmatprep.subr.mxu0 0.0
      %3495 = vmatpush1.msra.mxu0 0.0
      %3496 = vmatprep.subr.mxu0 0.0
      %3497 = vmatpush1.msra.mxu0 0.0
      %3498 = vmatprep.subr.mxu0 0.0
      %3499 = vmatpush1.msra.mxu0 0.0
      %3500 = vmatprep.subr.mxu0 0.0
      %3501 = vmatpush1.msra.mxu0 0.0
      %3502 = vmatprep.subr.mxu0 0.0
      %3503 = vmatpush1.msra.mxu0 0.0
      %3504 = vmatprep.subr.mxu0 0.0
      %3505 = vmatpush1.msra.mxu0 0.0
      %3506 = vmatprep.subr.mxu0 0.0
      %3507 = vmatpush1.msra.mxu0 0.0
      %3508 = vmatprep.subr.mxu0 0.0
      %3509 = vmatpush1.msra.mxu0 0.0
      %3510 = vmatprep.subr.mxu0 0.0
      %3511 = vmatpush1.msra.mxu0 0.0
      %3512 = vmatprep.subr.mxu0 0.0
      %3513 = vmatpush1.msra.mxu0 0.0
      %3514 = vmatprep.subr.mxu0 0.0
      %3515 = vmatpush1.msra.mxu0 0.0
      %3516 = vmatprep.subr.mxu0 0.0
      %3517 = vmatpush1.msra.mxu0 0.0
      %3518 = vmatprep.subr.mxu0 0.0
      %3519 = vmatpush1.msra.mxu0 0.0
      %3520 = vmatprep.subr.mxu0 0.0
      %3521 = vmatpush1.msra.mxu0 0.0
      %3522 = vmatprep.subr.mxu0 0.0
      %3523 = vmatpush1.msra.mxu0 0.0
      %3524 = vmatprep.subr.mxu0 0.0
      %3525 = vmatpush1.msra.mxu0 0.0
      %3526 = vmatprep.subr.mxu0 0.0
      %3527 = vmatpush1.msra.mxu0 0.0
      %3528 = vmatprep.subr.mxu0 0.0
      %3529 = vmatpush1.msra.mxu0 0.0
      %3530 = vmatprep.subr.mxu0 0.0
      %3531 = vmatpush1.msra.mxu0 0.0
      %3532 = vmatprep.subr.mxu0 0.0
      %3533 = vmatpush1.msra.mxu0 0.0
      %3534 = vmatprep.subr.mxu0 0.0
      %3535 = vmatpush1.msra.mxu0 0.0
      %3536 = vmatprep.subr.mxu0 0.0
      %3537 = vmatpush1.msra.mxu0 0.0
      %3538 = vmatprep.subr.mxu0 0.0
      %3539 = vmatpush1.msra.mxu0 0.0
      %3540 = vmatprep.subr.mxu0 0.0
      %3541 = vmatpush1.msra.mxu0 0.0
      %3542 = vmatprep.subr.mxu0 0.0
      %3543 = vmatpush1.msra.mxu0 0.0
      %3544 = vmatprep.mubr.f32.mxu0 0.0
      %v3545 = vand.u32 %v3379, 4294901760
      %3546 = vmatmul.mubr.f32.gmra.mrb[0].mxu0 %v3545
      %v3547 = vpop.f32.mrb[0].mxu0
      %v3548 = vadd.f32 %v3457, %v3547
      %v3549 = vpop.f32.mrb[0].mxu0
      %3550 = vdwg.mxu0
      %3551 = vmatprep.subr.mxu0 0.0
      %v3552 = vand.u32 %v245, 4294901760
      %v3553 = vsub.f32 %v245, %v3552
      %3554 = vmatpush1.msra.mxu0 %v3553
      %3555 = vmatprep.subr.mxu0 0.0
      %v3556 = vand.u32 %v246, 4294901760
      %v3557 = vsub.f32 %v246, %v3556
      %3558 = vmatpush1.msra.mxu0 %v3557
      %3559 = vmatprep.subr.mxu0 0.0
      %v3560 = vand.u32 %v247, 4294901760
      %v3561 = vsub.f32 %v247, %v3560
      %3562 = vmatpush1.msra.mxu0 %v3561
      %3563 = vmatprep.subr.mxu0 0.0
      %v3564 = vand.u32 %v248, 4294901760
      %v3565 = vsub.f32 %v248, %v3564
      %3566 = vmatpush1.msra.mxu0 %v3565
      %3567 = vmatprep.subr.mxu0 0.0
      %3568 = vmatpush1.msra.mxu0 0.0
      %3569 = vmatprep.subr.mxu0 0.0
      %3570 = vmatpush1.msra.mxu0 0.0
      %3571 = vmatprep.subr.mxu0 0.0
      %3572 = vmatpush1.msra.mxu0 0.0
      %3573 = vmatprep.subr.mxu0 0.0
      %3574 = vmatpush1.msra.mxu0 0.0
      %3575 = vmatprep.subr.mxu0 0.0
      %3576 = vmatpush1.msra.mxu0 0.0
      %3577 = vmatprep.subr.mxu0 0.0
      %3578 = vmatpush1.msra.mxu0 0.0
      %3579 = vmatprep.subr.mxu0 0.0
      %3580 = vmatpush1.msra.mxu0 0.0
      %3581 = vmatprep.subr.mxu0 0.0
      %3582 = vmatpush1.msra.mxu0 0.0
      %3583 = vmatprep.subr.mxu0 0.0
      %3584 = vmatpush1.msra.mxu0 0.0
      %3585 = vmatprep.subr.mxu0 0.0
      %3586 = vmatpush1.msra.mxu0 0.0
      %3587 = vmatprep.subr.mxu0 0.0
      %3588 = vmatpush1.msra.mxu0 0.0
      %3589 = vmatprep.subr.mxu0 0.0
      %3590 = vmatpush1.msra.mxu0 0.0
      %3591 = vmatprep.subr.mxu0 0.0
      %3592 = vmatpush1.msra.mxu0 0.0
      %3593 = vmatprep.subr.mxu0 0.0
      %3594 = vmatpush1.msra.mxu0 0.0
      %3595 = vmatprep.subr.mxu0 0.0
      %3596 = vmatpush1.msra.mxu0 0.0
      %3597 = vmatprep.subr.mxu0 0.0
      %3598 = vmatpush1.msra.mxu0 0.0
      %3599 = vmatprep.subr.mxu0 0.0
      %3600 = vmatpush1.msra.mxu0 0.0
      %3601 = vmatprep.subr.mxu0 0.0
      %3602 = vmatpush1.msra.mxu0 0.0
      %3603 = vmatprep.subr.mxu0 0.0
      %3604 = vmatpush1.msra.mxu0 0.0
      %3605 = vmatprep.subr.mxu0 0.0
      %3606 = vmatpush1.msra.mxu0 0.0
      %3607 = vmatprep.subr.mxu0 0.0
      %3608 = vmatpush1.msra.mxu0 0.0
      %3609 = vmatprep.subr.mxu0 0.0
      %3610 = vmatpush1.msra.mxu0 0.0
      %3611 = vmatprep.subr.mxu0 0.0
      %3612 = vmatpush1.msra.mxu0 0.0
      %3613 = vmatprep.subr.mxu0 0.0
      %3614 = vmatpush1.msra.mxu0 0.0
      %3615 = vmatprep.subr.mxu0 0.0
      %3616 = vmatpush1.msra.mxu0 0.0
      %3617 = vmatprep.subr.mxu0 0.0
      %3618 = vmatpush1.msra.mxu0 0.0
      %3619 = vmatprep.subr.mxu0 0.0
      %3620 = vmatpush1.msra.mxu0 0.0
      %3621 = vmatprep.subr.mxu0 0.0
      %3622 = vmatpush1.msra.mxu0 0.0
      %3623 = vmatprep.mubr.f32.mxu0 0.0
      %v3624 = vand.u32 %v3379, 4294901760
      %v3625 = vsub.f32 %v3379, %v3624
      %3626 = vmatmul.mubr.f32.gmra.mrb[0].mxu0 %v3625
      %v3627 = vpop.f32.mrb[0].mxu0
      %v3628 = vadd.f32 %v3548, %v3627
      %v3629 = vpop.f32.mrb[0].mxu0
      %3630 = vdwg.mxu0
      %3631 = vmatprep.subr.mxu0 0.0
      %v3632 = vand.u32 %v245, 4294901760
      %3633 = vmatpush1.msra.mxu0 %v3632
      %3634 = vmatprep.subr.mxu0 0.0
      %v3635 = vand.u32 %v246, 4294901760
      %3636 = vmatpush1.msra.mxu0 %v3635
      %3637 = vmatprep.subr.mxu0 0.0
      %v3638 = vand.u32 %v247, 4294901760
      %3639 = vmatpush1.msra.mxu0 %v3638
      %3640 = vmatprep.subr.mxu0 0.0
      %v3641 = vand.u32 %v248, 4294901760
      %3642 = vmatpush1.msra.mxu0 %v3641
      %3643 = vmatprep.subr.mxu0 0.0
      %3644 = vmatpush1.msra.mxu0 0.0
      %3645 = vmatprep.subr.mxu0 0.0
      %3646 = vmatpush1.msra.mxu0 0.0
      %3647 = vmatprep.subr.mxu0 0.0
      %3648 = vmatpush1.msra.mxu0 0.0
      %3649 = vmatprep.subr.mxu0 0.0
      %3650 = vmatpush1.msra.mxu0 0.0
      %3651 = vmatprep.subr.mxu0 0.0
      %3652 = vmatpush1.msra.mxu0 0.0
      %3653 = vmatprep.subr.mxu0 0.0
      %3654 = vmatpush1.msra.mxu0 0.0
      %3655 = vmatprep.subr.mxu0 0.0
      %3656 = vmatpush1.msra.mxu0 0.0
      %3657 = vmatprep.subr.mxu0 0.0
      %3658 = vmatpush1.msra.mxu0 0.0
      %3659 = vmatprep.subr.mxu0 0.0
      %3660 = vmatpush1.msra.mxu0 0.0
      %3661 = vmatprep.subr.mxu0 0.0
      %3662 = vmatpush1.msra.mxu0 0.0
      %3663 = vmatprep.subr.mxu0 0.0
      %3664 = vmatpush1.msra.mxu0 0.0
      %3665 = vmatprep.subr.mxu0 0.0
      %3666 = vmatpush1.msra.mxu0 0.0
      %3667 = vmatprep.subr.mxu0 0.0
      %3668 = vmatpush1.msra.mxu0 0.0
      %3669 = vmatprep.subr.mxu0 0.0
      %3670 = vmatpush1.msra.mxu0 0.0
      %3671 = vmatprep.subr.mxu0 0.0
      %3672 = vmatpush1.msra.mxu0 0.0
      %3673 = vmatprep.subr.mxu0 0.0
      %3674 = vmatpush1.msra.mxu0 0.0
      %3675 = vmatprep.subr.mxu0 0.0
      %3676 = vmatpush1.msra.mxu0 0.0
      %3677 = vmatprep.subr.mxu0 0.0
      %3678 = vmatpush1.msra.mxu0 0.0
      %3679 = vmatprep.subr.mxu0 0.0
      %3680 = vmatpush1.msra.mxu0 0.0
      %3681 = vmatprep.subr.mxu0 0.0
      %3682 = vmatpush1.msra.mxu0 0.0
      %3683 = vmatprep.subr.mxu0 0.0
      %3684 = vmatpush1.msra.mxu0 0.0
      %3685 = vmatprep.subr.mxu0 0.0
      %3686 = vmatpush1.msra.mxu0 0.0
      %3687 = vmatprep.subr.mxu0 0.0
      %3688 = vmatpush1.msra.mxu0 0.0
      %3689 = vmatprep.subr.mxu0 0.0
      %3690 = vmatpush1.msra.mxu0 0.0
      %3691 = vmatprep.subr.mxu0 0.0
      %3692 = vmatpush1.msra.mxu0 0.0
      %3693 = vmatprep.subr.mxu0 0.0
      %3694 = vmatpush1.msra.mxu0 0.0
      %3695 = vmatprep.subr.mxu0 0.0
      %3696 = vmatpush1.msra.mxu0 0.0
      %3697 = vmatprep.subr.mxu0 0.0
      %3698 = vmatpush1.msra.mxu0 0.0
      %3699 = vmatprep.mubr.f32.mxu0 0.0
      %v3700 = vand.u32 %v3379, 4294901760
      %v3701 = vsub.f32 %v3379, %v3700
      %v3702 = vand.u32 %v3701, 4294901760
      %3703 = vmatmul.mubr.f32.gmra.mrb[0].mxu0 %v3702
      %v3704 = vpop.f32.mrb[0].mxu0
      %v3705 = vadd.f32 %v3628, %v3704
      %v3706 = vpop.f32.mrb[0].mxu0
      %3707 = vdwg.mxu0
      %3708 = vmatprep.subr.mxu0 0.0
      %v3709 = vand.u32 %v245, 4294901760
      %v3710 = vsub.f32 %v245, %v3709
      %v3711 = vand.u32 %v3710, 4294901760
      %3712 = vmatpush1.msra.mxu0 %v3711
      %3713 = vmatprep.subr.mxu0 0.0
      %v3714 = vand.u32 %v246, 4294901760
      %v3715 = vsub.f32 %v246, %v3714
      %v3716 = vand.u32 %v3715, 4294901760
      %3717 = vmatpush1.msra.mxu0 %v3716
      %3718 = vmatprep.subr.mxu0 0.0
      %v3719 = vand.u32 %v247, 4294901760
      %v3720 = vsub.f32 %v247, %v3719
      %v3721 = vand.u32 %v3720, 4294901760
      %3722 = vmatpush1.msra.mxu0 %v3721
      %3723 = vmatprep.subr.mxu0 0.0
      %v3724 = vand.u32 %v248, 4294901760
      %v3725 = vsub.f32 %v248, %v3724
      %v3726 = vand.u32 %v3725, 4294901760
      %3727 = vmatpush1.msra.mxu0 %v3726
      %3728 = vmatprep.subr.mxu0 0.0
      %3729 = vmatpush1.msra.mxu0 0.0
      %3730 = vmatprep.subr.mxu0 0.0
      %3731 = vmatpush1.msra.mxu0 0.0
      %3732 = vmatprep.subr.mxu0 0.0
      %3733 = vmatpush1.msra.mxu0 0.0
      %3734 = vmatprep.subr.mxu0 0.0
      %3735 = vmatpush1.msra.mxu0 0.0
      %3736 = vmatprep.subr.mxu0 0.0
      %3737 = vmatpush1.msra.mxu0 0.0
      %3738 = vmatprep.subr.mxu0 0.0
      %3739 = vmatpush1.msra.mxu0 0.0
      %3740 = vmatprep.subr.mxu0 0.0
      %3741 = vmatpush1.msra.mxu0 0.0
      %3742 = vmatprep.subr.mxu0 0.0
      %3743 = vmatpush1.msra.mxu0 0.0
      %3744 = vmatprep.subr.mxu0 0.0
      %3745 = vmatpush1.msra.mxu0 0.0
      %3746 = vmatprep.subr.mxu0 0.0
      %3747 = vmatpush1.msra.mxu0 0.0
      %3748 = vmatprep.subr.mxu0 0.0
      %3749 = vmatpush1.msra.mxu0 0.0
      %3750 = vmatprep.subr.mxu0 0.0
      %3751 = vmatpush1.msra.mxu0 0.0
      %3752 = vmatprep.subr.mxu0 0.0
      %3753 = vmatpush1.msra.mxu0 0.0
      %3754 = vmatprep.subr.mxu0 0.0
      %3755 = vmatpush1.msra.mxu0 0.0
      %3756 = vmatprep.subr.mxu0 0.0
      %3757 = vmatpush1.msra.mxu0 0.0
      %3758 = vmatprep.subr.mxu0 0.0
      %3759 = vmatpush1.msra.mxu0 0.0
      %3760 = vmatprep.subr.mxu0 0.0
      %3761 = vmatpush1.msra.mxu0 0.0
      %3762 = vmatprep.subr.mxu0 0.0
      %3763 = vmatpush1.msra.mxu0 0.0
      %3764 = vmatprep.subr.mxu0 0.0
      %3765 = vmatpush1.msra.mxu0 0.0
      %3766 = vmatprep.subr.mxu0 0.0
      %3767 = vmatpush1.msra.mxu0 0.0
      %3768 = vmatprep.subr.mxu0 0.0
      %3769 = vmatpush1.msra.mxu0 0.0
      %3770 = vmatprep.subr.mxu0 0.0
      %3771 = vmatpush1.msra.mxu0 0.0
      %3772 = vmatprep.subr.mxu0 0.0
      %3773 = vmatpush1.msra.mxu0 0.0
      %3774 = vmatprep.subr.mxu0 0.0
      %3775 = vmatpush1.msra.mxu0 0.0
      %3776 = vmatprep.subr.mxu0 0.0
      %3777 = vmatpush1.msra.mxu0 0.0
      %3778 = vmatprep.subr.mxu0 0.0
      %3779 = vmatpush1.msra.mxu0 0.0
      %3780 = vmatprep.subr.mxu0 0.0
      %3781 = vmatpush1.msra.mxu0 0.0
      %3782 = vmatprep.subr.mxu0 0.0
      %3783 = vmatpush1.msra.mxu0 0.0
      %3784 = vmatprep.mubr.f32.mxu0 0.0
      %v3785 = vand.u32 %v3379, 4294901760
      %3786 = vmatmul.mubr.f32.gmra.mrb[0].mxu0 %v3785
      %v3787 = vpop.f32.mrb[0].mxu0
      %v3788 = vadd.f32 %v3705, %v3787
      %v3789 = vpop.f32.mrb[0].mxu0
      %3790 = vdwg.mxu0
      %3791 = vmatprep.subr.mxu0 0.0
      %v3792 = vand.u32 %v245, 4294901760
      %3793 = vmatpush1.msra.mxu0 %v3792
      %3794 = vmatprep.subr.mxu0 0.0
      %v3795 = vand.u32 %v246, 4294901760
      %3796 = vmatpush1.msra.mxu0 %v3795
      %3797 = vmatprep.subr.mxu0 0.0
      %v3798 = vand.u32 %v247, 4294901760
      %3799 = vmatpush1.msra.mxu0 %v3798
      %3800 = vmatprep.subr.mxu0 0.0
      %v3801 = vand.u32 %v248, 4294901760
      %3802 = vmatpush1.msra.mxu0 %v3801
      %3803 = vmatprep.subr.mxu0 0.0
      %3804 = vmatpush1.msra.mxu0 0.0
      %3805 = vmatprep.subr.mxu0 0.0
      %3806 = vmatpush1.msra.mxu0 0.0
      %3807 = vmatprep.subr.mxu0 0.0
      %3808 = vmatpush1.msra.mxu0 0.0
      %3809 = vmatprep.subr.mxu0 0.0
      %3810 = vmatpush1.msra.mxu0 0.0
      %3811 = vmatprep.subr.mxu0 0.0
      %3812 = vmatpush1.msra.mxu0 0.0
      %3813 = vmatprep.subr.mxu0 0.0
      %3814 = vmatpush1.msra.mxu0 0.0
      %3815 = vmatprep.subr.mxu0 0.0
      %3816 = vmatpush1.msra.mxu0 0.0
      %3817 = vmatprep.subr.mxu0 0.0
      %3818 = vmatpush1.msra.mxu0 0.0
      %3819 = vmatprep.subr.mxu0 0.0
      %3820 = vmatpush1.msra.mxu0 0.0
      %3821 = vmatprep.subr.mxu0 0.0
      %3822 = vmatpush1.msra.mxu0 0.0
      %3823 = vmatprep.subr.mxu0 0.0
      %3824 = vmatpush1.msra.mxu0 0.0
      %3825 = vmatprep.subr.mxu0 0.0
      %3826 = vmatpush1.msra.mxu0 0.0
      %3827 = vmatprep.subr.mxu0 0.0
      %3828 = vmatpush1.msra.mxu0 0.0
      %3829 = vmatprep.subr.mxu0 0.0
      %3830 = vmatpush1.msra.mxu0 0.0
      %3831 = vmatprep.subr.mxu0 0.0
      %3832 = vmatpush1.msra.mxu0 0.0
      %3833 = vmatprep.subr.mxu0 0.0
      %3834 = vmatpush1.msra.mxu0 0.0
      %3835 = vmatprep.subr.mxu0 0.0
      %3836 = vmatpush1.msra.mxu0 0.0
      %3837 = vmatprep.subr.mxu0 0.0
      %3838 = vmatpush1.msra.mxu0 0.0
      %3839 = vmatprep.subr.mxu0 0.0
      %3840 = vmatpush1.msra.mxu0 0.0
      %3841 = vmatprep.subr.mxu0 0.0
      %3842 = vmatpush1.msra.mxu0 0.0
      %3843 = vmatprep.subr.mxu0 0.0
      %3844 = vmatpush1.msra.mxu0 0.0
      %3845 = vmatprep.subr.mxu0 0.0
      %3846 = vmatpush1.msra.mxu0 0.0
      %3847 = vmatprep.subr.mxu0 0.0
      %3848 = vmatpush1.msra.mxu0 0.0
      %3849 = vmatprep.subr.mxu0 0.0
      %3850 = vmatpush1.msra.mxu0 0.0
      %3851 = vmatprep.subr.mxu0 0.0
      %3852 = vmatpush1.msra.mxu0 0.0
      %3853 = vmatprep.subr.mxu0 0.0
      %3854 = vmatpush1.msra.mxu0 0.0
      %3855 = vmatprep.subr.mxu0 0.0
      %3856 = vmatpush1.msra.mxu0 0.0
      %3857 = vmatprep.subr.mxu0 0.0
      %3858 = vmatpush1.msra.mxu0 0.0
      %3859 = vmatprep.mubr.f32.mxu0 0.0
      %v3860 = vand.u32 %v3379, 4294901760
      %3861 = vmatmul.mubr.f32.gmra.mrb[0].mxu0 %v3860
      %v3862 = vpop.f32.mrb[0].mxu0
      %v3863 = vadd.f32 %v3788, %v3862
      %v3864 = vpop.f32.mrb[0].mxu0
      %3865 = vdwg.mxu0
      %v3867 = vsel %vm449, %v448, 0
      %3869 = vmatprep.subr.mxu0 0.0
      %v3870 = vand.u32 %v249, 4294901760
      %3871 = vmatpush1.msra.mxu0 %v3870
      %3872 = vmatprep.subr.mxu0 0.0
      %v3873 = vand.u32 %v250, 4294901760
      %3874 = vmatpush1.msra.mxu0 %v3873
      %3875 = vmatprep.subr.mxu0 0.0
      %v3876 = vand.u32 %v251, 4294901760
      %3877 = vmatpush1.msra.mxu0 %v3876
      %3878 = vmatprep.subr.mxu0 0.0
      %v3879 = vand.u32 %v252, 4294901760
      %3880 = vmatpush1.msra.mxu0 %v3879
      %3881 = vmatprep.subr.mxu0 0.0
      %3882 = vmatpush1.msra.mxu0 0.0
      %3883 = vmatprep.subr.mxu0 0.0
      %3884 = vmatpush1.msra.mxu0 0.0
      %3885 = vmatprep.subr.mxu0 0.0
      %3886 = vmatpush1.msra.mxu0 0.0
      %3887 = vmatprep.subr.mxu0 0.0
      %3888 = vmatpush1.msra.mxu0 0.0
      %3889 = vmatprep.subr.mxu0 0.0
      %3890 = vmatpush1.msra.mxu0 0.0
      %3891 = vmatprep.subr.mxu0 0.0
      %3892 = vmatpush1.msra.mxu0 0.0
      %3893 = vmatprep.subr.mxu0 0.0
      %3894 = vmatpush1.msra.mxu0 0.0
      %3895 = vmatprep.subr.mxu0 0.0
      %3896 = vmatpush1.msra.mxu0 0.0
      %3897 = vmatprep.subr.mxu0 0.0
      %3898 = vmatpush1.msra.mxu0 0.0
      %3899 = vmatprep.subr.mxu0 0.0
      %3900 = vmatpush1.msra.mxu0 0.0
      %3901 = vmatprep.subr.mxu0 0.0
      %3902 = vmatpush1.msra.mxu0 0.0
      %3903 = vmatprep.subr.mxu0 0.0
      %3904 = vmatpush1.msra.mxu0 0.0
      %3905 = vmatprep.subr.mxu0 0.0
      %3906 = vmatpush1.msra.mxu0 0.0
      %3907 = vmatprep.subr.mxu0 0.0
      %3908 = vmatpush1.msra.mxu0 0.0
      %3909 = vmatprep.subr.mxu0 0.0
      %3910 = vmatpush1.msra.mxu0 0.0
      %3911 = vmatprep.subr.mxu0 0.0
      %3912 = vmatpush1.msra.mxu0 0.0
      %3913 = vmatprep.subr.mxu0 0.0
      %3914 = vmatpush1.msra.mxu0 0.0
      %3915 = vmatprep.subr.mxu0 0.0
      %3916 = vmatpush1.msra.mxu0 0.0
      %3917 = vmatprep.subr.mxu0 0.0
      %3918 = vmatpush1.msra.mxu0 0.0
      %3919 = vmatprep.subr.mxu0 0.0
      %3920 = vmatpush1.msra.mxu0 0.0
      %3921 = vmatprep.subr.mxu0 0.0
      %3922 = vmatpush1.msra.mxu0 0.0
      %3923 = vmatprep.subr.mxu0 0.0
      %3924 = vmatpush1.msra.mxu0 0.0
      %3925 = vmatprep.subr.mxu0 0.0
      %3926 = vmatpush1.msra.mxu0 0.0
      %3927 = vmatprep.subr.mxu0 0.0
      %3928 = vmatpush1.msra.mxu0 0.0
      %3929 = vmatprep.subr.mxu0 0.0
      %3930 = vmatpush1.msra.mxu0 0.0
      %3931 = vmatprep.subr.mxu0 0.0
      %3932 = vmatpush1.msra.mxu0 0.0
      %3933 = vmatprep.subr.mxu0 0.0
      %3934 = vmatpush1.msra.mxu0 0.0
      %3935 = vmatprep.subr.mxu0 0.0
      %3936 = vmatpush1.msra.mxu0 0.0
      %3937 = vmatprep.mubr.f32.mxu0 0.0
      %v3938 = vand.u32 %v3867, 4294901760
      %v3939 = vsub.f32 %v3867, %v3938
      %v3940 = vand.u32 %v3939, 4294901760
      %v3941 = vsub.f32 %v3939, %v3940
      %v3942 = vand.u32 %v3941, 4294901760
      %3943 = vmatmul.mubr.f32.gmra.mrb[0].mxu0 %v3942
      %v3944 = vpop.f32.mrb[0].mxu0
      %v3945 = vadd.f32 0.0, %v3944
      %v3946 = vpop.f32.mrb[0].mxu0
      %3947 = vdwg.mxu0
      %3948 = vmatprep.subr.mxu0 0.0
      %v3949 = vand.u32 %v249, 4294901760
      %v3950 = vsub.f32 %v249, %v3949
      %v3951 = vand.u32 %v3950, 4294901760
      %v3952 = vsub.f32 %v3950, %v3951
      %v3953 = vand.u32 %v3952, 4294901760
      %3954 = vmatpush1.msra.mxu0 %v3953
      %3955 = vmatprep.subr.mxu0 0.0
      %v3956 = vand.u32 %v250, 4294901760
      %v3957 = vsub.f32 %v250, %v3956
      %v3958 = vand.u32 %v3957, 4294901760
      %v3959 = vsub.f32 %v3957, %v3958
      %v3960 = vand.u32 %v3959, 4294901760
      %3961 = vmatpush1.msra.mxu0 %v3960
      %3962 = vmatprep.subr.mxu0 0.0
      %v3963 = vand.u32 %v251, 4294901760
      %v3964 = vsub.f32 %v251, %v3963
      %v3965 = vand.u32 %v3964, 4294901760
      %v3966 = vsub.f32 %v3964, %v3965
      %v3967 = vand.u32 %v3966, 4294901760
      %3968 = vmatpush1.msra.mxu0 %v3967
      %3969 = vmatprep.subr.mxu0 0.0
      %v3970 = vand.u32 %v252, 4294901760
      %v3971 = vsub.f32 %v252, %v3970
      %v3972 = vand.u32 %v3971, 4294901760
      %v3973 = vsub.f32 %v3971, %v3972
      %v3974 = vand.u32 %v3973, 4294901760
      %3975 = vmatpush1.msra.mxu0 %v3974
      %3976 = vmatprep.subr.mxu0 0.0
      %3977 = vmatpush1.msra.mxu0 0.0
      %3978 = vmatprep.subr.mxu0 0.0
      %3979 = vmatpush1.msra.mxu0 0.0
      %3980 = vmatprep.subr.mxu0 0.0
      %3981 = vmatpush1.msra.mxu0 0.0
      %3982 = vmatprep.subr.mxu0 0.0
      %3983 = vmatpush1.msra.mxu0 0.0
      %3984 = vmatprep.subr.mxu0 0.0
      %3985 = vmatpush1.msra.mxu0 0.0
      %3986 = vmatprep.subr.mxu0 0.0
      %3987 = vmatpush1.msra.mxu0 0.0
      %3988 = vmatprep.subr.mxu0 0.0
      %3989 = vmatpush1.msra.mxu0 0.0
      %3990 = vmatprep.subr.mxu0 0.0
      %3991 = vmatpush1.msra.mxu0 0.0
      %3992 = vmatprep.subr.mxu0 0.0
      %3993 = vmatpush1.msra.mxu0 0.0
      %3994 = vmatprep.subr.mxu0 0.0
      %3995 = vmatpush1.msra.mxu0 0.0
      %3996 = vmatprep.subr.mxu0 0.0
      %3997 = vmatpush1.msra.mxu0 0.0
      %3998 = vmatprep.subr.mxu0 0.0
      %3999 = vmatpush1.msra.mxu0 0.0
      %4000 = vmatprep.subr.mxu0 0.0
      %4001 = vmatpush1.msra.mxu0 0.0
      %4002 = vmatprep.subr.mxu0 0.0
      %4003 = vmatpush1.msra.mxu0 0.0
      %4004 = vmatprep.subr.mxu0 0.0
      %4005 = vmatpush1.msra.mxu0 0.0
      %4006 = vmatprep.subr.mxu0 0.0
      %4007 = vmatpush1.msra.mxu0 0.0
      %4008 = vmatprep.subr.mxu0 0.0
      %4009 = vmatpush1.msra.mxu0 0.0
      %4010 = vmatprep.subr.mxu0 0.0
      %4011 = vmatpush1.msra.mxu0 0.0
      %4012 = vmatprep.subr.mxu0 0.0
      %4013 = vmatpush1.msra.mxu0 0.0
      %4014 = vmatprep.subr.mxu0 0.0
      %4015 = vmatpush1.msra.mxu0 0.0
      %4016 = vmatprep.subr.mxu0 0.0
      %4017 = vmatpush1.msra.mxu0 0.0
      %4018 = vmatprep.subr.mxu0 0.0
      %4019 = vmatpush1.msra.mxu0 0.0
      %4020 = vmatprep.subr.mxu0 0.0
      %4021 = vmatpush1.msra.mxu0 0.0
      %4022 = vmatprep.subr.mxu0 0.0
      %4023 = vmatpush1.msra.mxu0 0.0
      %4024 = vmatprep.subr.mxu0 0.0
      %4025 = vmatpush1.msra.mxu0 0.0
      %4026 = vmatprep.subr.mxu0 0.0
      %4027 = vmatpush1.msra.mxu0 0.0
      %4028 = vmatprep.subr.mxu0 0.0
      %4029 = vmatpush1.msra.mxu0 0.0
      %4030 = vmatprep.subr.mxu0 0.0
      %4031 = vmatpush1.msra.mxu0 0.0
      %4032 = vmatprep.mubr.f32.mxu0 0.0
      %v4033 = vand.u32 %v3867, 4294901760
      %4034 = vmatmul.mubr.f32.gmra.mrb[0].mxu0 %v4033
      %v4035 = vpop.f32.mrb[0].mxu0
      %v4036 = vadd.f32 %v3945, %v4035
      %v4037 = vpop.f32.mrb[0].mxu0
      %4038 = vdwg.mxu0
      %4039 = vmatprep.subr.mxu0 0.0
      %v4040 = vand.u32 %v249, 4294901760
      %v4041 = vsub.f32 %v249, %v4040
      %4042 = vmatpush1.msra.mxu0 %v4041
      %4043 = vmatprep.subr.mxu0 0.0
      %v4044 = vand.u32 %v250, 4294901760
      %v4045 = vsub.f32 %v250, %v4044
      %4046 = vmatpush1.msra.mxu0 %v4045
      %4047 = vmatprep.subr.mxu0 0.0
      %v4048 = vand.u32 %v251, 4294901760
      %v4049 = vsub.f32 %v251, %v4048
      %4050 = vmatpush1.msra.mxu0 %v4049
      %4051 = vmatprep.subr.mxu0 0.0
      %v4052 = vand.u32 %v252, 4294901760
      %v4053 = vsub.f32 %v252, %v4052
      %4054 = vmatpush1.msra.mxu0 %v4053
      %4055 = vmatprep.subr.mxu0 0.0
      %4056 = vmatpush1.msra.mxu0 0.0
      %4057 = vmatprep.subr.mxu0 0.0
      %4058 = vmatpush1.msra.mxu0 0.0
      %4059 = vmatprep.subr.mxu0 0.0
      %4060 = vmatpush1.msra.mxu0 0.0
      %4061 = vmatprep.subr.mxu0 0.0
      %4062 = vmatpush1.msra.mxu0 0.0
      %4063 = vmatprep.subr.mxu0 0.0
      %4064 = vmatpush1.msra.mxu0 0.0
      %4065 = vmatprep.subr.mxu0 0.0
      %4066 = vmatpush1.msra.mxu0 0.0
      %4067 = vmatprep.subr.mxu0 0.0
      %4068 = vmatpush1.msra.mxu0 0.0
      %4069 = vmatprep.subr.mxu0 0.0
      %4070 = vmatpush1.msra.mxu0 0.0
      %4071 = vmatprep.subr.mxu0 0.0
      %4072 = vmatpush1.msra.mxu0 0.0
      %4073 = vmatprep.subr.mxu0 0.0
      %4074 = vmatpush1.msra.mxu0 0.0
      %4075 = vmatprep.subr.mxu0 0.0
      %4076 = vmatpush1.msra.mxu0 0.0
      %4077 = vmatprep.subr.mxu0 0.0
      %4078 = vmatpush1.msra.mxu0 0.0
      %4079 = vmatprep.subr.mxu0 0.0
      %4080 = vmatpush1.msra.mxu0 0.0
      %4081 = vmatprep.subr.mxu0 0.0
      %4082 = vmatpush1.msra.mxu0 0.0
      %4083 = vmatprep.subr.mxu0 0.0
      %4084 = vmatpush1.msra.mxu0 0.0
      %4085 = vmatprep.subr.mxu0 0.0
      %4086 = vmatpush1.msra.mxu0 0.0
      %4087 = vmatprep.subr.mxu0 0.0
      %4088 = vmatpush1.msra.mxu0 0.0
      %4089 = vmatprep.subr.mxu0 0.0
      %4090 = vmatpush1.msra.mxu0 0.0
      %4091 = vmatprep.subr.mxu0 0.0
      %4092 = vmatpush1.msra.mxu0 0.0
      %4093 = vmatprep.subr.mxu0 0.0
      %4094 = vmatpush1.msra.mxu0 0.0
      %4095 = vmatprep.subr.mxu0 0.0
      %4096 = vmatpush1.msra.mxu0 0.0
      %4097 = vmatprep.subr.mxu0 0.0
      %4098 = vmatpush1.msra.mxu0 0.0
      %4099 = vmatprep.subr.mxu0 0.0
      %4100 = vmatpush1.msra.mxu0 0.0
      %4101 = vmatprep.subr.mxu0 0.0
      %4102 = vmatpush1.msra.mxu0 0.0
      %4103 = vmatprep.subr.mxu0 0.0
      %4104 = vmatpush1.msra.mxu0 0.0
      %4105 = vmatprep.subr.mxu0 0.0
      %4106 = vmatpush1.msra.mxu0 0.0
      %4107 = vmatprep.subr.mxu0 0.0
      %4108 = vmatpush1.msra.mxu0 0.0
      %4109 = vmatprep.subr.mxu0 0.0
      %4110 = vmatpush1.msra.mxu0 0.0
      %4111 = vmatprep.mubr.f32.mxu0 0.0
      %v4112 = vand.u32 %v3867, 4294901760
      %v4113 = vsub.f32 %v3867, %v4112
      %4114 = vmatmul.mubr.f32.gmra.mrb[0].mxu0 %v4113
      %v4115 = vpop.f32.mrb[0].mxu0
      %v4116 = vadd.f32 %v4036, %v4115
      %v4117 = vpop.f32.mrb[0].mxu0
      %4118 = vdwg.mxu0
      %4119 = vmatprep.subr.mxu0 0.0
      %v4120 = vand.u32 %v249, 4294901760
      %4121 = vmatpush1.msra.mxu0 %v4120
      %4122 = vmatprep.subr.mxu0 0.0
      %v4123 = vand.u32 %v250, 4294901760
      %4124 = vmatpush1.msra.mxu0 %v4123
      %4125 = vmatprep.subr.mxu0 0.0
      %v4126 = vand.u32 %v251, 4294901760
      %4127 = vmatpush1.msra.mxu0 %v4126
      %4128 = vmatprep.subr.mxu0 0.0
      %v4129 = vand.u32 %v252, 4294901760
      %4130 = vmatpush1.msra.mxu0 %v4129
      %4131 = vmatprep.subr.mxu0 0.0
      %4132 = vmatpush1.msra.mxu0 0.0
      %4133 = vmatprep.subr.mxu0 0.0
      %4134 = vmatpush1.msra.mxu0 0.0
      %4135 = vmatprep.subr.mxu0 0.0
      %4136 = vmatpush1.msra.mxu0 0.0
      %4137 = vmatprep.subr.mxu0 0.0
      %4138 = vmatpush1.msra.mxu0 0.0
      %4139 = vmatprep.subr.mxu0 0.0
      %4140 = vmatpush1.msra.mxu0 0.0
      %4141 = vmatprep.subr.mxu0 0.0
      %4142 = vmatpush1.msra.mxu0 0.0
      %4143 = vmatprep.subr.mxu0 0.0
      %4144 = vmatpush1.msra.mxu0 0.0
      %4145 = vmatprep.subr.mxu0 0.0
      %4146 = vmatpush1.msra.mxu0 0.0
      %4147 = vmatprep.subr.mxu0 0.0
      %4148 = vmatpush1.msra.mxu0 0.0
      %4149 = vmatprep.subr.mxu0 0.0
      %4150 = vmatpush1.msra.mxu0 0.0
      %4151 = vmatprep.subr.mxu0 0.0
      %4152 = vmatpush1.msra.mxu0 0.0
      %4153 = vmatprep.subr.mxu0 0.0
      %4154 = vmatpush1.msra.mxu0 0.0
      %4155 = vmatprep.subr.mxu0 0.0
      %4156 = vmatpush1.msra.mxu0 0.0
      %4157 = vmatprep.subr.mxu0 0.0
      %4158 = vmatpush1.msra.mxu0 0.0
      %4159 = vmatprep.subr.mxu0 0.0
      %4160 = vmatpush1.msra.mxu0 0.0
      %4161 = vmatprep.subr.mxu0 0.0
      %4162 = vmatpush1.msra.mxu0 0.0
      %4163 = vmatprep.subr.mxu0 0.0
      %4164 = vmatpush1.msra.mxu0 0.0
      %4165 = vmatprep.subr.mxu0 0.0
      %4166 = vmatpush1.msra.mxu0 0.0
      %4167 = vmatprep.subr.mxu0 0.0
      %4168 = vmatpush1.msra.mxu0 0.0
      %4169 = vmatprep.subr.mxu0 0.0
      %4170 = vmatpush1.msra.mxu0 0.0
      %4171 = vmatprep.subr.mxu0 0.0
      %4172 = vmatpush1.msra.mxu0 0.0
      %4173 = vmatprep.subr.mxu0 0.0
      %4174 = vmatpush1.msra.mxu0 0.0
      %4175 = vmatprep.subr.mxu0 0.0
      %4176 = vmatpush1.msra.mxu0 0.0
      %4177 = vmatprep.subr.mxu0 0.0
      %4178 = vmatpush1.msra.mxu0 0.0
      %4179 = vmatprep.subr.mxu0 0.0
      %4180 = vmatpush1.msra.mxu0 0.0
      %4181 = vmatprep.subr.mxu0 0.0
      %4182 = vmatpush1.msra.mxu0 0.0
      %4183 = vmatprep.subr.mxu0 0.0
      %4184 = vmatpush1.msra.mxu0 0.0
      %4185 = vmatprep.subr.mxu0 0.0
      %4186 = vmatpush1.msra.mxu0 0.0
      %4187 = vmatprep.mubr.f32.mxu0 0.0
      %v4188 = vand.u32 %v3867, 4294901760
      %v4189 = vsub.f32 %v3867, %v4188
      %v4190 = vand.u32 %v4189, 4294901760
      %4191 = vmatmul.mubr.f32.gmra.mrb[0].mxu0 %v4190
      %v4192 = vpop.f32.mrb[0].mxu0
      %v4193 = vadd.f32 %v4116, %v4192
      %v4194 = vpop.f32.mrb[0].mxu0
      %4195 = vdwg.mxu0
      %4196 = vmatprep.subr.mxu0 0.0
      %v4197 = vand.u32 %v249, 4294901760
      %v4198 = vsub.f32 %v249, %v4197
      %v4199 = vand.u32 %v4198, 4294901760
      %4200 = vmatpush1.msra.mxu0 %v4199
      %4201 = vmatprep.subr.mxu0 0.0
      %v4202 = vand.u32 %v250, 4294901760
      %v4203 = vsub.f32 %v250, %v4202
      %v4204 = vand.u32 %v4203, 4294901760
      %4205 = vmatpush1.msra.mxu0 %v4204
      %4206 = vmatprep.subr.mxu0 0.0
      %v4207 = vand.u32 %v251, 4294901760
      %v4208 = vsub.f32 %v251, %v4207
      %v4209 = vand.u32 %v4208, 4294901760
      %4210 = vmatpush1.msra.mxu0 %v4209
      %4211 = vmatprep.subr.mxu0 0.0
      %v4212 = vand.u32 %v252, 4294901760
      %v4213 = vsub.f32 %v252, %v4212
      %v4214 = vand.u32 %v4213, 4294901760
      %4215 = vmatpush1.msra.mxu0 %v4214
      %4216 = vmatprep.subr.mxu0 0.0
      %4217 = vmatpush1.msra.mxu0 0.0
      %4218 = vmatprep.subr.mxu0 0.0
      %4219 = vmatpush1.msra.mxu0 0.0
      %4220 = vmatprep.subr.mxu0 0.0
      %4221 = vmatpush1.msra.mxu0 0.0
      %4222 = vmatprep.subr.mxu0 0.0
      %4223 = vmatpush1.msra.mxu0 0.0
      %4224 = vmatprep.subr.mxu0 0.0
      %4225 = vmatpush1.msra.mxu0 0.0
      %4226 = vmatprep.subr.mxu0 0.0
      %4227 = vmatpush1.msra.mxu0 0.0
      %4228 = vmatprep.subr.mxu0 0.0
      %4229 = vmatpush1.msra.mxu0 0.0
      %4230 = vmatprep.subr.mxu0 0.0
      %4231 = vmatpush1.msra.mxu0 0.0
      %4232 = vmatprep.subr.mxu0 0.0
      %4233 = vmatpush1.msra.mxu0 0.0
      %4234 = vmatprep.subr.mxu0 0.0
      %4235 = vmatpush1.msra.mxu0 0.0
      %4236 = vmatprep.subr.mxu0 0.0
      %4237 = vmatpush1.msra.mxu0 0.0
      %4238 = vmatprep.subr.mxu0 0.0
      %4239 = vmatpush1.msra.mxu0 0.0
      %4240 = vmatprep.subr.mxu0 0.0
      %4241 = vmatpush1.msra.mxu0 0.0
      %4242 = vmatprep.subr.mxu0 0.0
      %4243 = vmatpush1.msra.mxu0 0.0
      %4244 = vmatprep.subr.mxu0 0.0
      %4245 = vmatpush1.msra.mxu0 0.0
      %4246 = vmatprep.subr.mxu0 0.0
      %4247 = vmatpush1.msra.mxu0 0.0
      %4248 = vmatprep.subr.mxu0 0.0
      %4249 = vmatpush1.msra.mxu0 0.0
      %4250 = vmatprep.subr.mxu0 0.0
      %4251 = vmatpush1.msra.mxu0 0.0
      %4252 = vmatprep.subr.mxu0 0.0
      %4253 = vmatpush1.msra.mxu0 0.0
      %4254 = vmatprep.subr.mxu0 0.0
      %4255 = vmatpush1.msra.mxu0 0.0
      %4256 = vmatprep.subr.mxu0 0.0
      %4257 = vmatpush1.msra.mxu0 0.0
      %4258 = vmatprep.subr.mxu0 0.0
      %4259 = vmatpush1.msra.mxu0 0.0
      %4260 = vmatprep.subr.mxu0 0.0
      %4261 = vmatpush1.msra.mxu0 0.0
      %4262 = vmatprep.subr.mxu0 0.0
      %4263 = vmatpush1.msra.mxu0 0.0
      %4264 = vmatprep.subr.mxu0 0.0
      %4265 = vmatpush1.msra.mxu0 0.0
      %4266 = vmatprep.subr.mxu0 0.0
      %4267 = vmatpush1.msra.mxu0 0.0
      %4268 = vmatprep.subr.mxu0 0.0
      %4269 = vmatpush1.msra.mxu0 0.0
      %4270 = vmatprep.subr.mxu0 0.0
      %4271 = vmatpush1.msra.mxu0 0.0
      %4272 = vmatprep.mubr.f32.mxu0 0.0
      %v4273 = vand.u32 %v3867, 4294901760
      %4274 = vmatmul.mubr.f32.gmra.mrb[0].mxu0 %v4273
      %v4275 = vpop.f32.mrb[0].mxu0
      %v4276 = vadd.f32 %v4193, %v4275
      %v4277 = vpop.f32.mrb[0].mxu0
      %4278 = vdwg.mxu0
      %4279 = vmatprep.subr.mxu0 0.0
      %v4280 = vand.u32 %v249, 4294901760
      %4281 = vmatpush1.msra.mxu0 %v4280
      %4282 = vmatprep.subr.mxu0 0.0
      %v4283 = vand.u32 %v250, 4294901760
      %4284 = vmatpush1.msra.mxu0 %v4283
      %4285 = vmatprep.subr.mxu0 0.0
      %v4286 = vand.u32 %v251, 4294901760
      %4287 = vmatpush1.msra.mxu0 %v4286
      %4288 = vmatprep.subr.mxu0 0.0
      %v4289 = vand.u32 %v252, 4294901760
      %4290 = vmatpush1.msra.mxu0 %v4289
      %4291 = vmatprep.subr.mxu0 0.0
      %4292 = vmatpush1.msra.mxu0 0.0
      %4293 = vmatprep.subr.mxu0 0.0
      %4294 = vmatpush1.msra.mxu0 0.0
      %4295 = vmatprep.subr.mxu0 0.0
      %4296 = vmatpush1.msra.mxu0 0.0
      %4297 = vmatprep.subr.mxu0 0.0
      %4298 = vmatpush1.msra.mxu0 0.0
      %4299 = vmatprep.subr.mxu0 0.0
      %4300 = vmatpush1.msra.mxu0 0.0
      %4301 = vmatprep.subr.mxu0 0.0
      %4302 = vmatpush1.msra.mxu0 0.0
      %4303 = vmatprep.subr.mxu0 0.0
      %4304 = vmatpush1.msra.mxu0 0.0
      %4305 = vmatprep.subr.mxu0 0.0
      %4306 = vmatpush1.msra.mxu0 0.0
      %4307 = vmatprep.subr.mxu0 0.0
      %4308 = vmatpush1.msra.mxu0 0.0
      %4309 = vmatprep.subr.mxu0 0.0
      %4310 = vmatpush1.msra.mxu0 0.0
      %4311 = vmatprep.subr.mxu0 0.0
      %4312 = vmatpush1.msra.mxu0 0.0
      %4313 = vmatprep.subr.mxu0 0.0
      %4314 = vmatpush1.msra.mxu0 0.0
      %4315 = vmatprep.subr.mxu0 0.0
      %4316 = vmatpush1.msra.mxu0 0.0
      %4317 = vmatprep.subr.mxu0 0.0
      %4318 = vmatpush1.msra.mxu0 0.0
      %4319 = vmatprep.subr.mxu0 0.0
      %4320 = vmatpush1.msra.mxu0 0.0
      %4321 = vmatprep.subr.mxu0 0.0
      %4322 = vmatpush1.msra.mxu0 0.0
      %4323 = vmatprep.subr.mxu0 0.0
      %4324 = vmatpush1.msra.mxu0 0.0
      %4325 = vmatprep.subr.mxu0 0.0
      %4326 = vmatpush1.msra.mxu0 0.0
      %4327 = vmatprep.subr.mxu0 0.0
      %4328 = vmatpush1.msra.mxu0 0.0
      %4329 = vmatprep.subr.mxu0 0.0
      %4330 = vmatpush1.msra.mxu0 0.0
      %4331 = vmatprep.subr.mxu0 0.0
      %4332 = vmatpush1.msra.mxu0 0.0
      %4333 = vmatprep.subr.mxu0 0.0
      %4334 = vmatpush1.msra.mxu0 0.0
      %4335 = vmatprep.subr.mxu0 0.0
      %4336 = vmatpush1.msra.mxu0 0.0
      %4337 = vmatprep.subr.mxu0 0.0
      %4338 = vmatpush1.msra.mxu0 0.0
      %4339 = vmatprep.subr.mxu0 0.0
      %4340 = vmatpush1.msra.mxu0 0.0
      %4341 = vmatprep.subr.mxu0 0.0
      %4342 = vmatpush1.msra.mxu0 0.0
      %4343 = vmatprep.subr.mxu0 0.0
      %4344 = vmatpush1.msra.mxu0 0.0
      %4345 = vmatprep.subr.mxu0 0.0
      %4346 = vmatpush1.msra.mxu0 0.0
      %4347 = vmatprep.mubr.f32.mxu0 0.0
      %v4348 = vand.u32 %v3867, 4294901760
      %4349 = vmatmul.mubr.f32.gmra.mrb[0].mxu0 %v4348
      %v4350 = vpop.f32.mrb[0].mxu0
      %v4351 = vadd.f32 %v4276, %v4350
      %v4352 = vpop.f32.mrb[0].mxu0
      %4353 = vdwg.mxu0
      %v4354 = vadd.f32 %v935, %v278
      %v4355 = vadd.f32 %v1423, %v292
      %v4356 = vadd.f32 %v1911, %v300
      %v4357 = vadd.f32 %v2399, %v302
      %v4358 = vadd.f32 %v2887, %v285
      %v4359 = vadd.f32 %v3375, %v299
      %v4360 = vadd.f32 %v3863, %v301
      %v4361 = vadd.f32 %v4351, %v303
      %v4370 = vrot.slane %v935, 1
      %v4371 = vrot.slane %v1423, 1
      %v4372 = vrot.slane %v1911, 1
      %v4373 = vrot.slane %v2399, 1
      %v4374 = vrot.slane %v2887, 1
      %v4375 = vrot.slane %v3375, 1
      %v4376 = vrot.slane %v3863, 1
      %v4377 = vrot.slane %v4351, 1
      %v4386 = vsub.f32 %v4354, %v4370
      %v4387 = vsub.f32 %v4355, %v4371
      %v4388 = vsub.f32 %v4356, %v4372
      %v4389 = vsub.f32 %v4357, %v4373
      %v4390 = vsub.f32 %v4358, %v4374
      %v4391 = vsub.f32 %v4359, %v4375
      %v4392 = vsub.f32 %v4360, %v4376
      %v4393 = vsub.f32 %v4361, %v4377
      %v4394 = vadd.f32 %v4386, 1e-06
      %v4395 = vadd.f32 %v4387, 1e-06
      %v4396 = vadd.f32 %v4388, 1e-06
      %v4397 = vadd.f32 %v4389, 1e-06
      %v4398 = vadd.f32 %v4390, 1e-06
      %v4399 = vadd.f32 %v4391, 1e-06
      %v4400 = vadd.f32 %v4392, 1e-06
      %v4401 = vadd.f32 %v4393, 1e-06
      %v4402 = vmul.f32 %v4394, %v4394
      %v4403 = vmul.f32 %v4395, %v4395
      %v4404 = vmul.f32 %v4396, %v4396
      %v4405 = vmul.f32 %v4397, %v4397
      %v4406 = vmul.f32 %v4398, %v4398
      %v4407 = vmul.f32 %v4399, %v4399
      %v4408 = vmul.f32 %v4400, %v4400
      %v4409 = vmul.f32 %v4401, %v4401
      %vm4410 = vcmask 122880
      %v4411 = vsel %vm4410, %v4402, 0.0
      %4412 = vadd.xlane.f32.xlu0 %v4411
      %v4413 = vpop.xlane.xlu0 %4412
      %v4414 = vsel %vm4410, %v4403, 0.0
      %4415 = vadd.xlane.f32.xlu0 %v4414
      %v4416 = vpop.xlane.xlu0 %4415
      %v4417 = vsel %vm4410, %v4404, 0.0
      %4418 = vadd.xlane.f32.xlu0 %v4417
      %v4419 = vpop.xlane.xlu0 %4418
      %v4420 = vsel %vm4410, %v4405, 0.0
      %4421 = vadd.xlane.f32.xlu0 %v4420
      %v4422 = vpop.xlane.xlu0 %4421
      %v4423 = vsel %vm4410, %v4406, 0.0
      %4424 = vadd.xlane.f32.xlu0 %v4423
      %v4425 = vpop.xlane.xlu0 %4424
      %v4426 = vsel %vm4410, %v4407, 0.0
      %4427 = vadd.xlane.f32.xlu0 %v4426
      %v4428 = vpop.xlane.xlu0 %4427
      %v4429 = vsel %vm4410, %v4408, 0.0
      %4430 = vadd.xlane.f32.xlu0 %v4429
      %v4431 = vpop.xlane.xlu0 %4430
      %v4432 = vsel %vm4410, %v4409, 0.0
      %4433 = vadd.xlane.f32.xlu0 %v4432
      %v4434 = vpop.xlane.xlu0 %4433
      %v4435 = vrsqrt.pop %v4413
      %v4436 = vmul.f32 %v4413, %v4435
      %vm4437 = vcmp.eq.f32.partialorder %v4413, inf
      %v4438 = vsel %vm4437, %v4413, %v4436
      %vm4439 = vcmp.eq.f32.partialorder %v4413, 0.0
      %v4440 = vand.u32 %v4413, 2147483648
      %v4441 = vsel %vm4439, %v4440, %v4438
      %v4442 = vrsqrt.pop %v4416
      %v4443 = vmul.f32 %v4416, %v4442
      %vm4444 = vcmp.eq.f32.partialorder %v4416, inf
      %v4445 = vsel %vm4444, %v4416, %v4443
      %vm4446 = vcmp.eq.f32.partialorder %v4416, 0.0
      %v4447 = vand.u32 %v4416, 2147483648
      %v4448 = vsel %vm4446, %v4447, %v4445
      %v4449 = vrsqrt.pop %v4419
      %v4450 = vmul.f32 %v4419, %v4449
      %vm4451 = vcmp.eq.f32.partialorder %v4419, inf
      %v4452 = vsel %vm4451, %v4419, %v4450
      %vm4453 = vcmp.eq.f32.partialorder %v4419, 0.0
      %v4454 = vand.u32 %v4419, 2147483648
      %v4455 = vsel %vm4453, %v4454, %v4452
      %v4456 = vrsqrt.pop %v4422
      %v4457 = vmul.f32 %v4422, %v4456
      %vm4458 = vcmp.eq.f32.partialorder %v4422, inf
      %v4459 = vsel %vm4458, %v4422, %v4457
      %vm4460 = vcmp.eq.f32.partialorder %v4422, 0.0
      %v4461 = vand.u32 %v4422, 2147483648
      %v4462 = vsel %vm4460, %v4461, %v4459
      %v4463 = vrsqrt.pop %v4425
      %v4464 = vmul.f32 %v4425, %v4463
      %vm4465 = vcmp.eq.f32.partialorder %v4425, inf
      %v4466 = vsel %vm4465, %v4425, %v4464
      %vm4467 = vcmp.eq.f32.partialorder %v4425, 0.0
      %v4468 = vand.u32 %v4425, 2147483648
      %v4469 = vsel %vm4467, %v4468, %v4466
      %v4470 = vrsqrt.pop %v4428
      %v4471 = vmul.f32 %v4428, %v4470
      %vm4472 = vcmp.eq.f32.partialorder %v4428, inf
      %v4473 = vsel %vm4472, %v4428, %v4471
      %vm4474 = vcmp.eq.f32.partialorder %v4428, 0.0
      %v4475 = vand.u32 %v4428, 2147483648
      %v4476 = vsel %vm4474, %v4475, %v4473
      %v4477 = vrsqrt.pop %v4431
      %v4478 = vmul.f32 %v4431, %v4477
      %vm4479 = vcmp.eq.f32.partialorder %v4431, inf
      %v4480 = vsel %vm4479, %v4431, %v4478
      %vm4481 = vcmp.eq.f32.partialorder %v4431, 0.0
      %v4482 = vand.u32 %v4431, 2147483648
      %v4483 = vsel %vm4481, %v4482, %v4480
      %v4484 = vrsqrt.pop %v4434
      %v4485 = vmul.f32 %v4434, %v4484
      %vm4486 = vcmp.eq.f32.partialorder %v4434, inf
      %v4487 = vsel %vm4486, %v4434, %v4485
      %vm4488 = vcmp.eq.f32.partialorder %v4434, 0.0
      %v4489 = vand.u32 %v4434, 2147483648
      %v4490 = vsel %vm4488, %v4489, %v4487
      %v4491 = vlaneseq
      %v4492 = vshrl.u32 %v4491, 7
      %v4493 = vand.u32 %v4492, 1
      %vm4494 = vcmp.eq.s32.totalorder %v4493, 0
      %v4495 = vlaneseq
      %v4496 = vshrl.u32 %v4495, 7
      %v4497 = vsub.s32 0, %v4496
      %v4498 = vrot.slane %v278, %v4497
      %v4499 = vlaneseq
      %v4500 = vshrl.u32 %v4499, 7
      %v4501 = vsub.s32 0, %v4500
      %v4502 = vrot.slane %v292, %v4501
      %v4503 = vlaneseq
      %v4504 = vshrl.u32 %v4503, 7
      %v4505 = vsub.s32 0, %v4504
      %v4506 = vrot.slane %v300, %v4505
      %v4507 = vlaneseq
      %v4508 = vshrl.u32 %v4507, 7
      %v4509 = vsub.s32 0, %v4508
      %v4510 = vrot.slane %v302, %v4509
      %v4511 = vlaneseq
      %v4512 = vshrl.u32 %v4511, 7
      %v4513 = vsub.s32 0, %v4512
      %v4514 = vrot.slane %v285, %v4513
      %v4515 = vlaneseq
      %v4516 = vshrl.u32 %v4515, 7
      %v4517 = vsub.s32 0, %v4516
      %v4518 = vrot.slane %v299, %v4517
      %v4519 = vlaneseq
      %v4520 = vshrl.u32 %v4519, 7
      %v4521 = vsub.s32 0, %v4520
      %v4522 = vrot.slane %v301, %v4521
      %v4523 = vlaneseq
      %v4524 = vshrl.u32 %v4523, 7
      %v4525 = vsub.s32 0, %v4524
      %v4526 = vrot.slane %v303, %v4525
      %v4535 = vadd.f32 %v935, %v4498
      %v4536 = vadd.f32 %v1423, %v4502
      %v4537 = vadd.f32 %v1911, %v4506
      %v4538 = vadd.f32 %v2399, %v4510
      %v4539 = vadd.f32 %v2887, %v4514
      %v4540 = vadd.f32 %v3375, %v4518
      %v4541 = vadd.f32 %v3863, %v4522
      %v4542 = vadd.f32 %v4351, %v4526
      %v4543 = vlaneseq
      %v4544 = vshrl.u32 %v4543, 7
      %v4545 = vsub.s32 1, %v4544
      %v4546 = vrot.slane %v935, %v4545
      %v4547 = vlaneseq
      %v4548 = vshrl.u32 %v4547, 7
      %v4549 = vsub.s32 1, %v4548
      %v4550 = vrot.slane %v1423, %v4549
      %v4551 = vlaneseq
      %v4552 = vshrl.u32 %v4551, 7
      %v4553 = vsub.s32 1, %v4552
      %v4554 = vrot.slane %v1911, %v4553
      %v4555 = vlaneseq
      %v4556 = vshrl.u32 %v4555, 7
      %v4557 = vsub.s32 1, %v4556
      %v4558 = vrot.slane %v2399, %v4557
      %v4559 = vlaneseq
      %v4560 = vshrl.u32 %v4559, 7
      %v4561 = vsub.s32 1, %v4560
      %v4562 = vrot.slane %v2887, %v4561
      %v4563 = vlaneseq
      %v4564 = vshrl.u32 %v4563, 7
      %v4565 = vsub.s32 1, %v4564
      %v4566 = vrot.slane %v3375, %v4565
      %v4567 = vlaneseq
      %v4568 = vshrl.u32 %v4567, 7
      %v4569 = vsub.s32 1, %v4568
      %v4570 = vrot.slane %v3863, %v4569
      %v4571 = vlaneseq
      %v4572 = vshrl.u32 %v4571, 7
      %v4573 = vsub.s32 1, %v4572
      %v4574 = vrot.slane %v4351, %v4573
      %v4575 = vsub.f32 %v4535, %v4546
      %v4576 = vsub.f32 %v4536, %v4550
      %v4577 = vsub.f32 %v4537, %v4554
      %v4578 = vsub.f32 %v4538, %v4558
      %v4579 = vsub.f32 %v4539, %v4562
      %v4580 = vsub.f32 %v4540, %v4566
      %v4581 = vsub.f32 %v4541, %v4570
      %v4582 = vsub.f32 %v4542, %v4574
      %v4583 = vlaneseq
      %v4584 = vshrl.u32 %v4583, 7
      %v4585 = vsub.s32 0, %v4584
      %v4586 = vrot.slane %v4354, %v4585
      %v4587 = vlaneseq
      %v4588 = vshrl.u32 %v4587, 7
      %v4589 = vsub.s32 0, %v4588
      %v4590 = vrot.slane %v4355, %v4589
      %v4591 = vlaneseq
      %v4592 = vshrl.u32 %v4591, 7
      %v4593 = vsub.s32 0, %v4592
      %v4594 = vrot.slane %v4356, %v4593
      %v4595 = vlaneseq
      %v4596 = vshrl.u32 %v4595, 7
      %v4597 = vsub.s32 0, %v4596
      %v4598 = vrot.slane %v4357, %v4597
      %v4599 = vlaneseq
      %v4600 = vshrl.u32 %v4599, 7
      %v4601 = vsub.s32 0, %v4600
      %v4602 = vrot.slane %v4358, %v4601
      %v4603 = vlaneseq
      %v4604 = vshrl.u32 %v4603, 7
      %v4605 = vsub.s32 0, %v4604
      %v4606 = vrot.slane %v4359, %v4605
      %v4607 = vlaneseq
      %v4608 = vshrl.u32 %v4607, 7
      %v4609 = vsub.s32 0, %v4608
      %v4610 = vrot.slane %v4360, %v4609
      %v4611 = vlaneseq
      %v4612 = vshrl.u32 %v4611, 7
      %v4613 = vsub.s32 0, %v4612
      %v4614 = vrot.slane %v4361, %v4613
      %v4615 = vsub.f32 %v4586, %v935
      %v4616 = vsub.f32 %v4590, %v1423
      %v4617 = vsub.f32 %v4594, %v1911
      %v4618 = vsub.f32 %v4598, %v2399
      %v4619 = vsub.f32 %v4602, %v2887
      %v4620 = vsub.f32 %v4606, %v3375
      %v4621 = vsub.f32 %v4610, %v3863
      %v4622 = vsub.f32 %v4614, %v4351
      %v4623 = vsel %vm4494, 1, 0
      %vm4624 = vcmp.eq.s32.totalorder %v4623, 1
      %v4633 = vrot.slane %v4575, 2
      %v4634 = vrot.slane %v4576, 2
      %v4635 = vrot.slane %v4577, 2
      %v4636 = vrot.slane %v4578, 2
      %v4637 = vrot.slane %v4579, 2
      %v4638 = vrot.slane %v4580, 2
      %v4639 = vrot.slane %v4581, 2
      %v4640 = vrot.slane %v4582, 2
      %v4657 = vrot.slane %v4615, 2
      %v4658 = vrot.slane %v4616, 2
      %v4659 = vrot.slane %v4617, 2
      %v4660 = vrot.slane %v4618, 2
      %v4661 = vrot.slane %v4619, 2
      %v4662 = vrot.slane %v4620, 2
      %v4663 = vrot.slane %v4621, 2
      %v4664 = vrot.slane %v4622, 2
      %v4673 = vsel %vm4624, %v4633, %v4657
      %v4674 = vsel %vm4624, %v4634, %v4658
      %v4675 = vsel %vm4624, %v4635, %v4659
      %v4676 = vsel %vm4624, %v4636, %v4660
      %v4677 = vsel %vm4624, %v4637, %v4661
      %v4678 = vsel %vm4624, %v4638, %v4662
      %v4679 = vsel %vm4624, %v4639, %v4663
      %v4680 = vsel %vm4624, %v4640, %v4664
      %v4681 = vadd.f32 %v4673, 1e-06
      %v4682 = vadd.f32 %v4674, 1e-06
      %v4683 = vadd.f32 %v4675, 1e-06
      %v4684 = vadd.f32 %v4676, 1e-06
      %v4685 = vadd.f32 %v4677, 1e-06
      %v4686 = vadd.f32 %v4678, 1e-06
      %v4687 = vadd.f32 %v4679, 1e-06
      %v4688 = vadd.f32 %v4680, 1e-06
      %v4689 = vmul.f32 %v4681, %v4681
      %v4690 = vmul.f32 %v4682, %v4682
      %v4691 = vmul.f32 %v4683, %v4683
      %v4692 = vmul.f32 %v4684, %v4684
      %v4693 = vmul.f32 %v4685, %v4685
      %v4694 = vmul.f32 %v4686, %v4686
      %v4695 = vmul.f32 %v4687, %v4687
      %v4696 = vmul.f32 %v4688, %v4688
      %vm4697 = vcmask 124928
      %v4698 = vsel %vm4697, %v4689, 0.0
      %4699 = vadd.xlane.f32.xlu0 %v4698
      %v4700 = vpop.xlane.xlu0 %4699
      %v4701 = vsel %vm4697, %v4690, 0.0
      %4702 = vadd.xlane.f32.xlu0 %v4701
      %v4703 = vpop.xlane.xlu0 %4702
      %v4704 = vsel %vm4697, %v4691, 0.0
      %4705 = vadd.xlane.f32.xlu0 %v4704
      %v4706 = vpop.xlane.xlu0 %4705
      %v4707 = vsel %vm4697, %v4692, 0.0
      %4708 = vadd.xlane.f32.xlu0 %v4707
      %v4709 = vpop.xlane.xlu0 %4708
      %v4710 = vsel %vm4697, %v4693, 0.0
      %4711 = vadd.xlane.f32.xlu0 %v4710
      %v4712 = vpop.xlane.xlu0 %4711
      %v4713 = vsel %vm4697, %v4694, 0.0
      %4714 = vadd.xlane.f32.xlu0 %v4713
      %v4715 = vpop.xlane.xlu0 %4714
      %v4716 = vsel %vm4697, %v4695, 0.0
      %4717 = vadd.xlane.f32.xlu0 %v4716
      %v4718 = vpop.xlane.xlu0 %4717
      %v4719 = vsel %vm4697, %v4696, 0.0
      %4720 = vadd.xlane.f32.xlu0 %v4719
      %v4721 = vpop.xlane.xlu0 %4720
      %v4722 = vrsqrt.pop %v4700
      %v4723 = vmul.f32 %v4700, %v4722
      %vm4724 = vcmp.eq.f32.partialorder %v4700, inf
      %v4725 = vsel %vm4724, %v4700, %v4723
      %vm4726 = vcmp.eq.f32.partialorder %v4700, 0.0
      %v4727 = vand.u32 %v4700, 2147483648
      %v4728 = vsel %vm4726, %v4727, %v4725
      %v4729 = vrsqrt.pop %v4703
      %v4730 = vmul.f32 %v4703, %v4729
      %vm4731 = vcmp.eq.f32.partialorder %v4703, inf
      %v4732 = vsel %vm4731, %v4703, %v4730
      %vm4733 = vcmp.eq.f32.partialorder %v4703, 0.0
      %v4734 = vand.u32 %v4703, 2147483648
      %v4735 = vsel %vm4733, %v4734, %v4732
      %v4736 = vrsqrt.pop %v4706
      %v4737 = vmul.f32 %v4706, %v4736
      %vm4738 = vcmp.eq.f32.partialorder %v4706, inf
      %v4739 = vsel %vm4738, %v4706, %v4737
      %vm4740 = vcmp.eq.f32.partialorder %v4706, 0.0
      %v4741 = vand.u32 %v4706, 2147483648
      %v4742 = vsel %vm4740, %v4741, %v4739
      %v4743 = vrsqrt.pop %v4709
      %v4744 = vmul.f32 %v4709, %v4743
      %vm4745 = vcmp.eq.f32.partialorder %v4709, inf
      %v4746 = vsel %vm4745, %v4709, %v4744
      %vm4747 = vcmp.eq.f32.partialorder %v4709, 0.0
      %v4748 = vand.u32 %v4709, 2147483648
      %v4749 = vsel %vm4747, %v4748, %v4746
      %v4750 = vrsqrt.pop %v4712
      %v4751 = vmul.f32 %v4712, %v4750
      %vm4752 = vcmp.eq.f32.partialorder %v4712, inf
      %v4753 = vsel %vm4752, %v4712, %v4751
      %vm4754 = vcmp.eq.f32.partialorder %v4712, 0.0
      %v4755 = vand.u32 %v4712, 2147483648
      %v4756 = vsel %vm4754, %v4755, %v4753
      %v4757 = vrsqrt.pop %v4715
      %v4758 = vmul.f32 %v4715, %v4757
      %vm4759 = vcmp.eq.f32.partialorder %v4715, inf
      %v4760 = vsel %vm4759, %v4715, %v4758
      %vm4761 = vcmp.eq.f32.partialorder %v4715, 0.0
      %v4762 = vand.u32 %v4715, 2147483648
      %v4763 = vsel %vm4761, %v4762, %v4760
      %v4764 = vrsqrt.pop %v4718
      %v4765 = vmul.f32 %v4718, %v4764
      %vm4766 = vcmp.eq.f32.partialorder %v4718, inf
      %v4767 = vsel %vm4766, %v4718, %v4765
      %vm4768 = vcmp.eq.f32.partialorder %v4718, 0.0
      %v4769 = vand.u32 %v4718, 2147483648
      %v4770 = vsel %vm4768, %v4769, %v4767
      %v4771 = vrsqrt.pop %v4721
      %v4772 = vmul.f32 %v4721, %v4771
      %vm4773 = vcmp.eq.f32.partialorder %v4721, inf
      %v4774 = vsel %vm4773, %v4721, %v4772
      %vm4775 = vcmp.eq.f32.partialorder %v4721, 0.0
      %v4776 = vand.u32 %v4721, 2147483648
      %v4777 = vsel %vm4775, %v4776, %v4774
      %v4786 = vlaneseq
      %v4787 = vand.u32 %v4786, 127
      %v4788 = vlaneseq
      %v4789 = vshrl.u32 %v4788, 7
      %v4790 = vsub.s32 %v4787, %v4789
      %v4791 = vrot.slane %v4728, %v4790
      %v4792 = vlaneseq
      %v4793 = vshrl.u32 %v4792, 7
      %v4794 = vsub.s32 %v4787, %v4793
      %v4795 = vrot.slane %v4735, %v4794
      %v4796 = vlaneseq
      %v4797 = vshrl.u32 %v4796, 7
      %v4798 = vsub.s32 %v4787, %v4797
      %v4799 = vrot.slane %v4742, %v4798
      %v4800 = vlaneseq
      %v4801 = vshrl.u32 %v4800, 7
      %v4802 = vsub.s32 %v4787, %v4801
      %v4803 = vrot.slane %v4749, %v4802
      %v4804 = vlaneseq
      %v4805 = vshrl.u32 %v4804, 7
      %v4806 = vsub.s32 %v4787, %v4805
      %v4807 = vrot.slane %v4756, %v4806
      %v4808 = vlaneseq
      %v4809 = vshrl.u32 %v4808, 7
      %v4810 = vsub.s32 %v4787, %v4809
      %v4811 = vrot.slane %v4763, %v4810
      %v4812 = vlaneseq
      %v4813 = vshrl.u32 %v4812, 7
      %v4814 = vsub.s32 %v4787, %v4813
      %v4815 = vrot.slane %v4770, %v4814
      %v4816 = vlaneseq
      %v4817 = vshrl.u32 %v4816, 7
      %v4818 = vsub.s32 %v4787, %v4817
      %v4819 = vrot.slane %v4777, %v4818
      %vm4820 = vcmask 1041409
      %v4821 = vsel %vm4820, %v4795, %v4791
      %vm4822 = vcmask 1042434
      %v4823 = vsel %vm4822, %v4799, %v4821
      %vm4824 = vcmask 1043459
      %v4825 = vsel %vm4824, %v4803, %v4823
      %vm4826 = vcmask 1044484
      %v4827 = vsel %vm4826, %v4807, %v4825
      %vm4828 = vcmask 1045509
      %v4829 = vsel %vm4828, %v4811, %v4827
      %vm4830 = vcmask 1046534
      %v4831 = vsel %vm4830, %v4815, %v4829
      %vm4832 = vcmask 1047559
      %v4833 = vsel %vm4832, %v4819, %v4831
      %vm4835 = vcmask 23552
      %v4836 = vsel %vm4835, %v4833, 0.0
      %4837 = vadd.xlane.f32.xlu0 %v4836
      %v4838 = vpop.xlane.xlu0 %4837
      %v4839 = vrcp.pop 3.0
      %v4840 = vmul.f32 %v4838, %v4839
      %v4842 = vlaneseq
      %v4843 = vshrl.u32 %v4842, 7
      %v4844 = vsub.s32 0, %v4843
      %v4845 = vrot.slane %v4840, %v4844
      %v4846 = vlaneseq
      %v4847 = vshrl.u32 %v4846, 7
      %v4848 = vsub.s32 1, %v4847
      %v4849 = vrot.slane %v4840, %v4848
      %v4850 = vlaneseq
      %v4851 = vshrl.u32 %v4850, 7
      %v4852 = vsub.s32 2, %v4851
      %v4853 = vrot.slane %v4840, %v4852
      %v4854 = vlaneseq
      %v4855 = vshrl.u32 %v4854, 7
      %v4856 = vsub.s32 3, %v4855
      %v4857 = vrot.slane %v4840, %v4856
      %v4858 = vlaneseq
      %v4859 = vshrl.u32 %v4858, 7
      %v4860 = vsub.s32 4, %v4859
      %v4861 = vrot.slane %v4840, %v4860
      %v4862 = vlaneseq
      %v4863 = vshrl.u32 %v4862, 7
      %v4864 = vsub.s32 5, %v4863
      %v4865 = vrot.slane %v4840, %v4864
      %v4866 = vlaneseq
      %v4867 = vshrl.u32 %v4866, 7
      %v4868 = vsub.s32 6, %v4867
      %v4869 = vrot.slane %v4840, %v4868
      %v4870 = vlaneseq
      %v4871 = vshrl.u32 %v4870, 7
      %v4872 = vsub.s32 7, %v4871
      %v4873 = vrot.slane %v4840, %v4872
      %v4882 = vsub.f32 %v4441, %v4845
      %v4883 = vsub.f32 %v4448, %v4849
      %v4884 = vsub.f32 %v4455, %v4853
      %v4885 = vsub.f32 %v4462, %v4857
      %v4886 = vsub.f32 %v4469, %v4861
      %v4887 = vsub.f32 %v4476, %v4865
      %v4888 = vsub.f32 %v4483, %v4869
      %v4889 = vsub.f32 %v4490, %v4873
      %v4890 = vadd.f32 %v4882, 1.0
      %v4891 = vadd.f32 %v4883, 1.0
      %v4892 = vadd.f32 %v4884, 1.0
      %v4893 = vadd.f32 %v4885, 1.0
      %v4894 = vadd.f32 %v4886, 1.0
      %v4895 = vadd.f32 %v4887, 1.0
      %v4896 = vadd.f32 %v4888, 1.0
      %v4897 = vadd.f32 %v4889, 1.0
      %v4898 = vmax.f32 %v4890, 0.0
      %v4899 = vmax.f32 %v4891, 0.0
      %v4900 = vmax.f32 %v4892, 0.0
      %v4901 = vmax.f32 %v4893, 0.0
      %v4902 = vmax.f32 %v4894, 0.0
      %v4903 = vmax.f32 %v4895, 0.0
      %v4904 = vmax.f32 %v4896, 0.0
      %v4905 = vmax.f32 %v4897, 0.0
      %v4914 = vrot.slane %v4899, 7
      %v4915 = vsel %vm4820, %v4914, %v4898
      %v4916 = vrot.slane %v4900, 6
      %v4917 = vsel %vm4822, %v4916, %v4915
      %v4918 = vrot.slane %v4901, 5
      %v4919 = vsel %vm4824, %v4918, %v4917
      %v4920 = vrot.slane %v4902, 4
      %v4921 = vsel %vm4826, %v4920, %v4919
      %v4922 = vrot.slane %v4903, 3
      %v4923 = vsel %vm4828, %v4922, %v4921
      %v4924 = vrot.slane %v4904, 2
      %v4925 = vsel %vm4830, %v4924, %v4923
      %v4926 = vrot.slane %v4905, 1
      %v4927 = vsel %vm4832, %v4926, %v4925
      %vm4929 = vcmask 7168
      %4930 = vst.msk [vmem:[%s212] sm:$0xff] %vm4929, %v4927
      %p4931 = scmp.lt.s32.totalorder %s14, 1
      %s4932 = scalar_select %p4931, %s14, 1
      %s4933 = smul.addr %s4932, 8
      %s4934 = scalar_lea.vmem %s3, %s4933
      // Predicated region
      $region33: #{tpu_custom_call.1} parent=31 // pred_check
        %p4935 = pneg %p110
      $region34: #{tpu_custom_call.1} parent=31 // pred_check_branch
        %4937 = sbr.rel (%p4935) target = $region36
      $region35: #{tpu_custom_call.1} parent=31 // pred_region
        _
      $region36: #{tpu_custom_call.1} parent=31 // pred_fallthru
        _
    $region32: #{tpu_custom_call.1} parent=5 // pred_fallthru
      _
    %p4938 = scmp.le.s32.totalorder 2, %s9
    // Predicated region
    $region37: #{tpu_custom_call.1} parent=5 // pred_check
      %p4939 = pneg %p4938
    $region38: #{tpu_custom_call.1} parent=5 // pred_check_branch
      %4941 = sbr.rel (%p4939) target = $region40
    $region39: #{tpu_custom_call.1} parent=5 // pred_region
      %s4942 = ssub.s32 %s9, 2
      // Predicated region
      $region41: #{tpu_custom_call.1} parent=39 // pred_check
        %p4943 = pneg %p116
      $region42: #{tpu_custom_call.1} parent=39 // pred_check_branch
        %4945 = sbr.rel (%p4943) target = $region44
      $region43: #{tpu_custom_call.1} parent=39 // pred_region
        %p4946 = scmp.lt.s32.totalorder %s15, 1
        %s4947 = scalar_select %p4946, %s15, 1
        %s4948 = smul.addr %s4947, 8
        %s4949 = scalar_lea.vmem %s3, %s4948
      $region44: #{tpu_custom_call.1} parent=39 // pred_fallthru
        _
    $region40: #{tpu_custom_call.1} parent=5 // pred_fallthru
      _
  $region6: #{tpu_custom_call.1} parent=0 // loop_footer
    %s13 = sadd.s32 1, %s9
  $region7: #{tpu_custom_call.1} parent=0 // loop_footer_branch
    %8 = sbr.rel target = $region3
  $region8: #{tpu_custom_call.1} parent=0 // loop_exit
    _

</llo_original>
